<compile_context>
chip_gen: v7x
topology: tpu7x:2x2x1
jax: 0.10.0
libtpu: 0.0.40
codegen_flags: <defaults>
</compile_context>

<pallas_src>
import jax
import jax.numpy as jnp
import numpy as np
from jax.experimental import pallas as pl
from jax.experimental.pallas import tpu as pltpu

EPS_BN = 1e-5
EPS_NORM = 1e-12

_WEIGHT_KEYS = ("w1", "b1", "w2", "b2", "w3", "b3",
                "w4", "b4", "w5", "b5", "w6p", "b6p")
_WEIGHT_SHAPES = [(3, 64), (1, 64), (64, 128), (1, 128), (128, 256), (1, 256),
                  (256, 128), (1, 128), (128, 64), (1, 64), (64, 128), (1, 128)]

# Cached dimension-semantics decision for the batch axis (CORE_PARALLEL on
# v7x, PARALLEL fallback elsewhere / if lowering rejects it).
_BATCH_SEM = [None]


# ----------------------------------------------------------------------------
# Shared encoder / decoder bodies (all matmuls on the MXU, f32 accumulation)
# ----------------------------------------------------------------------------
def _encode(x, w1, b1, w2, b2, w3, b3):
    h = jnp.maximum(jnp.dot(x, w1[...], preferred_element_type=jnp.float32) + b1[...], 0.0)
    h = jnp.maximum(jnp.dot(h, w2[...], preferred_element_type=jnp.float32) + b2[...], 0.0)
    h = jnp.maximum(jnp.dot(h, w3[...], preferred_element_type=jnp.float32) + b3[...], 0.0)
    return h                                                       # (tn, 256)


def _decode(feat, w4, b4, w5, b5, w6, b6):
    g = jnp.maximum(jnp.dot(feat, w4[...], preferred_element_type=jnp.float32) + b4[...], 0.0)
    g = jnp.maximum(jnp.dot(g, w5[...], preferred_element_type=jnp.float32) + b5[...], 0.0)
    return jnp.dot(g, w6[...], preferred_element_type=jnp.float32) + b6[...]   # (1, 128)


# ----------------------------------------------------------------------------
# Single-step kernel: tn == N, grid = (B,) — no scratch, no pl.when gating
# ----------------------------------------------------------------------------
def _tnet_kernel_single(x_ref, w1, b1, w2, b2, w3, b3, w4, b4, w5, b5, w6, b6,
                        f6_ref):
    h = _encode(x_ref[0], w1, b1, w2, b2, w3, b3)                  # (N, 256)
    # (N,256)->(N/8,8,256) keeps the native vreg tiling: the reduce is mostly
    # VPU element-wise maxes plus one small cross-sublane reduce at the end.
    tile_max = jnp.max(h.reshape(-1, 8, 256), axis=0)              # (8, 256)
    feat = jnp.max(tile_max, axis=0, keepdims=True)                # (1, 256)
    f6_ref[0] = _decode(feat, w4, b4, w5, b5, w6, b6)              # (1, 128)


# ----------------------------------------------------------------------------
# Multi-step kernel: tn < N, grid = (B, N//tn) — resident max accumulator
# ----------------------------------------------------------------------------
def _tnet_kernel_multi(x_ref, w1, b1, w2, b2, w3, b3, w4, b4, w5, b5, w6, b6,
                       f6_ref, acc_ref):
    n = pl.program_id(1)

    @pl.when(n == 0)
    def _():
        acc_ref[...] = jnp.full(acc_ref.shape, -jnp.inf, acc_ref.dtype)

    h = _encode(x_ref[0], w1, b1, w2, b2, w3, b3)                  # (tn, 256)
    tile_max = jnp.max(h.reshape(-1, 8, 256), axis=0)              # (8, 256)
    acc_ref[...] = jnp.maximum(acc_ref[...], tile_max)

    # Fused decoder on the last point-tile (output block is written back only
    # when the b index changes, so n must stay innermost and "arbitrary").
    @pl.when(n == pl.num_programs(1) - 1)
    def _():
        feat = jnp.max(acc_ref[...], axis=0, keepdims=True)        # (1, 256)
        f6_ref[0] = _decode(feat, w4, b4, w5, b5, w6, b6)


# ----------------------------------------------------------------------------
# pallas_call wrappers
# ----------------------------------------------------------------------------
def _pick_point_tile(N, max_tile):
    if N % 8 != 0:
        raise ValueError("N must be a multiple of 8")
    for t in (2048, 1024, 512, 256, 128, 64, 32, 16, 8):
        if t <= max_tile and N % t == 0:
            return t
    raise ValueError("no valid point tile for N=%d" % N)


def _weight_specs(grid_ndim):
    if grid_ndim == 1:
        zero = lambda b: (0, 0)
    else:
        zero = lambda b, n: (0, 0)
    return [pl.BlockSpec(s, zero) for s in _WEIGHT_SHAPES]


def _call_single(pts_bn3, p, batch_sem):
    B, N, _ = pts_bn3.shape
    out = pl.pallas_call(
        _tnet_kernel_single,
        out_shape=jax.ShapeDtypeStruct((B, 1, 128), jnp.float32),
        grid_spec=pltpu.PrefetchScalarGridSpec(
            num_scalar_prefetch=0,
            grid=(B,),
            in_specs=[pl.BlockSpec((1, N, 3), lambda b: (b, 0, 0))]
                     + _weight_specs(1),
            out_specs=pl.BlockSpec((1, 1, 128), lambda b: (b, 0, 0)),
        ),
        compiler_params=pltpu.CompilerParams(dimension_semantics=(batch_sem,)),
    )(pts_bn3, *[p[k] for k in _WEIGHT_KEYS])
    return out[:, 0, :6]                                           # (B, 6)


def _call_multi(pts_bn3, p, tn):
    B, N, _ = pts_bn3.shape
    out = pl.pallas_call(
        _tnet_kernel_multi,
        out_shape=jax.ShapeDtypeStruct((B, 1, 128), jnp.float32),
        grid_spec=pltpu.PrefetchScalarGridSpec(
            num_scalar_prefetch=0,
            grid=(B, N // tn),
            in_specs=[pl.BlockSpec((1, tn, 3), lambda b, n: (b, n, 0))]
                     + _weight_specs(2),
            out_specs=pl.BlockSpec((1, 1, 128), lambda b, n: (b, 0, 0)),
            scratch_shapes=[pltpu.VMEM((8, 256), jnp.float32)],
        ),
        # Keep plain PARALLEL on B here: the accumulator-scratch path is only
        # taken for large N, where the kernel is no longer step-latency bound.
        compiler_params=pltpu.CompilerParams(
            dimension_semantics=(pltpu.PARALLEL, pltpu.ARBITRARY)),
    )(pts_bn3, *[p[k] for k in _WEIGHT_KEYS])
    return out[:, 0, :6]                                           # (B, 6)


def encoder_decoder(pts_bn3, p, *, max_tile=2048):
    B, N, _ = pts_bn3.shape
    tn = _pick_point_tile(N, max_tile)
    if tn != N:
        return _call_multi(pts_bn3, p, tn)
    # Single-step path: try CORE_PARALLEL (splits B across v7x's 2 TCs) and
    # fall back to PARALLEL if this jax/libtpu rejects it; cache the decision.
    if _BATCH_SEM[0] is not None:
        return _call_single(pts_bn3, p, _BATCH_SEM[0])
    try:
        out = jax.block_until_ready(_call_single(pts_bn3, p, pltpu.CORE_PARALLEL))
        _BATCH_SEM[0] = pltpu.CORE_PARALLEL
        return out
    except Exception:
        _BATCH_SEM[0] = pltpu.PARALLEL
        return _call_single(pts_bn3, p, pltpu.PARALLEL)


# ----------------------------------------------------------------------------
# Tiny glue: f2R (Gram-Schmidt on 6 numbers per batch element) in plain JAX
# ----------------------------------------------------------------------------
def f2R(f):
    a, b = f[:, :3], f[:, 3:]
    r1 = a / jnp.maximum(jnp.linalg.norm(a, axis=1, keepdims=True), EPS_NORM)
    proj = jnp.sum(r1 * b, axis=1, keepdims=True)
    v = b - proj * r1
    r2 = v / jnp.maximum(jnp.linalg.norm(v, axis=1, keepdims=True), EPS_NORM)
    r3 = jnp.cross(r1, r2)
    return jnp.stack([r1, r2, r3], axis=2)                         # (B, 3, 3)


def tnet_forward(pts, p):
    # pts: (B, 3, N) — PyTorch conv1d layout.
    # TODO(synk): a channels-on-lanes kernel layout would delete this
    # transpose dispatch; skipped here (small win at this problem size).
    pts_bn3 = jnp.transpose(pts, (0, 2, 1))                        # (B, N, 3)
    f6 = encoder_decoder(pts_bn3, p)                               # (B, 6)
    R = f2R(f6)                                                    # (B, 3, 3)
    # Rotation application stays in the original channels-first layout so the
    # result is lane-dense (N on the minor axis) and no transposes are needed.
    return jnp.matmul(R, pts)                                      # (B, 3, N)


# ----------------------------------------------------------------------------
# Deterministic synthetic parameters (eval-mode BatchNorm folded into W, b)
# ----------------------------------------------------------------------------
def _fold_bn(w_io, gamma, beta, mean, var):
    scale = gamma / jnp.sqrt(var + EPS_BN)
    return w_io * scale[None, :], (beta - mean * scale)[None, :]


def init_params(key):
    ks = iter(jax.random.split(key, 32))

    def lin_w(cin, cout):
        bound = 1.0 / np.sqrt(cin)
        return jax.random.uniform(next(ks), (cin, cout), jnp.float32, -bound, bound)

    def bn(c):
        gamma = jax.random.uniform(next(ks), (c,), jnp.float32, 0.5, 1.5)
        beta = 0.1 * jax.random.normal(next(ks), (c,), jnp.float32)
        mean = 0.1 * jax.random.normal(next(ks), (c,), jnp.float32)
        var = jax.random.uniform(next(ks), (c,), jnp.float32, 0.5, 1.5)
        return gamma, beta, mean, var

    p = {}
    # encoder: Conv1DBNReLU(3,64), (64,128), (128,256)   (conv bias=False)
    for i, (cin, cout) in enumerate([(3, 64), (64, 128), (128, 256)], start=1):
        w = lin_w(cin, cout)
        p[f"w{i}"], p[f"b{i}"] = _fold_bn(w, *bn(cout))
    # decoder: FCBNReLU(256,128), FCBNReLU(128,64)        (linear bias=False)
    for i, (cin, cout) in enumerate([(256, 128), (128, 64)], start=4):
        w = lin_w(cin, cout)
        p[f"w{i}"], p[f"b{i}"] = _fold_bn(w, *bn(cout))
    # final Linear(64, 6) with bias, no BN
    p["w6"] = lin_w(64, 6)
    bound = 1.0 / np.sqrt(64)
    p["b6"] = jax.random.uniform(next(ks), (1, 6), jnp.float32, -bound, bound)
    # Lane-dense (128-wide, zero-padded) versions for the kernel epilogue.
    p["w6p"] = jnp.zeros((64, 128), jnp.float32).at[:, :6].set(p["w6"])
    p["b6p"] = jnp.zeros((1, 128), jnp.float32).at[:, :6].set(p["b6"])
    return p


def tnet_reference(pts, p):
    x = jnp.transpose(pts, (0, 2, 1))
    h = jnp.maximum(x @ p["w1"] + p["b1"], 0.0)
    h = jnp.maximum(h @ p["w2"] + p["b2"], 0.0)
    h = jnp.maximum(h @ p["w3"] + p["b3"], 0.0)
    f = jnp.max(h, axis=1)
    g = jnp.maximum(f @ p["w4"] + p["b4"], 0.0)
    g = jnp.maximum(g @ p["w5"] + p["b5"], 0.0)
    f6 = g @ p["w6"] + p["b6"]
    R = f2R(f6)
    return R @ pts


if __name__ == "__main__":
    B, N = 2, 1024
    key = jax.random.PRNGKey(0)
    pts = jax.random.normal(key, (B, 3, N), dtype=jnp.float32)

    params = init_params(jax.random.PRNGKey(42))

    # End-to-end forward (single-step kernel path: tn == N).
    out = jax.block_until_ready(tnet_forward(pts, params))
    assert out.shape == (B, 3, N)

    ref = jax.block_until_ready(tnet_reference(pts, params))
    assert np.allclose(np.asarray(out), np.asarray(ref), atol=5e-2, rtol=5e-2)

    # Also exercise the multi-step (tiled reduction + accumulator) kernel path
    # and check it against the single-step path.
    pts_bn3 = jnp.transpose(pts, (0, 2, 1))
    f6_single = jax.block_until_ready(encoder_decoder(pts_bn3, params))
    f6_multi = jax.block_until_ready(encoder_decoder(pts_bn3, params, max_tile=256))
    assert np.allclose(np.asarray(f6_single), np.asarray(f6_multi),
                       atol=1e-4, rtol=1e-4)

    print("KERNEL_OK")
</pallas_src>

<mosaic_0001>
module attributes {stable_mosaic.version = 11 : i64} {
  func.func @_tnet_kernel_single(%arg0: i32, %arg1: memref<1x1024x3xf32, #tpu.memory_space<vmem>>, %arg2: memref<3x64xf32, #tpu.memory_space<vmem>>, %arg3: memref<1x64xf32, #tpu.memory_space<vmem>>, %arg4: memref<64x128xf32, #tpu.memory_space<vmem>>, %arg5: memref<1x128xf32, #tpu.memory_space<vmem>>, %arg6: memref<128x256xf32, #tpu.memory_space<vmem>>, %arg7: memref<1x256xf32, #tpu.memory_space<vmem>>, %arg8: memref<256x128xf32, #tpu.memory_space<vmem>>, %arg9: memref<1x128xf32, #tpu.memory_space<vmem>>, %arg10: memref<128x64xf32, #tpu.memory_space<vmem>>, %arg11: memref<1x64xf32, #tpu.memory_space<vmem>>, %arg12: memref<64x128xf32, #tpu.memory_space<vmem>>, %arg13: memref<1x128xf32, #tpu.memory_space<vmem>>, %arg14: memref<1x1x128xf32, #tpu.memory_space<vmem>>) attributes {dimension_semantics = [#tpu.dimension_semantics<core_parallel>], iteration_bounds = array<i64: 2>, scalar_prefetch = 0 : i64, scratch_operands = 0 : i64, tpu.core_type = #tpu.core_type<tc>, window_params = [{transform_indices = @transform_0, window_bounds = array<i64: 1, 1024, 3>}, {pipeline_mode = #tpu.pipeline_mode<synchronous>, transform_indices = @transform_1, window_bounds = array<i64: 3, 64>}, {pipeline_mode = #tpu.pipeline_mode<synchronous>, transform_indices = @transform_2, window_bounds = array<i64: 1, 64>}, {pipeline_mode = #tpu.pipeline_mode<synchronous>, transform_indices = @transform_3, window_bounds = array<i64: 64, 128>}, {pipeline_mode = #tpu.pipeline_mode<synchronous>, transform_indices = @transform_4, window_bounds = array<i64: 1, 128>}, {pipeline_mode = #tpu.pipeline_mode<synchronous>, transform_indices = @transform_5, window_bounds = array<i64: 128, 256>}, {pipeline_mode = #tpu.pipeline_mode<synchronous>, transform_indices = @transform_6, window_bounds = array<i64: 1, 256>}, {pipeline_mode = #tpu.pipeline_mode<synchronous>, transform_indices = @transform_7, window_bounds = array<i64: 256, 128>}, {pipeline_mode = #tpu.pipeline_mode<synchronous>, transform_indices = @transform_8, window_bounds = array<i64: 1, 128>}, {pipeline_mode = #tpu.pipeline_mode<synchronous>, transform_indices = @transform_9, window_bounds = array<i64: 128, 64>}, {pipeline_mode = #tpu.pipeline_mode<synchronous>, transform_indices = @transform_10, window_bounds = array<i64: 1, 64>}, {pipeline_mode = #tpu.pipeline_mode<synchronous>, transform_indices = @transform_11, window_bounds = array<i64: 64, 128>}, {pipeline_mode = #tpu.pipeline_mode<synchronous>, transform_indices = @transform_12, window_bounds = array<i64: 1, 128>}, {transform_indices = @transform_13, window_bounds = array<i64: 1, 1, 128>}]} {
    %c0 = arith.constant 0 : index
    %c0_0 = arith.constant 0 : index
    %c0_1 = arith.constant 0 : index
    %0 = vector.load %arg1[%c0, %c0_0, %c0_1] : memref<1x1024x3xf32, #tpu.memory_space<vmem>>, vector<1x1024x3xf32>
    %1 = vector.shape_cast %0 : vector<1x1024x3xf32> to vector<1024x3xf32>
    %c0_2 = arith.constant 0 : index
    %c0_3 = arith.constant 0 : index
    %2 = vector.load %arg2[%c0_2, %c0_3] : memref<3x64xf32, #tpu.memory_space<vmem>>, vector<3x64xf32>
    %cst = arith.constant dense<0.000000e+00> : vector<1024x64xf32>
    %3 = tpu.matmul %1, %2, %cst {dimension_numbers = #tpu.dot_dimension_numbers<[1], [0], [0], [1], [0, 0, 1, 1], [], []>} : vector<1024x3xf32>, vector<3x64xf32>, vector<1024x64xf32> -> vector<1024x64xf32>
    %c0_4 = arith.constant 0 : index
    %c0_5 = arith.constant 0 : index
    %4 = vector.load %arg3[%c0_4, %c0_5] : memref<1x64xf32, #tpu.memory_space<vmem>>, vector<1x64xf32>
    %5 = vector.broadcast %4 : vector<1x64xf32> to vector<1024x64xf32>
    %6 = arith.addf %3, %5 : vector<1024x64xf32>
    %cst_6 = arith.constant 0.000000e+00 : f32
    %7 = vector.broadcast %cst_6 : f32 to vector<1024x64xf32>
    %8 = arith.maximumf %6, %7 : vector<1024x64xf32>
    %c0_7 = arith.constant 0 : index
    %c0_8 = arith.constant 0 : index
    %9 = vector.load %arg4[%c0_7, %c0_8] : memref<64x128xf32, #tpu.memory_space<vmem>>, vector<64x128xf32>
    %cst_9 = arith.constant dense<0.000000e+00> : vector<1024x128xf32>
    %10 = tpu.matmul %8, %9, %cst_9 {dimension_numbers = #tpu.dot_dimension_numbers<[1], [0], [0], [1], [0, 0, 1, 1], [], []>} : vector<1024x64xf32>, vector<64x128xf32>, vector<1024x128xf32> -> vector<1024x128xf32>
    %c0_10 = arith.constant 0 : index
    %c0_11 = arith.constant 0 : index
    %11 = vector.load %arg5[%c0_10, %c0_11] : memref<1x128xf32, #tpu.memory_space<vmem>>, vector<1x128xf32>
    %12 = vector.broadcast %11 : vector<1x128xf32> to vector<1024x128xf32>
    %13 = arith.addf %10, %12 : vector<1024x128xf32>
    %cst_12 = arith.constant 0.000000e+00 : f32
    %14 = vector.broadcast %cst_12 : f32 to vector<1024x128xf32>
    %15 = arith.maximumf %13, %14 : vector<1024x128xf32>
    %c0_13 = arith.constant 0 : index
    %c0_14 = arith.constant 0 : index
    %16 = vector.load %arg6[%c0_13, %c0_14] : memref<128x256xf32, #tpu.memory_space<vmem>>, vector<128x256xf32>
    %cst_15 = arith.constant dense<0.000000e+00> : vector<1024x256xf32>
    %17 = tpu.matmul %15, %16, %cst_15 {dimension_numbers = #tpu.dot_dimension_numbers<[1], [0], [0], [1], [0, 0, 1, 1], [], []>} : vector<1024x128xf32>, vector<128x256xf32>, vector<1024x256xf32> -> vector<1024x256xf32>
    %c0_16 = arith.constant 0 : index
    %c0_17 = arith.constant 0 : index
    %18 = vector.load %arg7[%c0_16, %c0_17] : memref<1x256xf32, #tpu.memory_space<vmem>>, vector<1x256xf32>
    %19 = vector.broadcast %18 : vector<1x256xf32> to vector<1024x256xf32>
    %20 = arith.addf %17, %19 : vector<1024x256xf32>
    %cst_18 = arith.constant 0.000000e+00 : f32
    %21 = vector.broadcast %cst_18 : f32 to vector<1024x256xf32>
    %22 = arith.maximumf %20, %21 : vector<1024x256xf32>
    %23 = vector.shape_cast %22 : vector<1024x256xf32> to vector<128x8x256xf32>
    %cst_19 = arith.constant dense<0xFF800000> : vector<8x256xf32>
    %24 = vector.multi_reduction <maximumf>, %23, %cst_19 [0] : vector<128x8x256xf32> to vector<8x256xf32>
    %cst_20 = arith.constant dense<0xFF800000> : vector<256xf32>
    %25 = vector.multi_reduction <maximumf>, %24, %cst_20 [0] : vector<8x256xf32> to vector<256xf32>
    %26 = vector.shape_cast %25 : vector<256xf32> to vector<1x256xf32>
    %c0_21 = arith.constant 0 : index
    %c0_22 = arith.constant 0 : index
    %27 = vector.load %arg8[%c0_21, %c0_22] : memref<256x128xf32, #tpu.memory_space<vmem>>, vector<256x128xf32>
    %cst_23 = arith.constant dense<0.000000e+00> : vector<1x128xf32>
    %28 = tpu.matmul %26, %27, %cst_23 {dimension_numbers = #tpu.dot_dimension_numbers<[1], [0], [0], [1], [0, 0, 1, 1], [], []>} : vector<1x256xf32>, vector<256x128xf32>, vector<1x128xf32> -> vector<1x128xf32>
    %c0_24 = arith.constant 0 : index
    %c0_25 = arith.constant 0 : index
    %29 = vector.load %arg9[%c0_24, %c0_25] : memref<1x128xf32, #tpu.memory_space<vmem>>, vector<1x128xf32>
    %30 = arith.addf %28, %29 : vector<1x128xf32>
    %cst_26 = arith.constant 0.000000e+00 : f32
    %31 = vector.broadcast %cst_26 : f32 to vector<1x128xf32>
    %32 = arith.maximumf %30, %31 : vector<1x128xf32>
    %c0_27 = arith.constant 0 : index
    %c0_28 = arith.constant 0 : index
    %33 = vector.load %arg10[%c0_27, %c0_28] : memref<128x64xf32, #tpu.memory_space<vmem>>, vector<128x64xf32>
    %cst_29 = arith.constant dense<0.000000e+00> : vector<1x64xf32>
    %34 = tpu.matmul %32, %33, %cst_29 {dimension_numbers = #tpu.dot_dimension_numbers<[1], [0], [0], [1], [0, 0, 1, 1], [], []>} : vector<1x128xf32>, vector<128x64xf32>, vector<1x64xf32> -> vector<1x64xf32>
    %c0_30 = arith.constant 0 : index
    %c0_31 = arith.constant 0 : index
    %35 = vector.load %arg11[%c0_30, %c0_31] : memref<1x64xf32, #tpu.memory_space<vmem>>, vector<1x64xf32>
    %36 = arith.addf %34, %35 : vector<1x64xf32>
    %cst_32 = arith.constant 0.000000e+00 : f32
    %37 = vector.broadcast %cst_32 : f32 to vector<1x64xf32>
    %38 = arith.maximumf %36, %37 : vector<1x64xf32>
    %c0_33 = arith.constant 0 : index
    %c0_34 = arith.constant 0 : index
    %39 = vector.load %arg12[%c0_33, %c0_34] : memref<64x128xf32, #tpu.memory_space<vmem>>, vector<64x128xf32>
    %cst_35 = arith.constant dense<0.000000e+00> : vector<1x128xf32>
    %40 = tpu.matmul %38, %39, %cst_35 {dimension_numbers = #tpu.dot_dimension_numbers<[1], [0], [0], [1], [0, 0, 1, 1], [], []>} : vector<1x64xf32>, vector<64x128xf32>, vector<1x128xf32> -> vector<1x128xf32>
    %c0_36 = arith.constant 0 : index
    %c0_37 = arith.constant 0 : index
    %41 = vector.load %arg13[%c0_36, %c0_37] : memref<1x128xf32, #tpu.memory_space<vmem>>, vector<1x128xf32>
    %42 = arith.addf %40, %41 : vector<1x128xf32>
    %c0_38 = arith.constant 0 : index
    %c0_39 = arith.constant 0 : index
    %c0_40 = arith.constant 0 : index
    %43 = vector.load %arg14[%c0_38, %c0_39, %c0_40] : memref<1x1x128xf32, #tpu.memory_space<vmem>>, vector<1x1x128xf32>
    %44 = vector.shape_cast %43 : vector<1x1x128xf32> to vector<1x128xf32>
    %45 = vector.shape_cast %42 : vector<1x128xf32> to vector<1x1x128xf32>
    tpu.vector_store %arg14[%c0_38, %c0_39, %c0_40], %45 {strides = array<i32>} : memref<1x1x128xf32, #tpu.memory_space<vmem>>, vector<1x1x128xf32>,
    return
  }
  func.func @transform_0(%arg0: i32) -> (i32, i32, i32) {
    %c0_i32 = arith.constant 0 : i32
    %c0_i32_0 = arith.constant 0 : i32
    %c0_i32_1 = arith.constant 0 : i32
    return %arg0, %c0_i32, %c0_i32_0 : i32, i32, i32
  }
  func.func @transform_1(%arg0: i32) -> (i32, i32) {
    %c0_i32 = arith.constant 0 : i32
    %c0_i32_0 = arith.constant 0 : i32
    %c0_i32_1 = arith.constant 0 : i32
    return %c0_i32, %c0_i32_0 : i32, i32
  }
  func.func @transform_2(%arg0: i32) -> (i32, i32) {
    %c0_i32 = arith.constant 0 : i32
    %c0_i32_0 = arith.constant 0 : i32
    %c0_i32_1 = arith.constant 0 : i32
    return %c0_i32, %c0_i32_0 : i32, i32
  }
  func.func @transform_3(%arg0: i32) -> (i32, i32) {
    %c0_i32 = arith.constant 0 : i32
    %c0_i32_0 = arith.constant 0 : i32
    %c0_i32_1 = arith.constant 0 : i32
    return %c0_i32, %c0_i32_0 : i32, i32
  }
  func.func @transform_4(%arg0: i32) -> (i32, i32) {
    %c0_i32 = arith.constant 0 : i32
    %c0_i32_0 = arith.constant 0 : i32
    %c0_i32_1 = arith.constant 0 : i32
    return %c0_i32, %c0_i32_0 : i32, i32
  }
  func.func @transform_5(%arg0: i32) -> (i32, i32) {
    %c0_i32 = arith.constant 0 : i32
    %c0_i32_0 = arith.constant 0 : i32
    %c0_i32_1 = arith.constant 0 : i32
    return %c0_i32, %c0_i32_0 : i32, i32
  }
  func.func @transform_6(%arg0: i32) -> (i32, i32) {
    %c0_i32 = arith.constant 0 : i32
    %c0_i32_0 = arith.constant 0 : i32
    %c0_i32_1 = arith.constant 0 : i32
    return %c0_i32, %c0_i32_0 : i32, i32
  }
  func.func @transform_7(%arg0: i32) -> (i32, i32) {
    %c0_i32 = arith.constant 0 : i32
    %c0_i32_0 = arith.constant 0 : i32
    %c0_i32_1 = arith.constant 0 : i32
    return %c0_i32, %c0_i32_0 : i32, i32
  }
  func.func @transform_8(%arg0: i32) -> (i32, i32) {
    %c0_i32 = arith.constant 0 : i32
    %c0_i32_0 = arith.constant 0 : i32
    %c0_i32_1 = arith.constant 0 : i32
    return %c0_i32, %c0_i32_0 : i32, i32
  }
  func.func @transform_9(%arg0: i32) -> (i32, i32) {
    %c0_i32 = arith.constant 0 : i32
    %c0_i32_0 = arith.constant 0 : i32
    %c0_i32_1 = arith.constant 0 : i32
    return %c0_i32, %c0_i32_0 : i32, i32
  }
  func.func @transform_10(%arg0: i32) -> (i32, i32) {
    %c0_i32 = arith.constant 0 : i32
    %c0_i32_0 = arith.constant 0 : i32
    %c0_i32_1 = arith.constant 0 : i32
    return %c0_i32, %c0_i32_0 : i32, i32
  }
  func.func @transform_11(%arg0: i32) -> (i32, i32) {
    %c0_i32 = arith.constant 0 : i32
    %c0_i32_0 = arith.constant 0 : i32
    %c0_i32_1 = arith.constant 0 : i32
    return %c0_i32, %c0_i32_0 : i32, i32
  }
  func.func @transform_12(%arg0: i32) -> (i32, i32) {
    %c0_i32 = arith.constant 0 : i32
    %c0_i32_0 = arith.constant 0 : i32
    %c0_i32_1 = arith.constant 0 : i32
    return %c0_i32, %c0_i32_0 : i32, i32
  }
  func.func @transform_13(%arg0: i32) -> (i32, i32, i32) {
    %c0_i32 = arith.constant 0 : i32
    %c0_i32_0 = arith.constant 0 : i32
    %c0_i32_1 = arith.constant 0 : i32
    return %arg0, %c0_i32, %c0_i32_0 : i32, i32, i32
  }
}

module attributes {stable_mosaic.version = 11 : i64} {
  func.func @_tnet_kernel_single(%arg0: i32, %arg1: memref<1x1024x3xf32, #tpu.memory_space<vmem>>, %arg2: memref<3x64xf32, #tpu.memory_space<vmem>>, %arg3: memref<1x64xf32, #tpu.memory_space<vmem>>, %arg4: memref<64x128xf32, #tpu.memory_space<vmem>>, %arg5: memref<1x128xf32, #tpu.memory_space<vmem>>, %arg6: memref<128x256xf32, #tpu.memory_space<vmem>>, %arg7: memref<1x256xf32, #tpu.memory_space<vmem>>, %arg8: memref<256x128xf32, #tpu.memory_space<vmem>>, %arg9: memref<1x128xf32, #tpu.memory_space<vmem>>, %arg10: memref<128x64xf32, #tpu.memory_space<vmem>>, %arg11: memref<1x64xf32, #tpu.memory_space<vmem>>, %arg12: memref<64x128xf32, #tpu.memory_space<vmem>>, %arg13: memref<1x128xf32, #tpu.memory_space<vmem>>, %arg14: memref<1x1x128xf32, #tpu.memory_space<vmem>>) attributes {dimension_semantics = [#tpu.dimension_semantics<parallel>], iteration_bounds = array<i64: 2>, scalar_prefetch = 0 : i64, scratch_operands = 0 : i64, tpu.core_type = #tpu.core_type<tc>, window_params = [{transform_indices = @transform_0, window_bounds = array<i64: 1, 1024, 3>}, {pipeline_mode = #tpu.pipeline_mode<synchronous>, transform_indices = @transform_1, window_bounds = array<i64: 3, 64>}, {pipeline_mode = #tpu.pipeline_mode<synchronous>, transform_indices = @transform_2, window_bounds = array<i64: 1, 64>}, {pipeline_mode = #tpu.pipeline_mode<synchronous>, transform_indices = @transform_3, window_bounds = array<i64: 64, 128>}, {pipeline_mode = #tpu.pipeline_mode<synchronous>, transform_indices = @transform_4, window_bounds = array<i64: 1, 128>}, {pipeline_mode = #tpu.pipeline_mode<synchronous>, transform_indices = @transform_5, window_bounds = array<i64: 128, 256>}, {pipeline_mode = #tpu.pipeline_mode<synchronous>, transform_indices = @transform_6, window_bounds = array<i64: 1, 256>}, {pipeline_mode = #tpu.pipeline_mode<synchronous>, transform_indices = @transform_7, window_bounds = array<i64: 256, 128>}, {pipeline_mode = #tpu.pipeline_mode<synchronous>, transform_indices = @transform_8, window_bounds = array<i64: 1, 128>}, {pipeline_mode = #tpu.pipeline_mode<synchronous>, transform_indices = @transform_9, window_bounds = array<i64: 128, 64>}, {pipeline_mode = #tpu.pipeline_mode<synchronous>, transform_indices = @transform_10, window_bounds = array<i64: 1, 64>}, {pipeline_mode = #tpu.pipeline_mode<synchronous>, transform_indices = @transform_11, window_bounds = array<i64: 64, 128>}, {pipeline_mode = #tpu.pipeline_mode<synchronous>, transform_indices = @transform_12, window_bounds = array<i64: 1, 128>}, {transform_indices = @transform_13, window_bounds = array<i64: 1, 1, 128>}]} {
    %c0 = arith.constant 0 : index
    %c0_0 = arith.constant 0 : index
    %c0_1 = arith.constant 0 : index
    %0 = vector.load %arg1[%c0, %c0_0, %c0_1] : memref<1x1024x3xf32, #tpu.memory_space<vmem>>, vector<1x1024x3xf32>
    %1 = vector.shape_cast %0 : vector<1x1024x3xf32> to vector<1024x3xf32>
    %c0_2 = arith.constant 0 : index
    %c0_3 = arith.constant 0 : index
    %2 = vector.load %arg2[%c0_2, %c0_3] : memref<3x64xf32, #tpu.memory_space<vmem>>, vector<3x64xf32>
    %cst = arith.constant dense<0.000000e+00> : vector<1024x64xf32>
    %3 = tpu.matmul %1, %2, %cst {dimension_numbers = #tpu.dot_dimension_numbers<[1], [0], [0], [1], [0, 0, 1, 1], [], []>} : vector<1024x3xf32>, vector<3x64xf32>, vector<1024x64xf32> -> vector<1024x64xf32>
    %c0_4 = arith.constant 0 : index
    %c0_5 = arith.constant 0 : index
    %4 = vector.load %arg3[%c0_4, %c0_5] : memref<1x64xf32, #tpu.memory_space<vmem>>, vector<1x64xf32>
    %5 = vector.broadcast %4 : vector<1x64xf32> to vector<1024x64xf32>
    %6 = arith.addf %3, %5 : vector<1024x64xf32>
    %cst_6 = arith.constant 0.000000e+00 : f32
    %7 = vector.broadcast %cst_6 : f32 to vector<1024x64xf32>
    %8 = arith.maximumf %6, %7 : vector<1024x64xf32>
    %c0_7 = arith.constant 0 : index
    %c0_8 = arith.constant 0 : index
    %9 = vector.load %arg4[%c0_7, %c0_8] : memref<64x128xf32, #tpu.memory_space<vmem>>, vector<64x128xf32>
    %cst_9 = arith.constant dense<0.000000e+00> : vector<1024x128xf32>
    %10 = tpu.matmul %8, %9, %cst_9 {dimension_numbers = #tpu.dot_dimension_numbers<[1], [0], [0], [1], [0, 0, 1, 1], [], []>} : vector<1024x64xf32>, vector<64x128xf32>, vector<1024x128xf32> -> vector<1024x128xf32>
    %c0_10 = arith.constant 0 : index
    %c0_11 = arith.constant 0 : index
    %11 = vector.load %arg5[%c0_10, %c0_11] : memref<1x128xf32, #tpu.memory_space<vmem>>, vector<1x128xf32>
    %12 = vector.broadcast %11 : vector<1x128xf32> to vector<1024x128xf32>
    %13 = arith.addf %10, %12 : vector<1024x128xf32>
    %cst_12 = arith.constant 0.000000e+00 : f32
    %14 = vector.broadcast %cst_12 : f32 to vector<1024x128xf32>
    %15 = arith.maximumf %13, %14 : vector<1024x128xf32>
    %c0_13 = arith.constant 0 : index
    %c0_14 = arith.constant 0 : index
    %16 = vector.load %arg6[%c0_13, %c0_14] : memref<128x256xf32, #tpu.memory_space<vmem>>, vector<128x256xf32>
    %cst_15 = arith.constant dense<0.000000e+00> : vector<1024x256xf32>
    %17 = tpu.matmul %15, %16, %cst_15 {dimension_numbers = #tpu.dot_dimension_numbers<[1], [0], [0], [1], [0, 0, 1, 1], [], []>} : vector<1024x128xf32>, vector<128x256xf32>, vector<1024x256xf32> -> vector<1024x256xf32>
    %c0_16 = arith.constant 0 : index
    %c0_17 = arith.constant 0 : index
    %18 = vector.load %arg7[%c0_16, %c0_17] : memref<1x256xf32, #tpu.memory_space<vmem>>, vector<1x256xf32>
    %19 = vector.broadcast %18 : vector<1x256xf32> to vector<1024x256xf32>
    %20 = arith.addf %17, %19 : vector<1024x256xf32>
    %cst_18 = arith.constant 0.000000e+00 : f32
    %21 = vector.broadcast %cst_18 : f32 to vector<1024x256xf32>
    %22 = arith.maximumf %20, %21 : vector<1024x256xf32>
    %23 = vector.shape_cast %22 : vector<1024x256xf32> to vector<128x8x256xf32>
    %cst_19 = arith.constant dense<0xFF800000> : vector<8x256xf32>
    %24 = vector.multi_reduction <maximumf>, %23, %cst_19 [0] : vector<128x8x256xf32> to vector<8x256xf32>
    %cst_20 = arith.constant dense<0xFF800000> : vector<256xf32>
    %25 = vector.multi_reduction <maximumf>, %24, %cst_20 [0] : vector<8x256xf32> to vector<256xf32>
    %26 = vector.shape_cast %25 : vector<256xf32> to vector<1x256xf32>
    %c0_21 = arith.constant 0 : index
    %c0_22 = arith.constant 0 : index
    %27 = vector.load %arg8[%c0_21, %c0_22] : memref<256x128xf32, #tpu.memory_space<vmem>>, vector<256x128xf32>
    %cst_23 = arith.constant dense<0.000000e+00> : vector<1x128xf32>
    %28 = tpu.matmul %26, %27, %cst_23 {dimension_numbers = #tpu.dot_dimension_numbers<[1], [0], [0], [1], [0, 0, 1, 1], [], []>} : vector<1x256xf32>, vector<256x128xf32>, vector<1x128xf32> -> vector<1x128xf32>
    %c0_24 = arith.constant 0 : index
    %c0_25 = arith.constant 0 : index
    %29 = vector.load %arg9[%c0_24, %c0_25] : memref<1x128xf32, #tpu.memory_space<vmem>>, vector<1x128xf32>
    %30 = arith.addf %28, %29 : vector<1x128xf32>
    %cst_26 = arith.constant 0.000000e+00 : f32
    %31 = vector.broadcast %cst_26 : f32 to vector<1x128xf32>
    %32 = arith.maximumf %30, %31 : vector<1x128xf32>
    %c0_27 = arith.constant 0 : index
    %c0_28 = arith.constant 0 : index
    %33 = vector.load %arg10[%c0_27, %c0_28] : memref<128x64xf32, #tpu.memory_space<vmem>>, vector<128x64xf32>
    %cst_29 = arith.constant dense<0.000000e+00> : vector<1x64xf32>
    %34 = tpu.matmul %32, %33, %cst_29 {dimension_numbers = #tpu.dot_dimension_numbers<[1], [0], [0], [1], [0, 0, 1, 1], [], []>} : vector<1x128xf32>, vector<128x64xf32>, vector<1x64xf32> -> vector<1x64xf32>
    %c0_30 = arith.constant 0 : index
    %c0_31 = arith.constant 0 : index
    %35 = vector.load %arg11[%c0_30, %c0_31] : memref<1x64xf32, #tpu.memory_space<vmem>>, vector<1x64xf32>
    %36 = arith.addf %34, %35 : vector<1x64xf32>
    %cst_32 = arith.constant 0.000000e+00 : f32
    %37 = vector.broadcast %cst_32 : f32 to vector<1x64xf32>
    %38 = arith.maximumf %36, %37 : vector<1x64xf32>
    %c0_33 = arith.constant 0 : index
    %c0_34 = arith.constant 0 : index
    %39 = vector.load %arg12[%c0_33, %c0_34] : memref<64x128xf32, #tpu.memory_space<vmem>>, vector<64x128xf32>
    %cst_35 = arith.constant dense<0.000000e+00> : vector<1x128xf32>
    %40 = tpu.matmul %38, %39, %cst_35 {dimension_numbers = #tpu.dot_dimension_numbers<[1], [0], [0], [1], [0, 0, 1, 1], [], []>} : vector<1x64xf32>, vector<64x128xf32>, vector<1x128xf32> -> vector<1x128xf32>
    %c0_36 = arith.constant 0 : index
    %c0_37 = arith.constant 0 : index
    %41 = vector.load %arg13[%c0_36, %c0_37] : memref<1x128xf32, #tpu.memory_space<vmem>>, vector<1x128xf32>
    %42 = arith.addf %40, %41 : vector<1x128xf32>
    %c0_38 = arith.constant 0 : index
    %c0_39 = arith.constant 0 : index
    %c0_40 = arith.constant 0 : index
    %43 = vector.load %arg14[%c0_38, %c0_39, %c0_40] : memref<1x1x128xf32, #tpu.memory_space<vmem>>, vector<1x1x128xf32>
    %44 = vector.shape_cast %43 : vector<1x1x128xf32> to vector<1x128xf32>
    %45 = vector.shape_cast %42 : vector<1x128xf32> to vector<1x1x128xf32>
    tpu.vector_store %arg14[%c0_38, %c0_39, %c0_40], %45 {strides = array<i32>} : memref<1x1x128xf32, #tpu.memory_space<vmem>>, vector<1x1x128xf32>,
    return
  }
  func.func @transform_0(%arg0: i32) -> (i32, i32, i32) {
    %c0_i32 = arith.constant 0 : i32
    %c0_i32_0 = arith.constant 0 : i32
    %c0_i32_1 = arith.constant 0 : i32
    return %arg0, %c0_i32, %c0_i32_0 : i32, i32, i32
  }
  func.func @transform_1(%arg0: i32) -> (i32, i32) {
    %c0_i32 = arith.constant 0 : i32
    %c0_i32_0 = arith.constant 0 : i32
    %c0_i32_1 = arith.constant 0 : i32
    return %c0_i32, %c0_i32_0 : i32, i32
  }
  func.func @transform_2(%arg0: i32) -> (i32, i32) {
    %c0_i32 = arith.constant 0 : i32
    %c0_i32_0 = arith.constant 0 : i32
    %c0_i32_1 = arith.constant 0 : i32
    return %c0_i32, %c0_i32_0 : i32, i32
  }
  func.func @transform_3(%arg0: i32) -> (i32, i32) {
    %c0_i32 = arith.constant 0 : i32
    %c0_i32_0 = arith.constant 0 : i32
    %c0_i32_1 = arith.constant 0 : i32
    return %c0_i32, %c0_i32_0 : i32, i32
  }
  func.func @transform_4(%arg0: i32) -> (i32, i32) {
    %c0_i32 = arith.constant 0 : i32
    %c0_i32_0 = arith.constant 0 : i32
    %c0_i32_1 = arith.constant 0 : i32
    return %c0_i32, %c0_i32_0 : i32, i32
  }
  func.func @transform_5(%arg0: i32) -> (i32, i32) {
    %c0_i32 = arith.constant 0 : i32
    %c0_i32_0 = arith.constant 0 : i32
    %c0_i32_1 = arith.constant 0 : i32
    return %c0_i32, %c0_i32_0 : i32, i32
  }
  func.func @transform_6(%arg0: i32) -> (i32, i32) {
    %c0_i32 = arith.constant 0 : i32
    %c0_i32_0 = arith.constant 0 : i32
    %c0_i32_1 = arith.constant 0 : i32
    return %c0_i32, %c0_i32_0 : i32, i32
  }
  func.func @transform_7(%arg0: i32) -> (i32, i32) {
    %c0_i32 = arith.constant 0 : i32
    %c0_i32_0 = arith.constant 0 : i32
    %c0_i32_1 = arith.constant 0 : i32
    return %c0_i32, %c0_i32_0 : i32, i32
  }
  func.func @transform_8(%arg0: i32) -> (i32, i32) {
    %c0_i32 = arith.constant 0 : i32
    %c0_i32_0 = arith.constant 0 : i32
    %c0_i32_1 = arith.constant 0 : i32
    return %c0_i32, %c0_i32_0 : i32, i32
  }
  func.func @transform_9(%arg0: i32) -> (i32, i32) {
    %c0_i32 = arith.constant 0 : i32
    %c0_i32_0 = arith.constant 0 : i32
    %c0_i32_1 = arith.constant 0 : i32
    return %c0_i32, %c0_i32_0 : i32, i32
  }
  func.func @transform_10(%arg0: i32) -> (i32, i32) {
    %c0_i32 = arith.constant 0 : i32
    %c0_i32_0 = arith.constant 0 : i32
    %c0_i32_1 = arith.constant 0 : i32
    return %c0_i32, %c0_i32_0 : i32, i32
  }
  func.func @transform_11(%arg0: i32) -> (i32, i32) {
    %c0_i32 = arith.constant 0 : i32
    %c0_i32_0 = arith.constant 0 : i32
    %c0_i32_1 = arith.constant 0 : i32
    return %c0_i32, %c0_i32_0 : i32, i32
  }
  func.func @transform_12(%arg0: i32) -> (i32, i32) {
    %c0_i32 = arith.constant 0 : i32
    %c0_i32_0 = arith.constant 0 : i32
    %c0_i32_1 = arith.constant 0 : i32
    return %c0_i32, %c0_i32_0 : i32, i32
  }
  func.func @transform_13(%arg0: i32) -> (i32, i32, i32) {
    %c0_i32 = arith.constant 0 : i32
    %c0_i32_0 = arith.constant 0 : i32
    %c0_i32_1 = arith.constant 0 : i32
    return %arg0, %c0_i32, %c0_i32_0 : i32, i32, i32
  }
}

</mosaic_0001>

<llo_original>
// kernel: tpu_custom_call.1
$region0: #{tpu_custom_call.1}
  #allocation0 [shape = 'u32[]', space=smem, size = 0x4, offset = 0x4, fixed_abs, tag = 'smem constant byte address 0x4 - core index']
  #allocation1 [shape = 'u32[144,128]{1,0:T(1,128)}', space=vmem, size = 0x12000, scoped, tag = 'internal scratch']
  %s0 = inlined_call_operand.vmem [shape: f32[2,1024,3], index: 0, kind: input, shape index: {}]
  %s1 = inlined_call_operand.vmem [shape: f32[3,64], index: 1, kind: input, shape index: {}]
  %s2 = inlined_call_operand.vmem [shape: f32[1,64], index: 2, kind: input, shape index: {}]
  %s3 = inlined_call_operand.vmem [shape: f32[64,128], index: 3, kind: input, shape index: {}]
  %s4 = inlined_call_operand.vmem [shape: f32[1,128], index: 4, kind: input, shape index: {}]
  %s5 = inlined_call_operand.vmem [shape: f32[128,256], index: 5, kind: input, shape index: {}]
  %s6 = inlined_call_operand.vmem [shape: f32[1,256], index: 6, kind: input, shape index: {}]
  %s7 = inlined_call_operand.vmem [shape: f32[256,128], index: 7, kind: input, shape index: {}]
  %s8 = inlined_call_operand.vmem [shape: f32[1,128], index: 8, kind: input, shape index: {}]
  %s9 = inlined_call_operand.vmem [shape: f32[128,64], index: 9, kind: input, shape index: {}]
  %s10 = inlined_call_operand.vmem [shape: f32[1,64], index: 10, kind: input, shape index: {}]
  %s11 = inlined_call_operand.vmem [shape: f32[64,128], index: 11, kind: input, shape index: {}]
  %s12 = inlined_call_operand.vmem [shape: f32[1,128], index: 12, kind: input, shape index: {}]
  %s13 = inlined_call_operand.hbm [shape: f32[2,1,128], index: 13, kind: output, shape index: {}]
  %s14 = sld [smem:[#allocation0]]
  $region85: #{tpu_custom_call.1} parent=0
    _
  %s16 = ssub.s32 1, %s14
  %s17 = scalar_select 0, %s16, %s14
  $region1: #{tpu_custom_call.1} parent=0
    #allocation2 [shape = 'u8[1024]{0}', space=vmem, size = 0x400, scoped, tag = 'output window, operand 0']
    #allocation3 [shape = 's32[2]{0}', space=sflag, size = 0x8, scoped, tag = 'scoped memory for tpu_custom_call.1']
    %18 = vsyncpa [#allocation3], 0
    %s19 = scalar_lea.sflag [#allocation3], 1
    %20 = vsyncpa %s19, 0
    loop: start=0, step=1, limit=4
    $region2: #{tpu_custom_call.1} parent=1 // loop_pre_header
      _
    $region3: #{tpu_custom_call.1} parent=1 // loop_header
      %s22 = sphi 0, %s26
      %p23 = scmp.ge.s32.totalorder %s22, 4
      %s32 = sphi 0, %s34
      %s35 = sphi 0, %s32
      %s36 = sphi 0, %s35
      %s52 = sphi 0, %s36
      %s56 = sphi 0, %s56
      %s58 = sphi 0, %s56
      %s59 = sphi 0, %s58
      %s73 = sphi 0, %s59
      %s77 = sphi 0, %s77
      %s79 = sphi 0, %s77
      %s80 = sphi 0, %s79
      %s94 = sphi 0, %s80
      %s98 = sphi 0, %s98
      %s100 = sphi 0, %s98
      %s101 = sphi 0, %s100
      %s115 = sphi 0, %s101
      %s119 = sphi 0, %s119
      %s121 = sphi 0, %s119
      %s122 = sphi 0, %s121
      %s136 = sphi 0, %s122
      %s140 = sphi 0, %s140
      %s142 = sphi 0, %s140
      %s143 = sphi 0, %s142
      %s157 = sphi 0, %s143
      %s161 = sphi 0, %s161
      %s163 = sphi 0, %s161
      %s164 = sphi 0, %s163
      %s178 = sphi 0, %s164
      %s182 = sphi 0, %s182
      %s184 = sphi 0, %s182
      %s185 = sphi 0, %s184
      %s199 = sphi 0, %s185
      %s203 = sphi 0, %s203
      %s205 = sphi 0, %s203
      %s206 = sphi 0, %s205
      %s220 = sphi 0, %s206
      %s224 = sphi 0, %s224
      %s226 = sphi 0, %s224
      %s227 = sphi 0, %s226
      %s241 = sphi 0, %s227
      %s245 = sphi 0, %s245
      %s247 = sphi 0, %s245
      %s248 = sphi 0, %s247
      %s262 = sphi 0, %s248
      %s266 = sphi 0, %s266
      %s268 = sphi 0, %s266
      %s269 = sphi 0, %s268
      %s283 = sphi 0, %s269
      %s287 = sphi 0, %s287
      %s289 = sphi 0, %s287
      %s290 = sphi 0, %s289
      %s304 = sphi 0, %s290
      %s310 = sphi 0, %s312
      %s313 = sphi 0, %s310
      %s314 = sphi 0, %s313
      %s330 = sphi 0, %s314
    $region4: #{tpu_custom_call.1} parent=1 // loop_header_branch
      %25 = sbr.rel (%p23) target = $region8
    $region5: #{tpu_custom_call.1} parent=1 // loop_body
      %s27 = ssub.s32 %s22, 1
      %s28 = ssub.s32 %s22, 2
      %s29 = sadd.s32 %s22, 1
      %s30 = ssub.s32 %s22, %s29
      %p31 = scmp.eq.s32.totalorder %s30, 0
      %s33 = sadd.s32 %s32, 1
      %s34 = scalar_select %p31, %s32, %s33
      %p37 = pneg %p31
      %p38 = scmp.eq.s32.totalorder %s22, 1
      %p39 = por %p37, %p38
      %p40 = scmp.ne.s32.totalorder %s32, %s35
      %p41 = scmp.eq.s32.totalorder %s22, 0
      %p42 = por %p40, %p41
      %p43 = scmp.ne.s32.totalorder %s32, %s35
      %p44 = scmp.eq.s32.totalorder %s27, 1
      %p45 = por %p43, %p44
      %p46 = scmp.ne.s32.totalorder %s35, %s36
      %p47 = scmp.eq.s32.totalorder %s27, 0
      %p48 = por %p46, %p47
      %p49 = scmp.ne.s32.totalorder %s35, %s36
      %p50 = scmp.eq.s32.totalorder %s28, 1
      %p51 = por %p49, %p50
      %p53 = scmp.ne.s32.totalorder %s36, %s52
      %p54 = scmp.eq.s32.totalorder %s28, 0
      %p55 = por %p53, %p54
      %s57 = sadd.s32 %s56, 1
      %p60 = scmp.eq.s32.totalorder %s22, 1
      %p61 = scmp.ne.s32.totalorder %s56, %s58
      %p62 = scmp.eq.s32.totalorder %s22, 0
      %p63 = por %p61, %p62
      %p64 = scmp.ne.s32.totalorder %s56, %s58
      %p65 = scmp.eq.s32.totalorder %s27, 1
      %p66 = por %p64, %p65
      %p67 = scmp.ne.s32.totalorder %s58, %s59
      %p68 = scmp.eq.s32.totalorder %s27, 0
      %p69 = por %p67, %p68
      %p70 = scmp.ne.s32.totalorder %s58, %s59
      %p71 = scmp.eq.s32.totalorder %s28, 1
      %p72 = por %p70, %p71
      %p74 = scmp.ne.s32.totalorder %s59, %s73
      %p75 = scmp.eq.s32.totalorder %s28, 0
      %p76 = por %p74, %p75
      %s78 = sadd.s32 %s77, 1
      %p81 = scmp.eq.s32.totalorder %s22, 1
      %p82 = scmp.ne.s32.totalorder %s77, %s79
      %p83 = scmp.eq.s32.totalorder %s22, 0
      %p84 = por %p82, %p83
      %p85 = scmp.ne.s32.totalorder %s77, %s79
      %p86 = scmp.eq.s32.totalorder %s27, 1
      %p87 = por %p85, %p86
      %p88 = scmp.ne.s32.totalorder %s79, %s80
      %p89 = scmp.eq.s32.totalorder %s27, 0
      %p90 = por %p88, %p89
      %p91 = scmp.ne.s32.totalorder %s79, %s80
      %p92 = scmp.eq.s32.totalorder %s28, 1
      %p93 = por %p91, %p92
      %p95 = scmp.ne.s32.totalorder %s80, %s94
      %p96 = scmp.eq.s32.totalorder %s28, 0
      %p97 = por %p95, %p96
      %s99 = sadd.s32 %s98, 1
      %p102 = scmp.eq.s32.totalorder %s22, 1
      %p103 = scmp.ne.s32.totalorder %s98, %s100
      %p104 = scmp.eq.s32.totalorder %s22, 0
      %p105 = por %p103, %p104
      %p106 = scmp.ne.s32.totalorder %s98, %s100
      %p107 = scmp.eq.s32.totalorder %s27, 1
      %p108 = por %p106, %p107
      %p109 = scmp.ne.s32.totalorder %s100, %s101
      %p110 = scmp.eq.s32.totalorder %s27, 0
      %p111 = por %p109, %p110
      %p112 = scmp.ne.s32.totalorder %s100, %s101
      %p113 = scmp.eq.s32.totalorder %s28, 1
      %p114 = por %p112, %p113
      %p116 = scmp.ne.s32.totalorder %s101, %s115
      %p117 = scmp.eq.s32.totalorder %s28, 0
      %p118 = por %p116, %p117
      %s120 = sadd.s32 %s119, 1
      %p123 = scmp.eq.s32.totalorder %s22, 1
      %p124 = scmp.ne.s32.totalorder %s119, %s121
      %p125 = scmp.eq.s32.totalorder %s22, 0
      %p126 = por %p124, %p125
      %p127 = scmp.ne.s32.totalorder %s119, %s121
      %p128 = scmp.eq.s32.totalorder %s27, 1
      %p129 = por %p127, %p128
      %p130 = scmp.ne.s32.totalorder %s121, %s122
      %p131 = scmp.eq.s32.totalorder %s27, 0
      %p132 = por %p130, %p131
      %p133 = scmp.ne.s32.totalorder %s121, %s122
      %p134 = scmp.eq.s32.totalorder %s28, 1
      %p135 = por %p133, %p134
      %p137 = scmp.ne.s32.totalorder %s122, %s136
      %p138 = scmp.eq.s32.totalorder %s28, 0
      %p139 = por %p137, %p138
      %s141 = sadd.s32 %s140, 1
      %p144 = scmp.eq.s32.totalorder %s22, 1
      %p145 = scmp.ne.s32.totalorder %s140, %s142
      %p146 = scmp.eq.s32.totalorder %s22, 0
      %p147 = por %p145, %p146
      %p148 = scmp.ne.s32.totalorder %s140, %s142
      %p149 = scmp.eq.s32.totalorder %s27, 1
      %p150 = por %p148, %p149
      %p151 = scmp.ne.s32.totalorder %s142, %s143
      %p152 = scmp.eq.s32.totalorder %s27, 0
      %p153 = por %p151, %p152
      %p154 = scmp.ne.s32.totalorder %s142, %s143
      %p155 = scmp.eq.s32.totalorder %s28, 1
      %p156 = por %p154, %p155
      %p158 = scmp.ne.s32.totalorder %s143, %s157
      %p159 = scmp.eq.s32.totalorder %s28, 0
      %p160 = por %p158, %p159
      %s162 = sadd.s32 %s161, 1
      %p165 = scmp.eq.s32.totalorder %s22, 1
      %p166 = scmp.ne.s32.totalorder %s161, %s163
      %p167 = scmp.eq.s32.totalorder %s22, 0
      %p168 = por %p166, %p167
      %p169 = scmp.ne.s32.totalorder %s161, %s163
      %p170 = scmp.eq.s32.totalorder %s27, 1
      %p171 = por %p169, %p170
      %p172 = scmp.ne.s32.totalorder %s163, %s164
      %p173 = scmp.eq.s32.totalorder %s27, 0
      %p174 = por %p172, %p173
      %p175 = scmp.ne.s32.totalorder %s163, %s164
      %p176 = scmp.eq.s32.totalorder %s28, 1
      %p177 = por %p175, %p176
      %p179 = scmp.ne.s32.totalorder %s164, %s178
      %p180 = scmp.eq.s32.totalorder %s28, 0
      %p181 = por %p179, %p180
      %s183 = sadd.s32 %s182, 1
      %p186 = scmp.eq.s32.totalorder %s22, 1
      %p187 = scmp.ne.s32.totalorder %s182, %s184
      %p188 = scmp.eq.s32.totalorder %s22, 0
      %p189 = por %p187, %p188
      %p190 = scmp.ne.s32.totalorder %s182, %s184
      %p191 = scmp.eq.s32.totalorder %s27, 1
      %p192 = por %p190, %p191
      %p193 = scmp.ne.s32.totalorder %s184, %s185
      %p194 = scmp.eq.s32.totalorder %s27, 0
      %p195 = por %p193, %p194
      %p196 = scmp.ne.s32.totalorder %s184, %s185
      %p197 = scmp.eq.s32.totalorder %s28, 1
      %p198 = por %p196, %p197
      %p200 = scmp.ne.s32.totalorder %s185, %s199
      %p201 = scmp.eq.s32.totalorder %s28, 0
      %p202 = por %p200, %p201
      %s204 = sadd.s32 %s203, 1
      %p207 = scmp.eq.s32.totalorder %s22, 1
      %p208 = scmp.ne.s32.totalorder %s203, %s205
      %p209 = scmp.eq.s32.totalorder %s22, 0
      %p210 = por %p208, %p209
      %p211 = scmp.ne.s32.totalorder %s203, %s205
      %p212 = scmp.eq.s32.totalorder %s27, 1
      %p213 = por %p211, %p212
      %p214 = scmp.ne.s32.totalorder %s205, %s206
      %p215 = scmp.eq.s32.totalorder %s27, 0
      %p216 = por %p214, %p215
      %p217 = scmp.ne.s32.totalorder %s205, %s206
      %p218 = scmp.eq.s32.totalorder %s28, 1
      %p219 = por %p217, %p218
      %p221 = scmp.ne.s32.totalorder %s206, %s220
      %p222 = scmp.eq.s32.totalorder %s28, 0
      %p223 = por %p221, %p222
      %s225 = sadd.s32 %s224, 1
      %p228 = scmp.eq.s32.totalorder %s22, 1
      %p229 = scmp.ne.s32.totalorder %s224, %s226
      %p230 = scmp.eq.s32.totalorder %s22, 0
      %p231 = por %p229, %p230
      %p232 = scmp.ne.s32.totalorder %s224, %s226
      %p233 = scmp.eq.s32.totalorder %s27, 1
      %p234 = por %p232, %p233
      %p235 = scmp.ne.s32.totalorder %s226, %s227
      %p236 = scmp.eq.s32.totalorder %s27, 0
      %p237 = por %p235, %p236
      %p238 = scmp.ne.s32.totalorder %s226, %s227
      %p239 = scmp.eq.s32.totalorder %s28, 1
      %p240 = por %p238, %p239
      %p242 = scmp.ne.s32.totalorder %s227, %s241
      %p243 = scmp.eq.s32.totalorder %s28, 0
      %p244 = por %p242, %p243
      %s246 = sadd.s32 %s245, 1
      %p249 = scmp.eq.s32.totalorder %s22, 1
      %p250 = scmp.ne.s32.totalorder %s245, %s247
      %p251 = scmp.eq.s32.totalorder %s22, 0
      %p252 = por %p250, %p251
      %p253 = scmp.ne.s32.totalorder %s245, %s247
      %p254 = scmp.eq.s32.totalorder %s27, 1
      %p255 = por %p253, %p254
      %p256 = scmp.ne.s32.totalorder %s247, %s248
      %p257 = scmp.eq.s32.totalorder %s27, 0
      %p258 = por %p256, %p257
      %p259 = scmp.ne.s32.totalorder %s247, %s248
      %p260 = scmp.eq.s32.totalorder %s28, 1
      %p261 = por %p259, %p260
      %p263 = scmp.ne.s32.totalorder %s248, %s262
      %p264 = scmp.eq.s32.totalorder %s28, 0
      %p265 = por %p263, %p264
      %s267 = sadd.s32 %s266, 1
      %p270 = scmp.eq.s32.totalorder %s22, 1
      %p271 = scmp.ne.s32.totalorder %s266, %s268
      %p272 = scmp.eq.s32.totalorder %s22, 0
      %p273 = por %p271, %p272
      %p274 = scmp.ne.s32.totalorder %s266, %s268
      %p275 = scmp.eq.s32.totalorder %s27, 1
      %p276 = por %p274, %p275
      %p277 = scmp.ne.s32.totalorder %s268, %s269
      %p278 = scmp.eq.s32.totalorder %s27, 0
      %p279 = por %p277, %p278
      %p280 = scmp.ne.s32.totalorder %s268, %s269
      %p281 = scmp.eq.s32.totalorder %s28, 1
      %p282 = por %p280, %p281
      %p284 = scmp.ne.s32.totalorder %s269, %s283
      %p285 = scmp.eq.s32.totalorder %s28, 0
      %p286 = por %p284, %p285
      %s288 = sadd.s32 %s287, 1
      %p291 = scmp.eq.s32.totalorder %s22, 1
      %p292 = scmp.ne.s32.totalorder %s287, %s289
      %p293 = scmp.eq.s32.totalorder %s22, 0
      %p294 = por %p292, %p293
      %p295 = scmp.ne.s32.totalorder %s287, %s289
      %p296 = scmp.eq.s32.totalorder %s27, 1
      %p297 = por %p295, %p296
      %p298 = scmp.ne.s32.totalorder %s289, %s290
      %p299 = scmp.eq.s32.totalorder %s27, 0
      %p300 = por %p298, %p299
      %p301 = scmp.ne.s32.totalorder %s289, %s290
      %p302 = scmp.eq.s32.totalorder %s28, 1
      %p303 = por %p301, %p302
      %p305 = scmp.ne.s32.totalorder %s290, %s304
      %p306 = scmp.eq.s32.totalorder %s28, 0
      %p307 = por %p305, %p306
      %s308 = ssub.s32 %s22, %s29
      %p309 = scmp.eq.s32.totalorder %s308, 0
      %s311 = sadd.s32 %s310, 1
      %s312 = scalar_select %p309, %s310, %s311
      %p315 = pneg %p309
      %p316 = scmp.eq.s32.totalorder %s22, 1
      %p317 = por %p315, %p316
      %p318 = scmp.ne.s32.totalorder %s310, %s313
      %p319 = scmp.eq.s32.totalorder %s22, 0
      %p320 = por %p318, %p319
      %p321 = scmp.ne.s32.totalorder %s310, %s313
      %p322 = scmp.eq.s32.totalorder %s27, 1
      %p323 = por %p321, %p322
      %p324 = scmp.ne.s32.totalorder %s313, %s314
      %p325 = scmp.eq.s32.totalorder %s27, 0
      %p326 = por %p324, %p325
      %p327 = scmp.ne.s32.totalorder %s313, %s314
      %p328 = scmp.eq.s32.totalorder %s28, 1
      %p329 = por %p327, %p328
      %p331 = scmp.ne.s32.totalorder %s314, %s330
      %p332 = scmp.eq.s32.totalorder %s28, 0
      %p333 = por %p331, %p332
      %p334 = scmp.le.s32.totalorder 1, %s22
      %p335 = scmp.lt.s32.totalorder %s22, 3
      %p336 = pnand %p334, %p335
      %p337 = pneg %p336
      // Predicated region
      $region9: #{tpu_custom_call.1} parent=5 // pred_check
        _
      $region10: #{tpu_custom_call.1} parent=5 // pred_check_branch
        %339 = sbr.rel (%p336) target = $region12
      $region11: #{tpu_custom_call.1} parent=5 // pred_region
        %s340 = ssub.s32 %s22, 1
        // Predicated region
        $region13: #{tpu_custom_call.1} parent=11 // pred_check
          %p341 = pneg %p69
        $region14: #{tpu_custom_call.1} parent=11 // pred_check_branch
          %343 = sbr.rel (%p341) target = $region16
        $region15: #{tpu_custom_call.1} parent=11 // pred_region
          _
        $region16: #{tpu_custom_call.1} parent=11 // pred_fallthru
          _
        // Predicated region
        $region17: #{tpu_custom_call.1} parent=11 // pred_check
          %p344 = pneg %p90
        $region18: #{tpu_custom_call.1} parent=11 // pred_check_branch
          %346 = sbr.rel (%p344) target = $region20
        $region19: #{tpu_custom_call.1} parent=11 // pred_region
          _
        $region20: #{tpu_custom_call.1} parent=11 // pred_fallthru
          _
        // Predicated region
        $region21: #{tpu_custom_call.1} parent=11 // pred_check
          %p347 = pneg %p111
        $region22: #{tpu_custom_call.1} parent=11 // pred_check_branch
          %349 = sbr.rel (%p347) target = $region24
        $region23: #{tpu_custom_call.1} parent=11 // pred_region
          _
        $region24: #{tpu_custom_call.1} parent=11 // pred_fallthru
          _
        // Predicated region
        $region25: #{tpu_custom_call.1} parent=11 // pred_check
          %p350 = pneg %p132
        $region26: #{tpu_custom_call.1} parent=11 // pred_check_branch
          %352 = sbr.rel (%p350) target = $region28
        $region27: #{tpu_custom_call.1} parent=11 // pred_region
          _
        $region28: #{tpu_custom_call.1} parent=11 // pred_fallthru
          _
        // Predicated region
        $region29: #{tpu_custom_call.1} parent=11 // pred_check
          %p353 = pneg %p153
        $region30: #{tpu_custom_call.1} parent=11 // pred_check_branch
          %355 = sbr.rel (%p353) target = $region32
        $region31: #{tpu_custom_call.1} parent=11 // pred_region
          _
        $region32: #{tpu_custom_call.1} parent=11 // pred_fallthru
          _
        // Predicated region
        $region33: #{tpu_custom_call.1} parent=11 // pred_check
          %p356 = pneg %p174
        $region34: #{tpu_custom_call.1} parent=11 // pred_check_branch
          %358 = sbr.rel (%p356) target = $region36
        $region35: #{tpu_custom_call.1} parent=11 // pred_region
          _
        $region36: #{tpu_custom_call.1} parent=11 // pred_fallthru
          _
        // Predicated region
        $region37: #{tpu_custom_call.1} parent=11 // pred_check
          %p359 = pneg %p195
        $region38: #{tpu_custom_call.1} parent=11 // pred_check_branch
          %361 = sbr.rel (%p359) target = $region40
        $region39: #{tpu_custom_call.1} parent=11 // pred_region
          _
        $region40: #{tpu_custom_call.1} parent=11 // pred_fallthru
          _
        // Predicated region
        $region41: #{tpu_custom_call.1} parent=11 // pred_check
          %p362 = pneg %p216
        $region42: #{tpu_custom_call.1} parent=11 // pred_check_branch
          %364 = sbr.rel (%p362) target = $region44
        $region43: #{tpu_custom_call.1} parent=11 // pred_region
          _
        $region44: #{tpu_custom_call.1} parent=11 // pred_fallthru
          _
        // Predicated region
        $region45: #{tpu_custom_call.1} parent=11 // pred_check
          %p365 = pneg %p237
        $region46: #{tpu_custom_call.1} parent=11 // pred_check_branch
          %367 = sbr.rel (%p365) target = $region48
        $region47: #{tpu_custom_call.1} parent=11 // pred_region
          _
        $region48: #{tpu_custom_call.1} parent=11 // pred_fallthru
          _
        // Predicated region
        $region49: #{tpu_custom_call.1} parent=11 // pred_check
          %p368 = pneg %p258
        $region50: #{tpu_custom_call.1} parent=11 // pred_check_branch
          %370 = sbr.rel (%p368) target = $region52
        $region51: #{tpu_custom_call.1} parent=11 // pred_region
          _
        $region52: #{tpu_custom_call.1} parent=11 // pred_fallthru
          _
        // Predicated region
        $region53: #{tpu_custom_call.1} parent=11 // pred_check
          %p371 = pneg %p279
        $region54: #{tpu_custom_call.1} parent=11 // pred_check_branch
          %373 = sbr.rel (%p371) target = $region56
        $region55: #{tpu_custom_call.1} parent=11 // pred_region
          _
        $region56: #{tpu_custom_call.1} parent=11 // pred_fallthru
          _
        // Predicated region
        $region57: #{tpu_custom_call.1} parent=11 // pred_check
          %p374 = pneg %p300
        $region58: #{tpu_custom_call.1} parent=11 // pred_check_branch
          %376 = sbr.rel (%p374) target = $region60
        $region59: #{tpu_custom_call.1} parent=11 // pred_region
          _
        $region60: #{tpu_custom_call.1} parent=11 // pred_fallthru
          _
      $region12: #{tpu_custom_call.1} parent=5 // pred_fallthru
        _
      %p377 = scmp.lt.s32.totalorder %s22, 2
      // Predicated region
      $region61: #{tpu_custom_call.1} parent=5 // pred_check
        %p378 = pneg %p377
      $region62: #{tpu_custom_call.1} parent=5 // pred_check_branch
        %380 = sbr.rel (%p378) target = $region64
      $region63: #{tpu_custom_call.1} parent=5 // pred_region
        // Predicated region
        $region65: #{tpu_custom_call.1} parent=63 // pred_check
          %p381 = pneg %p42
        $region66: #{tpu_custom_call.1} parent=63 // pred_check_branch
          %383 = sbr.rel (%p381) target = $region68
        $region67: #{tpu_custom_call.1} parent=63 // pred_region
          %p384 = scmp.lt.s32.totalorder %s22, 1
          %s385 = scalar_select %p384, %s22, 1
          %s386 = smul.addr %s385, 128
          %s387 = smul.addr %s386, 8
          %s388 = scalar_lea.vmem %s0, %s387
        $region68: #{tpu_custom_call.1} parent=63 // pred_fallthru
          _
      $region64: #{tpu_custom_call.1} parent=5 // pred_fallthru
        _
      %p389 = scmp.le.s32.totalorder 1, %s22
      %p390 = scmp.lt.s32.totalorder %s22, 3
      %p391 = pnand %p389, %p390
      %p392 = pneg %p391
      // Predicated region
      $region69: #{tpu_custom_call.1} parent=5 // pred_check
        _
      $region70: #{tpu_custom_call.1} parent=5 // pred_check_branch
        %394 = sbr.rel (%p391) target = $region72
      $region71: #{tpu_custom_call.1} parent=5 // pred_region
        %s395 = ssub.s32 %s22, 1
        %p396 = scmp.lt.s32.totalorder %s27, 1
        %s397 = scalar_select %p396, %s27, 1
        %s398 = smul.addr %s397, 128
        %s399 = smul.addr %s398, 8
        %s400 = scalar_lea.vmem %s0, %s399
        %p401 = pneg %p48
        %p402 = pneg %p45
        %p403 = pneg %p69
        %p404 = pneg %p66
        %p405 = pneg %p90
        %p406 = pneg %p87
        %p407 = pneg %p111
        %p408 = pneg %p108
        %p409 = pneg %p132
        %p410 = pneg %p129
        %p411 = pneg %p153
        %p412 = pneg %p150
        %p413 = pneg %p174
        %p414 = pneg %p171
        %p415 = pneg %p195
        %p416 = pneg %p192
        %p417 = pneg %p216
        %p418 = pneg %p213
        %p419 = pneg %p237
        %p420 = pneg %p234
        %p421 = pneg %p258
        %p422 = pneg %p255
        %p423 = pneg %p279
        %p424 = pneg %p276
        %p425 = pneg %p300
        %p426 = pneg %p297
        %p427 = pneg %p326
        %p428 = pneg %p323
        %s429 = sand.u32 %s313, 1
        %s430 = scalar_lea.sflag [#allocation3], %s429
        %s431 = sand.u32 %s313, 1
        %s432 = scalar_lea.vmem [#allocation2], %s431
        %p433 = scmp.lt.s32.totalorder %s27, 1
        %s434 = scalar_select %p433, %s27, 1
        %s435 = smul.addr %s434, 128
        %s436 = smul.addr %s435, 8
        %s437 = scalar_lea.vmem %s0, %s436
        %v438 = vld [vmem:[%s437] sm:$0xff]
        %v439 = vld [vmem:[%s437 + $0x8] sm:$0xff]
        %v440 = vld [vmem:[%s437 + $0x10] sm:$0xff]
        %v441 = vld [vmem:[%s437 + $0x18] sm:$0xff]
        %v442 = vld [vmem:[%s437 + $0x20] sm:$0xff]
        %v443 = vld [vmem:[%s437 + $0x28] sm:$0xff]
        %v444 = vld [vmem:[%s437 + $0x30] sm:$0xff]
        %v445 = vld [vmem:[%s437 + $0x38] sm:$0xff]
        %v446 = vld [vmem:[%s437 + $0x40] sm:$0xff]
        %v447 = vld [vmem:[%s437 + $0x48] sm:$0xff]
        %v448 = vld [vmem:[%s437 + $0x50] sm:$0xff]
        %v449 = vld [vmem:[%s437 + $0x58] sm:$0xff]
        %v450 = vld [vmem:[%s437 + $0x60] sm:$0xff]
        %v451 = vld [vmem:[%s437 + $0x68] sm:$0xff]
        %v452 = vld [vmem:[%s437 + $0x70] sm:$0xff]
        %v453 = vld [vmem:[%s437 + $0x78] sm:$0xff]
        %v454 = vld [vmem:[%s437 + $0x80] sm:$0xff]
        %v455 = vld [vmem:[%s437 + $0x88] sm:$0xff]
        %v456 = vld [vmem:[%s437 + $0x90] sm:$0xff]
        %v457 = vld [vmem:[%s437 + $0x98] sm:$0xff]
        %v458 = vld [vmem:[%s437 + $0xa0] sm:$0xff]
        %v459 = vld [vmem:[%s437 + $0xa8] sm:$0xff]
        %v460 = vld [vmem:[%s437 + $0xb0] sm:$0xff]
        %v461 = vld [vmem:[%s437 + $0xb8] sm:$0xff]
        %v462 = vld [vmem:[%s437 + $0xc0] sm:$0xff]
        %v463 = vld [vmem:[%s437 + $0xc8] sm:$0xff]
        %v464 = vld [vmem:[%s437 + $0xd0] sm:$0xff]
        %v465 = vld [vmem:[%s437 + $0xd8] sm:$0xff]
        %v466 = vld [vmem:[%s437 + $0xe0] sm:$0xff]
        %v467 = vld [vmem:[%s437 + $0xe8] sm:$0xff]
        %v468 = vld [vmem:[%s437 + $0xf0] sm:$0xff]
        %v469 = vld [vmem:[%s437 + $0xf8] sm:$0xff]
        %v470 = vld [vmem:[%s437 + $0x100] sm:$0xff]
        %v471 = vld [vmem:[%s437 + $0x108] sm:$0xff]
        %v472 = vld [vmem:[%s437 + $0x110] sm:$0xff]
        %v473 = vld [vmem:[%s437 + $0x118] sm:$0xff]
        %v474 = vld [vmem:[%s437 + $0x120] sm:$0xff]
        %v475 = vld [vmem:[%s437 + $0x128] sm:$0xff]
        %v476 = vld [vmem:[%s437 + $0x130] sm:$0xff]
        %v477 = vld [vmem:[%s437 + $0x138] sm:$0xff]
        %v478 = vld [vmem:[%s437 + $0x140] sm:$0xff]
        %v479 = vld [vmem:[%s437 + $0x148] sm:$0xff]
        %v480 = vld [vmem:[%s437 + $0x150] sm:$0xff]
        %v481 = vld [vmem:[%s437 + $0x158] sm:$0xff]
        %v482 = vld [vmem:[%s437 + $0x160] sm:$0xff]
        %v483 = vld [vmem:[%s437 + $0x168] sm:$0xff]
        %v484 = vld [vmem:[%s437 + $0x170] sm:$0xff]
        %v485 = vld [vmem:[%s437 + $0x178] sm:$0xff]
        %v486 = vld [vmem:[%s437 + $0x180] sm:$0xff]
        %v487 = vld [vmem:[%s437 + $0x188] sm:$0xff]
        %v488 = vld [vmem:[%s437 + $0x190] sm:$0xff]
        %v489 = vld [vmem:[%s437 + $0x198] sm:$0xff]
        %v490 = vld [vmem:[%s437 + $0x1a0] sm:$0xff]
        %v491 = vld [vmem:[%s437 + $0x1a8] sm:$0xff]
        %v492 = vld [vmem:[%s437 + $0x1b0] sm:$0xff]
        %v493 = vld [vmem:[%s437 + $0x1b8] sm:$0xff]
        %v494 = vld [vmem:[%s437 + $0x1c0] sm:$0xff]
        %v495 = vld [vmem:[%s437 + $0x1c8] sm:$0xff]
        %v496 = vld [vmem:[%s437 + $0x1d0] sm:$0xff]
        %v497 = vld [vmem:[%s437 + $0x1d8] sm:$0xff]
        %v498 = vld [vmem:[%s437 + $0x1e0] sm:$0xff]
        %v499 = vld [vmem:[%s437 + $0x1e8] sm:$0xff]
        %v500 = vld [vmem:[%s437 + $0x1f0] sm:$0xff]
        %v501 = vld [vmem:[%s437 + $0x1f8] sm:$0xff]
        %v502 = vld [vmem:[%s437 + $0x200] sm:$0xff]
        %v503 = vld [vmem:[%s437 + $0x208] sm:$0xff]
        %v504 = vld [vmem:[%s437 + $0x210] sm:$0xff]
        %v505 = vld [vmem:[%s437 + $0x218] sm:$0xff]
        %v506 = vld [vmem:[%s437 + $0x220] sm:$0xff]
        %v507 = vld [vmem:[%s437 + $0x228] sm:$0xff]
        %v508 = vld [vmem:[%s437 + $0x230] sm:$0xff]
        %v509 = vld [vmem:[%s437 + $0x238] sm:$0xff]
        %v510 = vld [vmem:[%s437 + $0x240] sm:$0xff]
        %v511 = vld [vmem:[%s437 + $0x248] sm:$0xff]
        %v512 = vld [vmem:[%s437 + $0x250] sm:$0xff]
        %v513 = vld [vmem:[%s437 + $0x258] sm:$0xff]
        %v514 = vld [vmem:[%s437 + $0x260] sm:$0xff]
        %v515 = vld [vmem:[%s437 + $0x268] sm:$0xff]
        %v516 = vld [vmem:[%s437 + $0x270] sm:$0xff]
        %v517 = vld [vmem:[%s437 + $0x278] sm:$0xff]
        %v518 = vld [vmem:[%s437 + $0x280] sm:$0xff]
        %v519 = vld [vmem:[%s437 + $0x288] sm:$0xff]
        %v520 = vld [vmem:[%s437 + $0x290] sm:$0xff]
        %v521 = vld [vmem:[%s437 + $0x298] sm:$0xff]
        %v522 = vld [vmem:[%s437 + $0x2a0] sm:$0xff]
        %v523 = vld [vmem:[%s437 + $0x2a8] sm:$0xff]
        %v524 = vld [vmem:[%s437 + $0x2b0] sm:$0xff]
        %v525 = vld [vmem:[%s437 + $0x2b8] sm:$0xff]
        %v526 = vld [vmem:[%s437 + $0x2c0] sm:$0xff]
        %v527 = vld [vmem:[%s437 + $0x2c8] sm:$0xff]
        %v528 = vld [vmem:[%s437 + $0x2d0] sm:$0xff]
        %v529 = vld [vmem:[%s437 + $0x2d8] sm:$0xff]
        %v530 = vld [vmem:[%s437 + $0x2e0] sm:$0xff]
        %v531 = vld [vmem:[%s437 + $0x2e8] sm:$0xff]
        %v532 = vld [vmem:[%s437 + $0x2f0] sm:$0xff]
        %v533 = vld [vmem:[%s437 + $0x2f8] sm:$0xff]
        %v534 = vld [vmem:[%s437 + $0x300] sm:$0xff]
        %v535 = vld [vmem:[%s437 + $0x308] sm:$0xff]
        %v536 = vld [vmem:[%s437 + $0x310] sm:$0xff]
        %v537 = vld [vmem:[%s437 + $0x318] sm:$0xff]
        %v538 = vld [vmem:[%s437 + $0x320] sm:$0xff]
        %v539 = vld [vmem:[%s437 + $0x328] sm:$0xff]
        %v540 = vld [vmem:[%s437 + $0x330] sm:$0xff]
        %v541 = vld [vmem:[%s437 + $0x338] sm:$0xff]
        %v542 = vld [vmem:[%s437 + $0x340] sm:$0xff]
        %v543 = vld [vmem:[%s437 + $0x348] sm:$0xff]
        %v544 = vld [vmem:[%s437 + $0x350] sm:$0xff]
        %v545 = vld [vmem:[%s437 + $0x358] sm:$0xff]
        %v546 = vld [vmem:[%s437 + $0x360] sm:$0xff]
        %v547 = vld [vmem:[%s437 + $0x368] sm:$0xff]
        %v548 = vld [vmem:[%s437 + $0x370] sm:$0xff]
        %v549 = vld [vmem:[%s437 + $0x378] sm:$0xff]
        %v550 = vld [vmem:[%s437 + $0x380] sm:$0xff]
        %v551 = vld [vmem:[%s437 + $0x388] sm:$0xff]
        %v552 = vld [vmem:[%s437 + $0x390] sm:$0xff]
        %v553 = vld [vmem:[%s437 + $0x398] sm:$0xff]
        %v554 = vld [vmem:[%s437 + $0x3a0] sm:$0xff]
        %v555 = vld [vmem:[%s437 + $0x3a8] sm:$0xff]
        %v556 = vld [vmem:[%s437 + $0x3b0] sm:$0xff]
        %v557 = vld [vmem:[%s437 + $0x3b8] sm:$0xff]
        %v558 = vld [vmem:[%s437 + $0x3c0] sm:$0xff]
        %v559 = vld [vmem:[%s437 + $0x3c8] sm:$0xff]
        %v560 = vld [vmem:[%s437 + $0x3d0] sm:$0xff]
        %v561 = vld [vmem:[%s437 + $0x3d8] sm:$0xff]
        %v562 = vld [vmem:[%s437 + $0x3e0] sm:$0xff]
        %v563 = vld [vmem:[%s437 + $0x3e8] sm:$0xff]
        %v564 = vld [vmem:[%s437 + $0x3f0] sm:$0xff]
        %v565 = vld [vmem:[%s437 + $0x3f8] sm:$0xff]
        %v566 = vld [vmem:[%s1] sm:$0x7]
        %v567 = vld [vmem:[%s2] sm:$0x1]
        %v569 = vlaneseq
        %v570 = vshrl.u32 %v569, 7
        %v571 = vsub.s32 0, %v570
        %v572 = vrot.slane %v567, %v571
        %vm574 = vcmask 23552
        %v576 = vsel %vm574, %v438, 0
        %v579 = vsel %vm574, %v439, 0
        %v582 = vsel %vm574, %v440, 0
        %v585 = vsel %vm574, %v441, 0
        %v588 = vsel %vm574, %v442, 0
        %v591 = vsel %vm574, %v443, 0
        %v594 = vsel %vm574, %v444, 0
        %v597 = vsel %vm574, %v445, 0
        %v600 = vsel %vm574, %v446, 0
        %v603 = vsel %vm574, %v447, 0
        %v606 = vsel %vm574, %v448, 0
        %v609 = vsel %vm574, %v449, 0
        %v612 = vsel %vm574, %v450, 0
        %v615 = vsel %vm574, %v451, 0
        %v618 = vsel %vm574, %v452, 0
        %v621 = vsel %vm574, %v453, 0
        %v624 = vsel %vm574, %v454, 0
        %v627 = vsel %vm574, %v455, 0
        %v630 = vsel %vm574, %v456, 0
        %v633 = vsel %vm574, %v457, 0
        %v636 = vsel %vm574, %v458, 0
        %v639 = vsel %vm574, %v459, 0
        %v642 = vsel %vm574, %v460, 0
        %v645 = vsel %vm574, %v461, 0
        %v648 = vsel %vm574, %v462, 0
        %v651 = vsel %vm574, %v463, 0
        %v654 = vsel %vm574, %v464, 0
        %v657 = vsel %vm574, %v465, 0
        %v660 = vsel %vm574, %v466, 0
        %v663 = vsel %vm574, %v467, 0
        %v666 = vsel %vm574, %v468, 0
        %v669 = vsel %vm574, %v469, 0
        %v672 = vsel %vm574, %v470, 0
        %v675 = vsel %vm574, %v471, 0
        %v678 = vsel %vm574, %v472, 0
        %v681 = vsel %vm574, %v473, 0
        %v684 = vsel %vm574, %v474, 0
        %v687 = vsel %vm574, %v475, 0
        %v690 = vsel %vm574, %v476, 0
        %v693 = vsel %vm574, %v477, 0
        %v696 = vsel %vm574, %v478, 0
        %v699 = vsel %vm574, %v479, 0
        %v702 = vsel %vm574, %v480, 0
        %v705 = vsel %vm574, %v481, 0
        %v708 = vsel %vm574, %v482, 0
        %v711 = vsel %vm574, %v483, 0
        %v714 = vsel %vm574, %v484, 0
        %v717 = vsel %vm574, %v485, 0
        %v720 = vsel %vm574, %v486, 0
        %v723 = vsel %vm574, %v487, 0
        %v726 = vsel %vm574, %v488, 0
        %v729 = vsel %vm574, %v489, 0
        %v732 = vsel %vm574, %v490, 0
        %v735 = vsel %vm574, %v491, 0
        %v738 = vsel %vm574, %v492, 0
        %v741 = vsel %vm574, %v493, 0
        %v744 = vsel %vm574, %v494, 0
        %v747 = vsel %vm574, %v495, 0
        %v750 = vsel %vm574, %v496, 0
        %v753 = vsel %vm574, %v497, 0
        %v756 = vsel %vm574, %v498, 0
        %v759 = vsel %vm574, %v499, 0
        %v762 = vsel %vm574, %v500, 0
        %v765 = vsel %vm574, %v501, 0
        %v768 = vsel %vm574, %v502, 0
        %v771 = vsel %vm574, %v503, 0
        %v774 = vsel %vm574, %v504, 0
        %v777 = vsel %vm574, %v505, 0
        %v780 = vsel %vm574, %v506, 0
        %v783 = vsel %vm574, %v507, 0
        %v786 = vsel %vm574, %v508, 0
        %v789 = vsel %vm574, %v509, 0
        %v792 = vsel %vm574, %v510, 0
        %v795 = vsel %vm574, %v511, 0
        %v798 = vsel %vm574, %v512, 0
        %v801 = vsel %vm574, %v513, 0
        %v804 = vsel %vm574, %v514, 0
        %v807 = vsel %vm574, %v515, 0
        %v810 = vsel %vm574, %v516, 0
        %v813 = vsel %vm574, %v517, 0
        %v816 = vsel %vm574, %v518, 0
        %v819 = vsel %vm574, %v519, 0
        %v822 = vsel %vm574, %v520, 0
        %v825 = vsel %vm574, %v521, 0
        %v828 = vsel %vm574, %v522, 0
        %v831 = vsel %vm574, %v523, 0
        %v834 = vsel %vm574, %v524, 0
        %v837 = vsel %vm574, %v525, 0
        %v840 = vsel %vm574, %v526, 0
        %v843 = vsel %vm574, %v527, 0
        %v846 = vsel %vm574, %v528, 0
        %v849 = vsel %vm574, %v529, 0
        %v852 = vsel %vm574, %v530, 0
        %v855 = vsel %vm574, %v531, 0
        %v858 = vsel %vm574, %v532, 0
        %v861 = vsel %vm574, %v533, 0
        %v864 = vsel %vm574, %v534, 0
        %v867 = vsel %vm574, %v535, 0
        %v870 = vsel %vm574, %v536, 0
        %v873 = vsel %vm574, %v537, 0
        %v876 = vsel %vm574, %v538, 0
        %v879 = vsel %vm574, %v539, 0
        %v882 = vsel %vm574, %v540, 0
        %v885 = vsel %vm574, %v541, 0
        %v888 = vsel %vm574, %v542, 0
        %v891 = vsel %vm574, %v543, 0
        %v894 = vsel %vm574, %v544, 0
        %v897 = vsel %vm574, %v545, 0
        %v900 = vsel %vm574, %v546, 0
        %v903 = vsel %vm574, %v547, 0
        %v906 = vsel %vm574, %v548, 0
        %v909 = vsel %vm574, %v549, 0
        %v912 = vsel %vm574, %v550, 0
        %v915 = vsel %vm574, %v551, 0
        %v918 = vsel %vm574, %v552, 0
        %v921 = vsel %vm574, %v553, 0
        %v924 = vsel %vm574, %v554, 0
        %v927 = vsel %vm574, %v555, 0
        %v930 = vsel %vm574, %v556, 0
        %v933 = vsel %vm574, %v557, 0
        %v936 = vsel %vm574, %v558, 0
        %v939 = vsel %vm574, %v559, 0
        %v942 = vsel %vm574, %v560, 0
        %v945 = vsel %vm574, %v561, 0
        %v948 = vsel %vm574, %v562, 0
        %v951 = vsel %vm574, %v563, 0
        %v954 = vsel %vm574, %v564, 0
        %v957 = vsel %vm574, %v565, 0
        %vm959 = vcmask 1042432
        %v961 = vsel %vm959, %v566, 0
        %963 = vmatprep.subr.mxu0 0.0
        %964 = vmatpush1.msra.mxu0 %v961
        %965 = vmatprep.subr.mxu0 0.0
        %966 = vmatpush1.msra.mxu0 0.0
        %967 = vmatprep.subr.mxu0 0.0
        %968 = vmatpush1.msra.mxu0 0.0
        %969 = vmatprep.subr.mxu0 0.0
        %970 = vmatpush1.msra.mxu0 0.0
        %971 = vmatprep.subr.mxu0 0.0
        %972 = vmatpush1.msra.mxu0 0.0
        %973 = vmatprep.subr.mxu0 0.0
        %974 = vmatpush1.msra.mxu0 0.0
        %975 = vmatprep.subr.mxu0 0.0
        %976 = vmatpush1.msra.mxu0 0.0
        %977 = vmatprep.subr.mxu0 0.0
        %978 = vmatpush1.msra.mxu0 0.0
        %979 = vmatprep.subr.mxu0 0.0
        %980 = vmatpush1.msra.mxu0 0.0
        %981 = vmatprep.subr.mxu0 0.0
        %982 = vmatpush1.msra.mxu0 0.0
        %983 = vmatprep.subr.mxu0 0.0
        %984 = vmatpush1.msra.mxu0 0.0
        %985 = vmatprep.subr.mxu0 0.0
        %986 = vmatpush1.msra.mxu0 0.0
        %987 = vmatprep.subr.mxu0 0.0
        %988 = vmatpush1.msra.mxu0 0.0
        %989 = vmatprep.subr.mxu0 0.0
        %990 = vmatpush1.msra.mxu0 0.0
        %991 = vmatprep.subr.mxu0 0.0
        %992 = vmatpush1.msra.mxu0 0.0
        %993 = vmatprep.subr.mxu0 0.0
        %994 = vmatpush1.msra.mxu0 0.0
        %995 = vmatprep.subr.mxu0 0.0
        %996 = vmatpush1.msra.mxu0 0.0
        %997 = vmatprep.subr.mxu0 0.0
        %998 = vmatpush1.msra.mxu0 0.0
        %999 = vmatprep.subr.mxu0 0.0
        %1000 = vmatpush1.msra.mxu0 0.0
        %1001 = vmatprep.subr.mxu0 0.0
        %1002 = vmatpush1.msra.mxu0 0.0
        %1003 = vmatprep.subr.mxu0 0.0
        %1004 = vmatpush1.msra.mxu0 0.0
        %1005 = vmatprep.subr.mxu0 0.0
        %1006 = vmatpush1.msra.mxu0 0.0
        %1007 = vmatprep.subr.mxu0 0.0
        %1008 = vmatpush1.msra.mxu0 0.0
        %1009 = vmatprep.subr.mxu0 0.0
        %1010 = vmatpush1.msra.mxu0 0.0
        %1011 = vmatprep.subr.mxu0 0.0
        %1012 = vmatpush1.msra.mxu0 0.0
        %1013 = vmatprep.subr.mxu0 0.0
        %1014 = vmatpush1.msra.mxu0 0.0
        %1015 = vmatprep.subr.mxu0 0.0
        %1016 = vmatpush1.msra.mxu0 0.0
        %1017 = vmatprep.subr.mxu0 0.0
        %1018 = vmatpush1.msra.mxu0 0.0
        %1019 = vmatprep.subr.mxu0 0.0
        %1020 = vmatpush1.msra.mxu0 0.0
        %1021 = vmatprep.subr.mxu0 0.0
        %1022 = vmatpush1.msra.mxu0 0.0
        %1023 = vmatprep.subr.mxu0 0.0
        %1024 = vmatpush1.msra.mxu0 0.0
        %1025 = vmatprep.subr.mxu0 0.0
        %1026 = vmatpush1.msra.mxu0 0.0
        %1027 = vmatprep.mubr.f32.mxu0 0.0
        %1028 = vmatmul.mubr.f32.gmra.mrb[0].mxu0 %v576
        %v1029 = vpop.f32.mrb[0].mxu0
        %v1030 = vadd.f32 %v572, %v1029
        %v1031 = vpop.f32.mrb[0].mxu0
        %1032 = vmatprep.mubr.f32.mxu0 0.0
        %1033 = vmatmul.mubr.f32.gmra.mrb[0].mxu0 %v579
        %v1034 = vpop.f32.mrb[0].mxu0
        %v1035 = vadd.f32 %v572, %v1034
        %v1036 = vpop.f32.mrb[0].mxu0
        %1037 = vmatprep.mubr.f32.mxu0 0.0
        %1038 = vmatmul.mubr.f32.gmra.mrb[0].mxu0 %v582
        %v1039 = vpop.f32.mrb[0].mxu0
        %v1040 = vadd.f32 %v572, %v1039
        %v1041 = vpop.f32.mrb[0].mxu0
        %1042 = vmatprep.mubr.f32.mxu0 0.0
        %1043 = vmatmul.mubr.f32.gmra.mrb[0].mxu0 %v585
        %v1044 = vpop.f32.mrb[0].mxu0
        %v1045 = vadd.f32 %v572, %v1044
        %v1046 = vpop.f32.mrb[0].mxu0
        %1047 = vmatprep.mubr.f32.mxu0 0.0
        %1048 = vmatmul.mubr.f32.gmra.mrb[0].mxu0 %v588
        %v1049 = vpop.f32.mrb[0].mxu0
        %v1050 = vadd.f32 %v572, %v1049
        %v1051 = vpop.f32.mrb[0].mxu0
        %1052 = vmatprep.mubr.f32.mxu0 0.0
        %1053 = vmatmul.mubr.f32.gmra.mrb[0].mxu0 %v591
        %v1054 = vpop.f32.mrb[0].mxu0
        %v1055 = vadd.f32 %v572, %v1054
        %v1056 = vpop.f32.mrb[0].mxu0
        %1057 = vmatprep.mubr.f32.mxu0 0.0
        %1058 = vmatmul.mubr.f32.gmra.mrb[0].mxu0 %v594
        %v1059 = vpop.f32.mrb[0].mxu0
        %v1060 = vadd.f32 %v572, %v1059
        %v1061 = vpop.f32.mrb[0].mxu0
        %1062 = vmatprep.mubr.f32.mxu0 0.0
        %1063 = vmatmul.mubr.f32.gmra.mrb[0].mxu0 %v597
        %v1064 = vpop.f32.mrb[0].mxu0
        %v1065 = vadd.f32 %v572, %v1064
        %v1066 = vpop.f32.mrb[0].mxu0
        %1067 = vmatprep.mubr.f32.mxu0 0.0
        %1068 = vmatmul.mubr.f32.gmra.mrb[0].mxu0 %v600
        %v1069 = vpop.f32.mrb[0].mxu0
        %v1070 = vadd.f32 %v572, %v1069
        %v1071 = vpop.f32.mrb[0].mxu0
        %1072 = vmatprep.mubr.f32.mxu0 0.0
        %1073 = vmatmul.mubr.f32.gmra.mrb[0].mxu0 %v603
        %v1074 = vpop.f32.mrb[0].mxu0
        %v1075 = vadd.f32 %v572, %v1074
        %v1076 = vpop.f32.mrb[0].mxu0
        %1077 = vmatprep.mubr.f32.mxu0 0.0
        %1078 = vmatmul.mubr.f32.gmra.mrb[0].mxu0 %v606
        %v1079 = vpop.f32.mrb[0].mxu0
        %v1080 = vadd.f32 %v572, %v1079
        %v1081 = vpop.f32.mrb[0].mxu0
        %1082 = vmatprep.mubr.f32.mxu0 0.0
        %1083 = vmatmul.mubr.f32.gmra.mrb[0].mxu0 %v609
        %v1084 = vpop.f32.mrb[0].mxu0
        %v1085 = vadd.f32 %v572, %v1084
        %v1086 = vpop.f32.mrb[0].mxu0
        %1087 = vmatprep.mubr.f32.mxu0 0.0
        %1088 = vmatmul.mubr.f32.gmra.mrb[0].mxu0 %v612
        %v1089 = vpop.f32.mrb[0].mxu0
        %v1090 = vadd.f32 %v572, %v1089
        %v1091 = vpop.f32.mrb[0].mxu0
        %1092 = vmatprep.mubr.f32.mxu0 0.0
        %1093 = vmatmul.mubr.f32.gmra.mrb[0].mxu0 %v615
        %v1094 = vpop.f32.mrb[0].mxu0
        %v1095 = vadd.f32 %v572, %v1094
        %v1096 = vpop.f32.mrb[0].mxu0
        %1097 = vmatprep.mubr.f32.mxu0 0.0
        %1098 = vmatmul.mubr.f32.gmra.mrb[0].mxu0 %v618
        %v1099 = vpop.f32.mrb[0].mxu0
        %v1100 = vadd.f32 %v572, %v1099
        %v1101 = vpop.f32.mrb[0].mxu0
        %1102 = vmatprep.mubr.f32.mxu0 0.0
        %1103 = vmatmul.mubr.f32.gmra.mrb[0].mxu0 %v621
        %v1104 = vpop.f32.mrb[0].mxu0
        %v1105 = vadd.f32 %v572, %v1104
        %v1106 = vpop.f32.mrb[0].mxu0
        %1107 = vmatprep.mubr.f32.mxu0 0.0
        %1108 = vmatmul.mubr.f32.gmra.mrb[0].mxu0 %v624
        %v1109 = vpop.f32.mrb[0].mxu0
        %v1110 = vadd.f32 %v572, %v1109
        %v1111 = vpop.f32.mrb[0].mxu0
        %1112 = vmatprep.mubr.f32.mxu0 0.0
        %1113 = vmatmul.mubr.f32.gmra.mrb[0].mxu0 %v627
        %v1114 = vpop.f32.mrb[0].mxu0
        %v1115 = vadd.f32 %v572, %v1114
        %v1116 = vpop.f32.mrb[0].mxu0
        %1117 = vmatprep.mubr.f32.mxu0 0.0
        %1118 = vmatmul.mubr.f32.gmra.mrb[0].mxu0 %v630
        %v1119 = vpop.f32.mrb[0].mxu0
        %v1120 = vadd.f32 %v572, %v1119
        %v1121 = vpop.f32.mrb[0].mxu0
        %1122 = vmatprep.mubr.f32.mxu0 0.0
        %1123 = vmatmul.mubr.f32.gmra.mrb[0].mxu0 %v633
        %v1124 = vpop.f32.mrb[0].mxu0
        %v1125 = vadd.f32 %v572, %v1124
        %v1126 = vpop.f32.mrb[0].mxu0
        %1127 = vmatprep.mubr.f32.mxu0 0.0
        %1128 = vmatmul.mubr.f32.gmra.mrb[0].mxu0 %v636
        %v1129 = vpop.f32.mrb[0].mxu0
        %v1130 = vadd.f32 %v572, %v1129
        %v1131 = vpop.f32.mrb[0].mxu0
        %1132 = vmatprep.mubr.f32.mxu0 0.0
        %1133 = vmatmul.mubr.f32.gmra.mrb[0].mxu0 %v639
        %v1134 = vpop.f32.mrb[0].mxu0
        %v1135 = vadd.f32 %v572, %v1134
        %v1136 = vpop.f32.mrb[0].mxu0
        %1137 = vmatprep.mubr.f32.mxu0 0.0
        %1138 = vmatmul.mubr.f32.gmra.mrb[0].mxu0 %v642
        %v1139 = vpop.f32.mrb[0].mxu0
        %v1140 = vadd.f32 %v572, %v1139
        %v1141 = vpop.f32.mrb[0].mxu0
        %1142 = vmatprep.mubr.f32.mxu0 0.0
        %1143 = vmatmul.mubr.f32.gmra.mrb[0].mxu0 %v645
        %v1144 = vpop.f32.mrb[0].mxu0
        %v1145 = vadd.f32 %v572, %v1144
        %v1146 = vpop.f32.mrb[0].mxu0
        %1147 = vmatprep.mubr.f32.mxu0 0.0
        %1148 = vmatmul.mubr.f32.gmra.mrb[0].mxu0 %v648
        %v1149 = vpop.f32.mrb[0].mxu0
        %v1150 = vadd.f32 %v572, %v1149
        %v1151 = vpop.f32.mrb[0].mxu0
        %1152 = vmatprep.mubr.f32.mxu0 0.0
        %1153 = vmatmul.mubr.f32.gmra.mrb[0].mxu0 %v651
        %v1154 = vpop.f32.mrb[0].mxu0
        %v1155 = vadd.f32 %v572, %v1154
        %v1156 = vpop.f32.mrb[0].mxu0
        %1157 = vmatprep.mubr.f32.mxu0 0.0
        %1158 = vmatmul.mubr.f32.gmra.mrb[0].mxu0 %v654
        %v1159 = vpop.f32.mrb[0].mxu0
        %v1160 = vadd.f32 %v572, %v1159
        %v1161 = vpop.f32.mrb[0].mxu0
        %1162 = vmatprep.mubr.f32.mxu0 0.0
        %1163 = vmatmul.mubr.f32.gmra.mrb[0].mxu0 %v657
        %v1164 = vpop.f32.mrb[0].mxu0
        %v1165 = vadd.f32 %v572, %v1164
        %v1166 = vpop.f32.mrb[0].mxu0
        %1167 = vmatprep.mubr.f32.mxu0 0.0
        %1168 = vmatmul.mubr.f32.gmra.mrb[0].mxu0 %v660
        %v1169 = vpop.f32.mrb[0].mxu0
        %v1170 = vadd.f32 %v572, %v1169
        %v1171 = vpop.f32.mrb[0].mxu0
        %1172 = vmatprep.mubr.f32.mxu0 0.0
        %1173 = vmatmul.mubr.f32.gmra.mrb[0].mxu0 %v663
        %v1174 = vpop.f32.mrb[0].mxu0
        %v1175 = vadd.f32 %v572, %v1174
        %v1176 = vpop.f32.mrb[0].mxu0
        %1177 = vmatprep.mubr.f32.mxu0 0.0
        %1178 = vmatmul.mubr.f32.gmra.mrb[0].mxu0 %v666
        %v1179 = vpop.f32.mrb[0].mxu0
        %v1180 = vadd.f32 %v572, %v1179
        %v1181 = vpop.f32.mrb[0].mxu0
        %1182 = vmatprep.mubr.f32.mxu0 0.0
        %1183 = vmatmul.mubr.f32.gmra.mrb[0].mxu0 %v669
        %v1184 = vpop.f32.mrb[0].mxu0
        %v1185 = vadd.f32 %v572, %v1184
        %v1186 = vpop.f32.mrb[0].mxu0
        %1187 = vmatprep.mubr.f32.mxu0 0.0
        %1188 = vmatmul.mubr.f32.gmra.mrb[0].mxu0 %v672
        %v1189 = vpop.f32.mrb[0].mxu0
        %v1190 = vadd.f32 %v572, %v1189
        %v1191 = vpop.f32.mrb[0].mxu0
        %1192 = vmatprep.mubr.f32.mxu0 0.0
        %1193 = vmatmul.mubr.f32.gmra.mrb[0].mxu0 %v675
        %v1194 = vpop.f32.mrb[0].mxu0
        %v1195 = vadd.f32 %v572, %v1194
        %v1196 = vpop.f32.mrb[0].mxu0
        %1197 = vmatprep.mubr.f32.mxu0 0.0
        %1198 = vmatmul.mubr.f32.gmra.mrb[0].mxu0 %v678
        %v1199 = vpop.f32.mrb[0].mxu0
        %v1200 = vadd.f32 %v572, %v1199
        %v1201 = vpop.f32.mrb[0].mxu0
        %1202 = vmatprep.mubr.f32.mxu0 0.0
        %1203 = vmatmul.mubr.f32.gmra.mrb[0].mxu0 %v681
        %v1204 = vpop.f32.mrb[0].mxu0
        %v1205 = vadd.f32 %v572, %v1204
        %v1206 = vpop.f32.mrb[0].mxu0
        %1207 = vmatprep.mubr.f32.mxu0 0.0
        %1208 = vmatmul.mubr.f32.gmra.mrb[0].mxu0 %v684
        %v1209 = vpop.f32.mrb[0].mxu0
        %v1210 = vadd.f32 %v572, %v1209
        %v1211 = vpop.f32.mrb[0].mxu0
        %1212 = vmatprep.mubr.f32.mxu0 0.0
        %1213 = vmatmul.mubr.f32.gmra.mrb[0].mxu0 %v687
        %v1214 = vpop.f32.mrb[0].mxu0
        %v1215 = vadd.f32 %v572, %v1214
        %v1216 = vpop.f32.mrb[0].mxu0
        %1217 = vmatprep.mubr.f32.mxu0 0.0
        %1218 = vmatmul.mubr.f32.gmra.mrb[0].mxu0 %v690
        %v1219 = vpop.f32.mrb[0].mxu0
        %v1220 = vadd.f32 %v572, %v1219
        %v1221 = vpop.f32.mrb[0].mxu0
        %1222 = vmatprep.mubr.f32.mxu0 0.0
        %1223 = vmatmul.mubr.f32.gmra.mrb[0].mxu0 %v693
        %v1224 = vpop.f32.mrb[0].mxu0
        %v1225 = vadd.f32 %v572, %v1224
        %v1226 = vpop.f32.mrb[0].mxu0
        %1227 = vmatprep.mubr.f32.mxu0 0.0
        %1228 = vmatmul.mubr.f32.gmra.mrb[0].mxu0 %v696
        %v1229 = vpop.f32.mrb[0].mxu0
        %v1230 = vadd.f32 %v572, %v1229
        %v1231 = vpop.f32.mrb[0].mxu0
        %1232 = vmatprep.mubr.f32.mxu0 0.0
        %1233 = vmatmul.mubr.f32.gmra.mrb[0].mxu0 %v699
        %v1234 = vpop.f32.mrb[0].mxu0
        %v1235 = vadd.f32 %v572, %v1234
        %v1236 = vpop.f32.mrb[0].mxu0
        %1237 = vmatprep.mubr.f32.mxu0 0.0
        %1238 = vmatmul.mubr.f32.gmra.mrb[0].mxu0 %v702
        %v1239 = vpop.f32.mrb[0].mxu0
        %v1240 = vadd.f32 %v572, %v1239
        %v1241 = vpop.f32.mrb[0].mxu0
        %1242 = vmatprep.mubr.f32.mxu0 0.0
        %1243 = vmatmul.mubr.f32.gmra.mrb[0].mxu0 %v705
        %v1244 = vpop.f32.mrb[0].mxu0
        %v1245 = vadd.f32 %v572, %v1244
        %v1246 = vpop.f32.mrb[0].mxu0
        %1247 = vmatprep.mubr.f32.mxu0 0.0
        %1248 = vmatmul.mubr.f32.gmra.mrb[0].mxu0 %v708
        %v1249 = vpop.f32.mrb[0].mxu0
        %v1250 = vadd.f32 %v572, %v1249
        %v1251 = vpop.f32.mrb[0].mxu0
        %1252 = vmatprep.mubr.f32.mxu0 0.0
        %1253 = vmatmul.mubr.f32.gmra.mrb[0].mxu0 %v711
        %v1254 = vpop.f32.mrb[0].mxu0
        %v1255 = vadd.f32 %v572, %v1254
        %v1256 = vpop.f32.mrb[0].mxu0
        %1257 = vmatprep.mubr.f32.mxu0 0.0
        %1258 = vmatmul.mubr.f32.gmra.mrb[0].mxu0 %v714
        %v1259 = vpop.f32.mrb[0].mxu0
        %v1260 = vadd.f32 %v572, %v1259
        %v1261 = vpop.f32.mrb[0].mxu0
        %1262 = vmatprep.mubr.f32.mxu0 0.0
        %1263 = vmatmul.mubr.f32.gmra.mrb[0].mxu0 %v717
        %v1264 = vpop.f32.mrb[0].mxu0
        %v1265 = vadd.f32 %v572, %v1264
        %v1266 = vpop.f32.mrb[0].mxu0
        %1267 = vmatprep.mubr.f32.mxu0 0.0
        %1268 = vmatmul.mubr.f32.gmra.mrb[0].mxu0 %v720
        %v1269 = vpop.f32.mrb[0].mxu0
        %v1270 = vadd.f32 %v572, %v1269
        %v1271 = vpop.f32.mrb[0].mxu0
        %1272 = vmatprep.mubr.f32.mxu0 0.0
        %1273 = vmatmul.mubr.f32.gmra.mrb[0].mxu0 %v723
        %v1274 = vpop.f32.mrb[0].mxu0
        %v1275 = vadd.f32 %v572, %v1274
        %v1276 = vpop.f32.mrb[0].mxu0
        %1277 = vmatprep.mubr.f32.mxu0 0.0
        %1278 = vmatmul.mubr.f32.gmra.mrb[0].mxu0 %v726
        %v1279 = vpop.f32.mrb[0].mxu0
        %v1280 = vadd.f32 %v572, %v1279
        %v1281 = vpop.f32.mrb[0].mxu0
        %1282 = vmatprep.mubr.f32.mxu0 0.0
        %1283 = vmatmul.mubr.f32.gmra.mrb[0].mxu0 %v729
        %v1284 = vpop.f32.mrb[0].mxu0
        %v1285 = vadd.f32 %v572, %v1284
        %v1286 = vpop.f32.mrb[0].mxu0
        %1287 = vmatprep.mubr.f32.mxu0 0.0
        %1288 = vmatmul.mubr.f32.gmra.mrb[0].mxu0 %v732
        %v1289 = vpop.f32.mrb[0].mxu0
        %v1290 = vadd.f32 %v572, %v1289
        %v1291 = vpop.f32.mrb[0].mxu0
        %1292 = vmatprep.mubr.f32.mxu0 0.0
        %1293 = vmatmul.mubr.f32.gmra.mrb[0].mxu0 %v735
        %v1294 = vpop.f32.mrb[0].mxu0
        %v1295 = vadd.f32 %v572, %v1294
        %v1296 = vpop.f32.mrb[0].mxu0
        %1297 = vmatprep.mubr.f32.mxu0 0.0
        %1298 = vmatmul.mubr.f32.gmra.mrb[0].mxu0 %v738
        %v1299 = vpop.f32.mrb[0].mxu0
        %v1300 = vadd.f32 %v572, %v1299
        %v1301 = vpop.f32.mrb[0].mxu0
        %1302 = vmatprep.mubr.f32.mxu0 0.0
        %1303 = vmatmul.mubr.f32.gmra.mrb[0].mxu0 %v741
        %v1304 = vpop.f32.mrb[0].mxu0
        %v1305 = vadd.f32 %v572, %v1304
        %v1306 = vpop.f32.mrb[0].mxu0
        %1307 = vmatprep.mubr.f32.mxu0 0.0
        %1308 = vmatmul.mubr.f32.gmra.mrb[0].mxu0 %v744
        %v1309 = vpop.f32.mrb[0].mxu0
        %v1310 = vadd.f32 %v572, %v1309
        %v1311 = vpop.f32.mrb[0].mxu0
        %1312 = vmatprep.mubr.f32.mxu0 0.0
        %1313 = vmatmul.mubr.f32.gmra.mrb[0].mxu0 %v747
        %v1314 = vpop.f32.mrb[0].mxu0
        %v1315 = vadd.f32 %v572, %v1314
        %v1316 = vpop.f32.mrb[0].mxu0
        %1317 = vmatprep.mubr.f32.mxu0 0.0
        %1318 = vmatmul.mubr.f32.gmra.mrb[0].mxu0 %v750
        %v1319 = vpop.f32.mrb[0].mxu0
        %v1320 = vadd.f32 %v572, %v1319
        %v1321 = vpop.f32.mrb[0].mxu0
        %1322 = vmatprep.mubr.f32.mxu0 0.0
        %1323 = vmatmul.mubr.f32.gmra.mrb[0].mxu0 %v753
        %v1324 = vpop.f32.mrb[0].mxu0
        %v1325 = vadd.f32 %v572, %v1324
        %v1326 = vpop.f32.mrb[0].mxu0
        %1327 = vmatprep.mubr.f32.mxu0 0.0
        %1328 = vmatmul.mubr.f32.gmra.mrb[0].mxu0 %v756
        %v1329 = vpop.f32.mrb[0].mxu0
        %v1330 = vadd.f32 %v572, %v1329
        %v1331 = vpop.f32.mrb[0].mxu0
        %1332 = vmatprep.mubr.f32.mxu0 0.0
        %1333 = vmatmul.mubr.f32.gmra.mrb[0].mxu0 %v759
        %v1334 = vpop.f32.mrb[0].mxu0
        %v1335 = vadd.f32 %v572, %v1334
        %v1336 = vpop.f32.mrb[0].mxu0
        %1337 = vmatprep.mubr.f32.mxu0 0.0
        %1338 = vmatmul.mubr.f32.gmra.mrb[0].mxu0 %v762
        %v1339 = vpop.f32.mrb[0].mxu0
        %v1340 = vadd.f32 %v572, %v1339
        %v1341 = vpop.f32.mrb[0].mxu0
        %1342 = vmatprep.mubr.f32.mxu0 0.0
        %1343 = vmatmul.mubr.f32.gmra.mrb[0].mxu0 %v765
        %v1344 = vpop.f32.mrb[0].mxu0
        %v1345 = vadd.f32 %v572, %v1344
        %v1346 = vpop.f32.mrb[0].mxu0
        %1347 = vmatprep.mubr.f32.mxu0 0.0
        %1348 = vmatmul.mubr.f32.gmra.mrb[0].mxu0 %v768
        %v1349 = vpop.f32.mrb[0].mxu0
        %v1350 = vadd.f32 %v572, %v1349
        %v1351 = vpop.f32.mrb[0].mxu0
        %1352 = vmatprep.mubr.f32.mxu0 0.0
        %1353 = vmatmul.mubr.f32.gmra.mrb[0].mxu0 %v771
        %v1354 = vpop.f32.mrb[0].mxu0
        %v1355 = vadd.f32 %v572, %v1354
        %v1356 = vpop.f32.mrb[0].mxu0
        %1357 = vmatprep.mubr.f32.mxu0 0.0
        %1358 = vmatmul.mubr.f32.gmra.mrb[0].mxu0 %v774
        %v1359 = vpop.f32.mrb[0].mxu0
        %v1360 = vadd.f32 %v572, %v1359
        %v1361 = vpop.f32.mrb[0].mxu0
        %1362 = vmatprep.mubr.f32.mxu0 0.0
        %1363 = vmatmul.mubr.f32.gmra.mrb[0].mxu0 %v777
        %v1364 = vpop.f32.mrb[0].mxu0
        %v1365 = vadd.f32 %v572, %v1364
        %v1366 = vpop.f32.mrb[0].mxu0
        %1367 = vmatprep.mubr.f32.mxu0 0.0
        %1368 = vmatmul.mubr.f32.gmra.mrb[0].mxu0 %v780
        %v1369 = vpop.f32.mrb[0].mxu0
        %v1370 = vadd.f32 %v572, %v1369
        %v1371 = vpop.f32.mrb[0].mxu0
        %1372 = vmatprep.mubr.f32.mxu0 0.0
        %1373 = vmatmul.mubr.f32.gmra.mrb[0].mxu0 %v783
        %v1374 = vpop.f32.mrb[0].mxu0
        %v1375 = vadd.f32 %v572, %v1374
        %v1376 = vpop.f32.mrb[0].mxu0
        %1377 = vmatprep.mubr.f32.mxu0 0.0
        %1378 = vmatmul.mubr.f32.gmra.mrb[0].mxu0 %v786
        %v1379 = vpop.f32.mrb[0].mxu0
        %v1380 = vadd.f32 %v572, %v1379
        %v1381 = vpop.f32.mrb[0].mxu0
        %1382 = vmatprep.mubr.f32.mxu0 0.0
        %1383 = vmatmul.mubr.f32.gmra.mrb[0].mxu0 %v789
        %v1384 = vpop.f32.mrb[0].mxu0
        %v1385 = vadd.f32 %v572, %v1384
        %v1386 = vpop.f32.mrb[0].mxu0
        %1387 = vmatprep.mubr.f32.mxu0 0.0
        %1388 = vmatmul.mubr.f32.gmra.mrb[0].mxu0 %v792
        %v1389 = vpop.f32.mrb[0].mxu0
        %v1390 = vadd.f32 %v572, %v1389
        %v1391 = vpop.f32.mrb[0].mxu0
        %1392 = vmatprep.mubr.f32.mxu0 0.0
        %1393 = vmatmul.mubr.f32.gmra.mrb[0].mxu0 %v795
        %v1394 = vpop.f32.mrb[0].mxu0
        %v1395 = vadd.f32 %v572, %v1394
        %v1396 = vpop.f32.mrb[0].mxu0
        %1397 = vmatprep.mubr.f32.mxu0 0.0
        %1398 = vmatmul.mubr.f32.gmra.mrb[0].mxu0 %v798
        %v1399 = vpop.f32.mrb[0].mxu0
        %v1400 = vadd.f32 %v572, %v1399
        %v1401 = vpop.f32.mrb[0].mxu0
        %1402 = vmatprep.mubr.f32.mxu0 0.0
        %1403 = vmatmul.mubr.f32.gmra.mrb[0].mxu0 %v801
        %v1404 = vpop.f32.mrb[0].mxu0
        %v1405 = vadd.f32 %v572, %v1404
        %v1406 = vpop.f32.mrb[0].mxu0
        %1407 = vmatprep.mubr.f32.mxu0 0.0
        %1408 = vmatmul.mubr.f32.gmra.mrb[0].mxu0 %v804
        %v1409 = vpop.f32.mrb[0].mxu0
        %v1410 = vadd.f32 %v572, %v1409
        %v1411 = vpop.f32.mrb[0].mxu0
        %1412 = vmatprep.mubr.f32.mxu0 0.0
        %1413 = vmatmul.mubr.f32.gmra.mrb[0].mxu0 %v807
        %v1414 = vpop.f32.mrb[0].mxu0
        %v1415 = vadd.f32 %v572, %v1414
        %v1416 = vpop.f32.mrb[0].mxu0
        %1417 = vmatprep.mubr.f32.mxu0 0.0
        %1418 = vmatmul.mubr.f32.gmra.mrb[0].mxu0 %v810
        %v1419 = vpop.f32.mrb[0].mxu0
        %v1420 = vadd.f32 %v572, %v1419
        %v1421 = vpop.f32.mrb[0].mxu0
        %1422 = vmatprep.mubr.f32.mxu0 0.0
        %1423 = vmatmul.mubr.f32.gmra.mrb[0].mxu0 %v813
        %v1424 = vpop.f32.mrb[0].mxu0
        %v1425 = vadd.f32 %v572, %v1424
        %v1426 = vpop.f32.mrb[0].mxu0
        %1427 = vmatprep.mubr.f32.mxu0 0.0
        %1428 = vmatmul.mubr.f32.gmra.mrb[0].mxu0 %v816
        %v1429 = vpop.f32.mrb[0].mxu0
        %v1430 = vadd.f32 %v572, %v1429
        %v1431 = vpop.f32.mrb[0].mxu0
        %1432 = vmatprep.mubr.f32.mxu0 0.0
        %1433 = vmatmul.mubr.f32.gmra.mrb[0].mxu0 %v819
        %v1434 = vpop.f32.mrb[0].mxu0
        %v1435 = vadd.f32 %v572, %v1434
        %v1436 = vpop.f32.mrb[0].mxu0
        %1437 = vmatprep.mubr.f32.mxu0 0.0
        %1438 = vmatmul.mubr.f32.gmra.mrb[0].mxu0 %v822
        %v1439 = vpop.f32.mrb[0].mxu0
        %v1440 = vadd.f32 %v572, %v1439
        %v1441 = vpop.f32.mrb[0].mxu0
        %1442 = vmatprep.mubr.f32.mxu0 0.0
        %1443 = vmatmul.mubr.f32.gmra.mrb[0].mxu0 %v825
        %v1444 = vpop.f32.mrb[0].mxu0
        %v1445 = vadd.f32 %v572, %v1444
        %v1446 = vpop.f32.mrb[0].mxu0
        %1447 = vmatprep.mubr.f32.mxu0 0.0
        %1448 = vmatmul.mubr.f32.gmra.mrb[0].mxu0 %v828
        %v1449 = vpop.f32.mrb[0].mxu0
        %v1450 = vadd.f32 %v572, %v1449
        %v1451 = vpop.f32.mrb[0].mxu0
        %1452 = vmatprep.mubr.f32.mxu0 0.0
        %1453 = vmatmul.mubr.f32.gmra.mrb[0].mxu0 %v831
        %v1454 = vpop.f32.mrb[0].mxu0
        %v1455 = vadd.f32 %v572, %v1454
        %v1456 = vpop.f32.mrb[0].mxu0
        %1457 = vmatprep.mubr.f32.mxu0 0.0
        %1458 = vmatmul.mubr.f32.gmra.mrb[0].mxu0 %v834
        %v1459 = vpop.f32.mrb[0].mxu0
        %v1460 = vadd.f32 %v572, %v1459
        %v1461 = vpop.f32.mrb[0].mxu0
        %1462 = vmatprep.mubr.f32.mxu0 0.0
        %1463 = vmatmul.mubr.f32.gmra.mrb[0].mxu0 %v837
        %v1464 = vpop.f32.mrb[0].mxu0
        %v1465 = vadd.f32 %v572, %v1464
        %v1466 = vpop.f32.mrb[0].mxu0
        %1467 = vmatprep.mubr.f32.mxu0 0.0
        %1468 = vmatmul.mubr.f32.gmra.mrb[0].mxu0 %v840
        %v1469 = vpop.f32.mrb[0].mxu0
        %v1470 = vadd.f32 %v572, %v1469
        %v1471 = vpop.f32.mrb[0].mxu0
        %1472 = vmatprep.mubr.f32.mxu0 0.0
        %1473 = vmatmul.mubr.f32.gmra.mrb[0].mxu0 %v843
        %v1474 = vpop.f32.mrb[0].mxu0
        %v1475 = vadd.f32 %v572, %v1474
        %v1476 = vpop.f32.mrb[0].mxu0
        %1477 = vmatprep.mubr.f32.mxu0 0.0
        %1478 = vmatmul.mubr.f32.gmra.mrb[0].mxu0 %v846
        %v1479 = vpop.f32.mrb[0].mxu0
        %v1480 = vadd.f32 %v572, %v1479
        %v1481 = vpop.f32.mrb[0].mxu0
        %1482 = vmatprep.mubr.f32.mxu0 0.0
        %1483 = vmatmul.mubr.f32.gmra.mrb[0].mxu0 %v849
        %v1484 = vpop.f32.mrb[0].mxu0
        %v1485 = vadd.f32 %v572, %v1484
        %v1486 = vpop.f32.mrb[0].mxu0
        %1487 = vmatprep.mubr.f32.mxu0 0.0
        %1488 = vmatmul.mubr.f32.gmra.mrb[0].mxu0 %v852
        %v1489 = vpop.f32.mrb[0].mxu0
        %v1490 = vadd.f32 %v572, %v1489
        %v1491 = vpop.f32.mrb[0].mxu0
        %1492 = vmatprep.mubr.f32.mxu0 0.0
        %1493 = vmatmul.mubr.f32.gmra.mrb[0].mxu0 %v855
        %v1494 = vpop.f32.mrb[0].mxu0
        %v1495 = vadd.f32 %v572, %v1494
        %v1496 = vpop.f32.mrb[0].mxu0
        %1497 = vmatprep.mubr.f32.mxu0 0.0
        %1498 = vmatmul.mubr.f32.gmra.mrb[0].mxu0 %v858
        %v1499 = vpop.f32.mrb[0].mxu0
        %v1500 = vadd.f32 %v572, %v1499
        %v1501 = vpop.f32.mrb[0].mxu0
        %1502 = vmatprep.mubr.f32.mxu0 0.0
        %1503 = vmatmul.mubr.f32.gmra.mrb[0].mxu0 %v861
        %v1504 = vpop.f32.mrb[0].mxu0
        %v1505 = vadd.f32 %v572, %v1504
        %v1506 = vpop.f32.mrb[0].mxu0
        %1507 = vmatprep.mubr.f32.mxu0 0.0
        %1508 = vmatmul.mubr.f32.gmra.mrb[0].mxu0 %v864
        %v1509 = vpop.f32.mrb[0].mxu0
        %v1510 = vadd.f32 %v572, %v1509
        %v1511 = vpop.f32.mrb[0].mxu0
        %1512 = vmatprep.mubr.f32.mxu0 0.0
        %1513 = vmatmul.mubr.f32.gmra.mrb[0].mxu0 %v867
        %v1514 = vpop.f32.mrb[0].mxu0
        %v1515 = vadd.f32 %v572, %v1514
        %v1516 = vpop.f32.mrb[0].mxu0
        %1517 = vmatprep.mubr.f32.mxu0 0.0
        %1518 = vmatmul.mubr.f32.gmra.mrb[0].mxu0 %v870
        %v1519 = vpop.f32.mrb[0].mxu0
        %v1520 = vadd.f32 %v572, %v1519
        %v1521 = vpop.f32.mrb[0].mxu0
        %1522 = vmatprep.mubr.f32.mxu0 0.0
        %1523 = vmatmul.mubr.f32.gmra.mrb[0].mxu0 %v873
        %v1524 = vpop.f32.mrb[0].mxu0
        %v1525 = vadd.f32 %v572, %v1524
        %v1526 = vpop.f32.mrb[0].mxu0
        %1527 = vmatprep.mubr.f32.mxu0 0.0
        %1528 = vmatmul.mubr.f32.gmra.mrb[0].mxu0 %v876
        %v1529 = vpop.f32.mrb[0].mxu0
        %v1530 = vadd.f32 %v572, %v1529
        %v1531 = vpop.f32.mrb[0].mxu0
        %1532 = vmatprep.mubr.f32.mxu0 0.0
        %1533 = vmatmul.mubr.f32.gmra.mrb[0].mxu0 %v879
        %v1534 = vpop.f32.mrb[0].mxu0
        %v1535 = vadd.f32 %v572, %v1534
        %v1536 = vpop.f32.mrb[0].mxu0
        %1537 = vmatprep.mubr.f32.mxu0 0.0
        %1538 = vmatmul.mubr.f32.gmra.mrb[0].mxu0 %v882
        %v1539 = vpop.f32.mrb[0].mxu0
        %v1540 = vadd.f32 %v572, %v1539
        %v1541 = vpop.f32.mrb[0].mxu0
        %1542 = vmatprep.mubr.f32.mxu0 0.0
        %1543 = vmatmul.mubr.f32.gmra.mrb[0].mxu0 %v885
        %v1544 = vpop.f32.mrb[0].mxu0
        %v1545 = vadd.f32 %v572, %v1544
        %v1546 = vpop.f32.mrb[0].mxu0
        %1547 = vmatprep.mubr.f32.mxu0 0.0
        %1548 = vmatmul.mubr.f32.gmra.mrb[0].mxu0 %v888
        %v1549 = vpop.f32.mrb[0].mxu0
        %v1550 = vadd.f32 %v572, %v1549
        %v1551 = vpop.f32.mrb[0].mxu0
        %1552 = vmatprep.mubr.f32.mxu0 0.0
        %1553 = vmatmul.mubr.f32.gmra.mrb[0].mxu0 %v891
        %v1554 = vpop.f32.mrb[0].mxu0
        %v1555 = vadd.f32 %v572, %v1554
        %v1556 = vpop.f32.mrb[0].mxu0
        %1557 = vmatprep.mubr.f32.mxu0 0.0
        %1558 = vmatmul.mubr.f32.gmra.mrb[0].mxu0 %v894
        %v1559 = vpop.f32.mrb[0].mxu0
        %v1560 = vadd.f32 %v572, %v1559
        %v1561 = vpop.f32.mrb[0].mxu0
        %1562 = vmatprep.mubr.f32.mxu0 0.0
        %1563 = vmatmul.mubr.f32.gmra.mrb[0].mxu0 %v897
        %v1564 = vpop.f32.mrb[0].mxu0
        %v1565 = vadd.f32 %v572, %v1564
        %v1566 = vpop.f32.mrb[0].mxu0
        %1567 = vmatprep.mubr.f32.mxu0 0.0
        %1568 = vmatmul.mubr.f32.gmra.mrb[0].mxu0 %v900
        %v1569 = vpop.f32.mrb[0].mxu0
        %v1570 = vadd.f32 %v572, %v1569
        %v1571 = vpop.f32.mrb[0].mxu0
        %1572 = vmatprep.mubr.f32.mxu0 0.0
        %1573 = vmatmul.mubr.f32.gmra.mrb[0].mxu0 %v903
        %v1574 = vpop.f32.mrb[0].mxu0
        %v1575 = vadd.f32 %v572, %v1574
        %v1576 = vpop.f32.mrb[0].mxu0
        %1577 = vmatprep.mubr.f32.mxu0 0.0
        %1578 = vmatmul.mubr.f32.gmra.mrb[0].mxu0 %v906
        %v1579 = vpop.f32.mrb[0].mxu0
        %v1580 = vadd.f32 %v572, %v1579
        %v1581 = vpop.f32.mrb[0].mxu0
        %1582 = vmatprep.mubr.f32.mxu0 0.0
        %1583 = vmatmul.mubr.f32.gmra.mrb[0].mxu0 %v909
        %v1584 = vpop.f32.mrb[0].mxu0
        %v1585 = vadd.f32 %v572, %v1584
        %v1586 = vpop.f32.mrb[0].mxu0
        %1587 = vmatprep.mubr.f32.mxu0 0.0
        %1588 = vmatmul.mubr.f32.gmra.mrb[0].mxu0 %v912
        %v1589 = vpop.f32.mrb[0].mxu0
        %v1590 = vadd.f32 %v572, %v1589
        %v1591 = vpop.f32.mrb[0].mxu0
        %1592 = vmatprep.mubr.f32.mxu0 0.0
        %1593 = vmatmul.mubr.f32.gmra.mrb[0].mxu0 %v915
        %v1594 = vpop.f32.mrb[0].mxu0
        %v1595 = vadd.f32 %v572, %v1594
        %v1596 = vpop.f32.mrb[0].mxu0
        %1597 = vmatprep.mubr.f32.mxu0 0.0
        %1598 = vmatmul.mubr.f32.gmra.mrb[0].mxu0 %v918
        %v1599 = vpop.f32.mrb[0].mxu0
        %v1600 = vadd.f32 %v572, %v1599
        %v1601 = vpop.f32.mrb[0].mxu0
        %1602 = vmatprep.mubr.f32.mxu0 0.0
        %1603 = vmatmul.mubr.f32.gmra.mrb[0].mxu0 %v921
        %v1604 = vpop.f32.mrb[0].mxu0
        %v1605 = vadd.f32 %v572, %v1604
        %v1606 = vpop.f32.mrb[0].mxu0
        %1607 = vmatprep.mubr.f32.mxu0 0.0
        %1608 = vmatmul.mubr.f32.gmra.mrb[0].mxu0 %v924
        %v1609 = vpop.f32.mrb[0].mxu0
        %v1610 = vadd.f32 %v572, %v1609
        %v1611 = vpop.f32.mrb[0].mxu0
        %1612 = vmatprep.mubr.f32.mxu0 0.0
        %1613 = vmatmul.mubr.f32.gmra.mrb[0].mxu0 %v927
        %v1614 = vpop.f32.mrb[0].mxu0
        %v1615 = vadd.f32 %v572, %v1614
        %v1616 = vpop.f32.mrb[0].mxu0
        %1617 = vmatprep.mubr.f32.mxu0 0.0
        %1618 = vmatmul.mubr.f32.gmra.mrb[0].mxu0 %v930
        %v1619 = vpop.f32.mrb[0].mxu0
        %v1620 = vadd.f32 %v572, %v1619
        %v1621 = vpop.f32.mrb[0].mxu0
        %1622 = vmatprep.mubr.f32.mxu0 0.0
        %1623 = vmatmul.mubr.f32.gmra.mrb[0].mxu0 %v933
        %v1624 = vpop.f32.mrb[0].mxu0
        %v1625 = vadd.f32 %v572, %v1624
        %v1626 = vpop.f32.mrb[0].mxu0
        %1627 = vmatprep.mubr.f32.mxu0 0.0
        %1628 = vmatmul.mubr.f32.gmra.mrb[0].mxu0 %v936
        %v1629 = vpop.f32.mrb[0].mxu0
        %v1630 = vadd.f32 %v572, %v1629
        %v1631 = vpop.f32.mrb[0].mxu0
        %1632 = vmatprep.mubr.f32.mxu0 0.0
        %1633 = vmatmul.mubr.f32.gmra.mrb[0].mxu0 %v939
        %v1634 = vpop.f32.mrb[0].mxu0
        %v1635 = vadd.f32 %v572, %v1634
        %v1636 = vpop.f32.mrb[0].mxu0
        %1637 = vmatprep.mubr.f32.mxu0 0.0
        %1638 = vmatmul.mubr.f32.gmra.mrb[0].mxu0 %v942
        %v1639 = vpop.f32.mrb[0].mxu0
        %v1640 = vadd.f32 %v572, %v1639
        %v1641 = vpop.f32.mrb[0].mxu0
        %1642 = vmatprep.mubr.f32.mxu0 0.0
        %1643 = vmatmul.mubr.f32.gmra.mrb[0].mxu0 %v945
        %v1644 = vpop.f32.mrb[0].mxu0
        %v1645 = vadd.f32 %v572, %v1644
        %v1646 = vpop.f32.mrb[0].mxu0
        %1647 = vmatprep.mubr.f32.mxu0 0.0
        %1648 = vmatmul.mubr.f32.gmra.mrb[0].mxu0 %v948
        %v1649 = vpop.f32.mrb[0].mxu0
        %v1650 = vadd.f32 %v572, %v1649
        %v1651 = vpop.f32.mrb[0].mxu0
        %1652 = vmatprep.mubr.f32.mxu0 0.0
        %1653 = vmatmul.mubr.f32.gmra.mrb[0].mxu0 %v951
        %v1654 = vpop.f32.mrb[0].mxu0
        %v1655 = vadd.f32 %v572, %v1654
        %v1656 = vpop.f32.mrb[0].mxu0
        %1657 = vmatprep.mubr.f32.mxu0 0.0
        %1658 = vmatmul.mubr.f32.gmra.mrb[0].mxu0 %v954
        %v1659 = vpop.f32.mrb[0].mxu0
        %v1660 = vadd.f32 %v572, %v1659
        %v1661 = vpop.f32.mrb[0].mxu0
        %1662 = vmatprep.mubr.f32.mxu0 0.0
        %1663 = vmatmul.mubr.f32.gmra.mrb[0].mxu0 %v957
        %v1664 = vpop.f32.mrb[0].mxu0
        %v1665 = vadd.f32 %v572, %v1664
        %v1666 = vpop.f32.mrb[0].mxu0
        %1667 = vdwg.mxu0
        %v1668 = vmax.f32 %v1030, 0.0
        %v1669 = vmax.f32 %v1035, 0.0
        %v1670 = vmax.f32 %v1040, 0.0
        %v1671 = vmax.f32 %v1045, 0.0
        %v1672 = vmax.f32 %v1050, 0.0
        %v1673 = vmax.f32 %v1055, 0.0
        %v1674 = vmax.f32 %v1060, 0.0
        %v1675 = vmax.f32 %v1065, 0.0
        %v1676 = vmax.f32 %v1070, 0.0
        %v1677 = vmax.f32 %v1075, 0.0
        %v1678 = vmax.f32 %v1080, 0.0
        %v1679 = vmax.f32 %v1085, 0.0
        %v1680 = vmax.f32 %v1090, 0.0
        %v1681 = vmax.f32 %v1095, 0.0
        %v1682 = vmax.f32 %v1100, 0.0
        %v1683 = vmax.f32 %v1105, 0.0
        %v1684 = vmax.f32 %v1110, 0.0
        %v1685 = vmax.f32 %v1115, 0.0
        %v1686 = vmax.f32 %v1120, 0.0
        %v1687 = vmax.f32 %v1125, 0.0
        %v1688 = vmax.f32 %v1130, 0.0
        %v1689 = vmax.f32 %v1135, 0.0
        %v1690 = vmax.f32 %v1140, 0.0
        %v1691 = vmax.f32 %v1145, 0.0
        %v1692 = vmax.f32 %v1150, 0.0
        %v1693 = vmax.f32 %v1155, 0.0
        %v1694 = vmax.f32 %v1160, 0.0
        %v1695 = vmax.f32 %v1165, 0.0
        %v1696 = vmax.f32 %v1170, 0.0
        %v1697 = vmax.f32 %v1175, 0.0
        %v1698 = vmax.f32 %v1180, 0.0
        %v1699 = vmax.f32 %v1185, 0.0
        %v1700 = vmax.f32 %v1190, 0.0
        %v1701 = vmax.f32 %v1195, 0.0
        %v1702 = vmax.f32 %v1200, 0.0
        %v1703 = vmax.f32 %v1205, 0.0
        %v1704 = vmax.f32 %v1210, 0.0
        %v1705 = vmax.f32 %v1215, 0.0
        %v1706 = vmax.f32 %v1220, 0.0
        %v1707 = vmax.f32 %v1225, 0.0
        %v1708 = vmax.f32 %v1230, 0.0
        %v1709 = vmax.f32 %v1235, 0.0
        %v1710 = vmax.f32 %v1240, 0.0
        %v1711 = vmax.f32 %v1245, 0.0
        %v1712 = vmax.f32 %v1250, 0.0
        %v1713 = vmax.f32 %v1255, 0.0
        %v1714 = vmax.f32 %v1260, 0.0
        %v1715 = vmax.f32 %v1265, 0.0
        %v1716 = vmax.f32 %v1270, 0.0
        %v1717 = vmax.f32 %v1275, 0.0
        %v1718 = vmax.f32 %v1280, 0.0
        %v1719 = vmax.f32 %v1285, 0.0
        %v1720 = vmax.f32 %v1290, 0.0
        %v1721 = vmax.f32 %v1295, 0.0
        %v1722 = vmax.f32 %v1300, 0.0
        %v1723 = vmax.f32 %v1305, 0.0
        %v1724 = vmax.f32 %v1310, 0.0
        %v1725 = vmax.f32 %v1315, 0.0
        %v1726 = vmax.f32 %v1320, 0.0
        %v1727 = vmax.f32 %v1325, 0.0
        %v1728 = vmax.f32 %v1330, 0.0
        %v1729 = vmax.f32 %v1335, 0.0
        %v1730 = vmax.f32 %v1340, 0.0
        %v1731 = vmax.f32 %v1345, 0.0
        %v1732 = vmax.f32 %v1350, 0.0
        %v1733 = vmax.f32 %v1355, 0.0
        %v1734 = vmax.f32 %v1360, 0.0
        %v1735 = vmax.f32 %v1365, 0.0
        %v1736 = vmax.f32 %v1370, 0.0
        %v1737 = vmax.f32 %v1375, 0.0
        %v1738 = vmax.f32 %v1380, 0.0
        %v1739 = vmax.f32 %v1385, 0.0
        %v1740 = vmax.f32 %v1390, 0.0
        %v1741 = vmax.f32 %v1395, 0.0
        %v1742 = vmax.f32 %v1400, 0.0
        %v1743 = vmax.f32 %v1405, 0.0
        %v1744 = vmax.f32 %v1410, 0.0
        %v1745 = vmax.f32 %v1415, 0.0
        %v1746 = vmax.f32 %v1420, 0.0
        %v1747 = vmax.f32 %v1425, 0.0
        %v1748 = vmax.f32 %v1430, 0.0
        %v1749 = vmax.f32 %v1435, 0.0
        %v1750 = vmax.f32 %v1440, 0.0
        %v1751 = vmax.f32 %v1445, 0.0
        %v1752 = vmax.f32 %v1450, 0.0
        %v1753 = vmax.f32 %v1455, 0.0
        %v1754 = vmax.f32 %v1460, 0.0
        %v1755 = vmax.f32 %v1465, 0.0
        %v1756 = vmax.f32 %v1470, 0.0
        %v1757 = vmax.f32 %v1475, 0.0
        %v1758 = vmax.f32 %v1480, 0.0
        %v1759 = vmax.f32 %v1485, 0.0
        %v1760 = vmax.f32 %v1490, 0.0
        %v1761 = vmax.f32 %v1495, 0.0
        %v1762 = vmax.f32 %v1500, 0.0
        %v1763 = vmax.f32 %v1505, 0.0
        %v1764 = vmax.f32 %v1510, 0.0
        %v1765 = vmax.f32 %v1515, 0.0
        %v1766 = vmax.f32 %v1520, 0.0
        %v1767 = vmax.f32 %v1525, 0.0
        %v1768 = vmax.f32 %v1530, 0.0
        %v1769 = vmax.f32 %v1535, 0.0
        %v1770 = vmax.f32 %v1540, 0.0
        %v1771 = vmax.f32 %v1545, 0.0
        %v1772 = vmax.f32 %v1550, 0.0
        %v1773 = vmax.f32 %v1555, 0.0
        %v1774 = vmax.f32 %v1560, 0.0
        %v1775 = vmax.f32 %v1565, 0.0
        %v1776 = vmax.f32 %v1570, 0.0
        %v1777 = vmax.f32 %v1575, 0.0
        %v1778 = vmax.f32 %v1580, 0.0
        %v1779 = vmax.f32 %v1585, 0.0
        %v1780 = vmax.f32 %v1590, 0.0
        %v1781 = vmax.f32 %v1595, 0.0
        %v1782 = vmax.f32 %v1600, 0.0
        %v1783 = vmax.f32 %v1605, 0.0
        %v1784 = vmax.f32 %v1610, 0.0
        %v1785 = vmax.f32 %v1615, 0.0
        %v1786 = vmax.f32 %v1620, 0.0
        %v1787 = vmax.f32 %v1625, 0.0
        %v1788 = vmax.f32 %v1630, 0.0
        %v1789 = vmax.f32 %v1635, 0.0
        %v1790 = vmax.f32 %v1640, 0.0
        %v1791 = vmax.f32 %v1645, 0.0
        %v1792 = vmax.f32 %v1650, 0.0
        %v1793 = vmax.f32 %v1655, 0.0
        %v1794 = vmax.f32 %v1660, 0.0
        %v1795 = vmax.f32 %v1665, 0.0
        %v1796 = vld [vmem:[%s3] sm:$0xff]
        %v1797 = vld [vmem:[%s3 + $0x8] sm:$0xff]
        %v1798 = vld [vmem:[%s3 + $0x10] sm:$0xff]
        %v1799 = vld [vmem:[%s3 + $0x18] sm:$0xff]
        %v1800 = vld [vmem:[%s3 + $0x20] sm:$0xff]
        %v1801 = vld [vmem:[%s3 + $0x28] sm:$0xff]
        %v1802 = vld [vmem:[%s3 + $0x30] sm:$0xff]
        %v1803 = vld [vmem:[%s3 + $0x38] sm:$0xff]
        %v1804 = vld [vmem:[%s4] sm:$0x1]
        %v1806 = vlaneseq
        %v1807 = vshrl.u32 %v1806, 7
        %v1808 = vsub.s32 0, %v1807
        %v1809 = vrot.slane %v1804, %v1808
        %vm1811 = vcmask 523264
        %v1813 = vsel %vm1811, %v1668, 0
        %v1816 = vsel %vm1811, %v1669, 0
        %v1819 = vsel %vm1811, %v1670, 0
        %v1822 = vsel %vm1811, %v1671, 0
        %v1825 = vsel %vm1811, %v1672, 0
        %v1828 = vsel %vm1811, %v1673, 0
        %v1831 = vsel %vm1811, %v1674, 0
        %v1834 = vsel %vm1811, %v1675, 0
        %v1837 = vsel %vm1811, %v1676, 0
        %v1840 = vsel %vm1811, %v1677, 0
        %v1843 = vsel %vm1811, %v1678, 0
        %v1846 = vsel %vm1811, %v1679, 0
        %v1849 = vsel %vm1811, %v1680, 0
        %v1852 = vsel %vm1811, %v1681, 0
        %v1855 = vsel %vm1811, %v1682, 0
        %v1858 = vsel %vm1811, %v1683, 0
        %v1861 = vsel %vm1811, %v1684, 0
        %v1864 = vsel %vm1811, %v1685, 0
        %v1867 = vsel %vm1811, %v1686, 0
        %v1870 = vsel %vm1811, %v1687, 0
        %v1873 = vsel %vm1811, %v1688, 0
        %v1876 = vsel %vm1811, %v1689, 0
        %v1879 = vsel %vm1811, %v1690, 0
        %v1882 = vsel %vm1811, %v1691, 0
        %v1885 = vsel %vm1811, %v1692, 0
        %v1888 = vsel %vm1811, %v1693, 0
        %v1891 = vsel %vm1811, %v1694, 0
        %v1894 = vsel %vm1811, %v1695, 0
        %v1897 = vsel %vm1811, %v1696, 0
        %v1900 = vsel %vm1811, %v1697, 0
        %v1903 = vsel %vm1811, %v1698, 0
        %v1906 = vsel %vm1811, %v1699, 0
        %v1909 = vsel %vm1811, %v1700, 0
        %v1912 = vsel %vm1811, %v1701, 0
        %v1915 = vsel %vm1811, %v1702, 0
        %v1918 = vsel %vm1811, %v1703, 0
        %v1921 = vsel %vm1811, %v1704, 0
        %v1924 = vsel %vm1811, %v1705, 0
        %v1927 = vsel %vm1811, %v1706, 0
        %v1930 = vsel %vm1811, %v1707, 0
        %v1933 = vsel %vm1811, %v1708, 0
        %v1936 = vsel %vm1811, %v1709, 0
        %v1939 = vsel %vm1811, %v1710, 0
        %v1942 = vsel %vm1811, %v1711, 0
        %v1945 = vsel %vm1811, %v1712, 0
        %v1948 = vsel %vm1811, %v1713, 0
        %v1951 = vsel %vm1811, %v1714, 0
        %v1954 = vsel %vm1811, %v1715, 0
        %v1957 = vsel %vm1811, %v1716, 0
        %v1960 = vsel %vm1811, %v1717, 0
        %v1963 = vsel %vm1811, %v1718, 0
        %v1966 = vsel %vm1811, %v1719, 0
        %v1969 = vsel %vm1811, %v1720, 0
        %v1972 = vsel %vm1811, %v1721, 0
        %v1975 = vsel %vm1811, %v1722, 0
        %v1978 = vsel %vm1811, %v1723, 0
        %v1981 = vsel %vm1811, %v1724, 0
        %v1984 = vsel %vm1811, %v1725, 0
        %v1987 = vsel %vm1811, %v1726, 0
        %v1990 = vsel %vm1811, %v1727, 0
        %v1993 = vsel %vm1811, %v1728, 0
        %v1996 = vsel %vm1811, %v1729, 0
        %v1999 = vsel %vm1811, %v1730, 0
        %v2002 = vsel %vm1811, %v1731, 0
        %v2005 = vsel %vm1811, %v1732, 0
        %v2008 = vsel %vm1811, %v1733, 0
        %v2011 = vsel %vm1811, %v1734, 0
        %v2014 = vsel %vm1811, %v1735, 0
        %v2017 = vsel %vm1811, %v1736, 0
        %v2020 = vsel %vm1811, %v1737, 0
        %v2023 = vsel %vm1811, %v1738, 0
        %v2026 = vsel %vm1811, %v1739, 0
        %v2029 = vsel %vm1811, %v1740, 0
        %v2032 = vsel %vm1811, %v1741, 0
        %v2035 = vsel %vm1811, %v1742, 0
        %v2038 = vsel %vm1811, %v1743, 0
        %v2041 = vsel %vm1811, %v1744, 0
        %v2044 = vsel %vm1811, %v1745, 0
        %v2047 = vsel %vm1811, %v1746, 0
        %v2050 = vsel %vm1811, %v1747, 0
        %v2053 = vsel %vm1811, %v1748, 0
        %v2056 = vsel %vm1811, %v1749, 0
        %v2059 = vsel %vm1811, %v1750, 0
        %v2062 = vsel %vm1811, %v1751, 0
        %v2065 = vsel %vm1811, %v1752, 0
        %v2068 = vsel %vm1811, %v1753, 0
        %v2071 = vsel %vm1811, %v1754, 0
        %v2074 = vsel %vm1811, %v1755, 0
        %v2077 = vsel %vm1811, %v1756, 0
        %v2080 = vsel %vm1811, %v1757, 0
        %v2083 = vsel %vm1811, %v1758, 0
        %v2086 = vsel %vm1811, %v1759, 0
        %v2089 = vsel %vm1811, %v1760, 0
        %v2092 = vsel %vm1811, %v1761, 0
        %v2095 = vsel %vm1811, %v1762, 0
        %v2098 = vsel %vm1811, %v1763, 0
        %v2101 = vsel %vm1811, %v1764, 0
        %v2104 = vsel %vm1811, %v1765, 0
        %v2107 = vsel %vm1811, %v1766, 0
        %v2110 = vsel %vm1811, %v1767, 0
        %v2113 = vsel %vm1811, %v1768, 0
        %v2116 = vsel %vm1811, %v1769, 0
        %v2119 = vsel %vm1811, %v1770, 0
        %v2122 = vsel %vm1811, %v1771, 0
        %v2125 = vsel %vm1811, %v1772, 0
        %v2128 = vsel %vm1811, %v1773, 0
        %v2131 = vsel %vm1811, %v1774, 0
        %v2134 = vsel %vm1811, %v1775, 0
        %v2137 = vsel %vm1811, %v1776, 0
        %v2140 = vsel %vm1811, %v1777, 0
        %v2143 = vsel %vm1811, %v1778, 0
        %v2146 = vsel %vm1811, %v1779, 0
        %v2149 = vsel %vm1811, %v1780, 0
        %v2152 = vsel %vm1811, %v1781, 0
        %v2155 = vsel %vm1811, %v1782, 0
        %v2158 = vsel %vm1811, %v1783, 0
        %v2161 = vsel %vm1811, %v1784, 0
        %v2164 = vsel %vm1811, %v1785, 0
        %v2167 = vsel %vm1811, %v1786, 0
        %v2170 = vsel %vm1811, %v1787, 0
        %v2173 = vsel %vm1811, %v1788, 0
        %v2176 = vsel %vm1811, %v1789, 0
        %v2179 = vsel %vm1811, %v1790, 0
        %v2182 = vsel %vm1811, %v1791, 0
        %v2185 = vsel %vm1811, %v1792, 0
        %v2188 = vsel %vm1811, %v1793, 0
        %v2191 = vsel %vm1811, %v1794, 0
        %v2194 = vsel %vm1811, %v1795, 0
        %2196 = vmatprep.subr.mxu0 0.0
        %2197 = vmatpush1.msra.mxu0 %v1796
        %2198 = vmatprep.subr.mxu0 0.0
        %2199 = vmatpush1.msra.mxu0 %v1797
        %2200 = vmatprep.subr.mxu0 0.0
        %2201 = vmatpush1.msra.mxu0 %v1798
        %2202 = vmatprep.subr.mxu0 0.0
        %2203 = vmatpush1.msra.mxu0 %v1799
        %2204 = vmatprep.subr.mxu0 0.0
        %2205 = vmatpush1.msra.mxu0 %v1800
        %2206 = vmatprep.subr.mxu0 0.0
        %2207 = vmatpush1.msra.mxu0 %v1801
        %2208 = vmatprep.subr.mxu0 0.0
        %2209 = vmatpush1.msra.mxu0 %v1802
        %2210 = vmatprep.subr.mxu0 0.0
        %2211 = vmatpush1.msra.mxu0 %v1803
        %2212 = vmatprep.subr.mxu0 0.0
        %2213 = vmatpush1.msra.mxu0 0.0
        %2214 = vmatprep.subr.mxu0 0.0
        %2215 = vmatpush1.msra.mxu0 0.0
        %2216 = vmatprep.subr.mxu0 0.0
        %2217 = vmatpush1.msra.mxu0 0.0
        %2218 = vmatprep.subr.mxu0 0.0
        %2219 = vmatpush1.msra.mxu0 0.0
        %2220 = vmatprep.subr.mxu0 0.0
        %2221 = vmatpush1.msra.mxu0 0.0
        %2222 = vmatprep.subr.mxu0 0.0
        %2223 = vmatpush1.msra.mxu0 0.0
        %2224 = vmatprep.subr.mxu0 0.0
        %2225 = vmatpush1.msra.mxu0 0.0
        %2226 = vmatprep.subr.mxu0 0.0
        %2227 = vmatpush1.msra.mxu0 0.0
        %2228 = vmatprep.subr.mxu0 0.0
        %2229 = vmatpush1.msra.mxu0 0.0
        %2230 = vmatprep.subr.mxu0 0.0
        %2231 = vmatpush1.msra.mxu0 0.0
        %2232 = vmatprep.subr.mxu0 0.0
        %2233 = vmatpush1.msra.mxu0 0.0
        %2234 = vmatprep.subr.mxu0 0.0
        %2235 = vmatpush1.msra.mxu0 0.0
        %2236 = vmatprep.subr.mxu0 0.0
        %2237 = vmatpush1.msra.mxu0 0.0
        %2238 = vmatprep.subr.mxu0 0.0
        %2239 = vmatpush1.msra.mxu0 0.0
        %2240 = vmatprep.subr.mxu0 0.0
        %2241 = vmatpush1.msra.mxu0 0.0
        %2242 = vmatprep.subr.mxu0 0.0
        %2243 = vmatpush1.msra.mxu0 0.0
        %2244 = vmatprep.subr.mxu0 0.0
        %2245 = vmatpush1.msra.mxu0 0.0
        %2246 = vmatprep.subr.mxu0 0.0
        %2247 = vmatpush1.msra.mxu0 0.0
        %2248 = vmatprep.subr.mxu0 0.0
        %2249 = vmatpush1.msra.mxu0 0.0
        %2250 = vmatprep.subr.mxu0 0.0
        %2251 = vmatpush1.msra.mxu0 0.0
        %2252 = vmatprep.subr.mxu0 0.0
        %2253 = vmatpush1.msra.mxu0 0.0
        %2254 = vmatprep.subr.mxu0 0.0
        %2255 = vmatpush1.msra.mxu0 0.0
        %2256 = vmatprep.subr.mxu0 0.0
        %2257 = vmatpush1.msra.mxu0 0.0
        %2258 = vmatprep.subr.mxu0 0.0
        %2259 = vmatpush1.msra.mxu0 0.0
        %2260 = vmatprep.mubr.f32.mxu0 0.0
        %2261 = vmatmul.mubr.f32.gmra.mrb[0].mxu0 %v1813
        %v2262 = vpop.f32.mrb[0].mxu0
        %v2263 = vadd.f32 %v1809, %v2262
        %v2264 = vpop.f32.mrb[0].mxu0
        %2265 = vmatprep.mubr.f32.mxu0 0.0
        %2266 = vmatmul.mubr.f32.gmra.mrb[0].mxu0 %v1816
        %v2267 = vpop.f32.mrb[0].mxu0
        %v2268 = vadd.f32 %v1809, %v2267
        %v2269 = vpop.f32.mrb[0].mxu0
        %2270 = vmatprep.mubr.f32.mxu0 0.0
        %2271 = vmatmul.mubr.f32.gmra.mrb[0].mxu0 %v1819
        %v2272 = vpop.f32.mrb[0].mxu0
        %v2273 = vadd.f32 %v1809, %v2272
        %v2274 = vpop.f32.mrb[0].mxu0
        %2275 = vmatprep.mubr.f32.mxu0 0.0
        %2276 = vmatmul.mubr.f32.gmra.mrb[0].mxu0 %v1822
        %v2277 = vpop.f32.mrb[0].mxu0
        %v2278 = vadd.f32 %v1809, %v2277
        %v2279 = vpop.f32.mrb[0].mxu0
        %2280 = vmatprep.mubr.f32.mxu0 0.0
        %2281 = vmatmul.mubr.f32.gmra.mrb[0].mxu0 %v1825
        %v2282 = vpop.f32.mrb[0].mxu0
        %v2283 = vadd.f32 %v1809, %v2282
        %v2284 = vpop.f32.mrb[0].mxu0
        %2285 = vmatprep.mubr.f32.mxu0 0.0
        %2286 = vmatmul.mubr.f32.gmra.mrb[0].mxu0 %v1828
        %v2287 = vpop.f32.mrb[0].mxu0
        %v2288 = vadd.f32 %v1809, %v2287
        %v2289 = vpop.f32.mrb[0].mxu0
        %2290 = vmatprep.mubr.f32.mxu0 0.0
        %2291 = vmatmul.mubr.f32.gmra.mrb[0].mxu0 %v1831
        %v2292 = vpop.f32.mrb[0].mxu0
        %v2293 = vadd.f32 %v1809, %v2292
        %v2294 = vpop.f32.mrb[0].mxu0
        %2295 = vmatprep.mubr.f32.mxu0 0.0
        %2296 = vmatmul.mubr.f32.gmra.mrb[0].mxu0 %v1834
        %v2297 = vpop.f32.mrb[0].mxu0
        %v2298 = vadd.f32 %v1809, %v2297
        %v2299 = vpop.f32.mrb[0].mxu0
        %2300 = vmatprep.mubr.f32.mxu0 0.0
        %2301 = vmatmul.mubr.f32.gmra.mrb[0].mxu0 %v1837
        %v2302 = vpop.f32.mrb[0].mxu0
        %v2303 = vadd.f32 %v1809, %v2302
        %v2304 = vpop.f32.mrb[0].mxu0
        %2305 = vmatprep.mubr.f32.mxu0 0.0
        %2306 = vmatmul.mubr.f32.gmra.mrb[0].mxu0 %v1840
        %v2307 = vpop.f32.mrb[0].mxu0
        %v2308 = vadd.f32 %v1809, %v2307
        %v2309 = vpop.f32.mrb[0].mxu0
        %2310 = vmatprep.mubr.f32.mxu0 0.0
        %2311 = vmatmul.mubr.f32.gmra.mrb[0].mxu0 %v1843
        %v2312 = vpop.f32.mrb[0].mxu0
        %v2313 = vadd.f32 %v1809, %v2312
        %v2314 = vpop.f32.mrb[0].mxu0
        %2315 = vmatprep.mubr.f32.mxu0 0.0
        %2316 = vmatmul.mubr.f32.gmra.mrb[0].mxu0 %v1846
        %v2317 = vpop.f32.mrb[0].mxu0
        %v2318 = vadd.f32 %v1809, %v2317
        %v2319 = vpop.f32.mrb[0].mxu0
        %2320 = vmatprep.mubr.f32.mxu0 0.0
        %2321 = vmatmul.mubr.f32.gmra.mrb[0].mxu0 %v1849
        %v2322 = vpop.f32.mrb[0].mxu0
        %v2323 = vadd.f32 %v1809, %v2322
        %v2324 = vpop.f32.mrb[0].mxu0
        %2325 = vmatprep.mubr.f32.mxu0 0.0
        %2326 = vmatmul.mubr.f32.gmra.mrb[0].mxu0 %v1852
        %v2327 = vpop.f32.mrb[0].mxu0
        %v2328 = vadd.f32 %v1809, %v2327
        %v2329 = vpop.f32.mrb[0].mxu0
        %2330 = vmatprep.mubr.f32.mxu0 0.0
        %2331 = vmatmul.mubr.f32.gmra.mrb[0].mxu0 %v1855
        %v2332 = vpop.f32.mrb[0].mxu0
        %v2333 = vadd.f32 %v1809, %v2332
        %v2334 = vpop.f32.mrb[0].mxu0
        %2335 = vmatprep.mubr.f32.mxu0 0.0
        %2336 = vmatmul.mubr.f32.gmra.mrb[0].mxu0 %v1858
        %v2337 = vpop.f32.mrb[0].mxu0
        %v2338 = vadd.f32 %v1809, %v2337
        %v2339 = vpop.f32.mrb[0].mxu0
        %2340 = vmatprep.mubr.f32.mxu0 0.0
        %2341 = vmatmul.mubr.f32.gmra.mrb[0].mxu0 %v1861
        %v2342 = vpop.f32.mrb[0].mxu0
        %v2343 = vadd.f32 %v1809, %v2342
        %v2344 = vpop.f32.mrb[0].mxu0
        %2345 = vmatprep.mubr.f32.mxu0 0.0
        %2346 = vmatmul.mubr.f32.gmra.mrb[0].mxu0 %v1864
        %v2347 = vpop.f32.mrb[0].mxu0
        %v2348 = vadd.f32 %v1809, %v2347
        %v2349 = vpop.f32.mrb[0].mxu0
        %2350 = vmatprep.mubr.f32.mxu0 0.0
        %2351 = vmatmul.mubr.f32.gmra.mrb[0].mxu0 %v1867
        %v2352 = vpop.f32.mrb[0].mxu0
        %v2353 = vadd.f32 %v1809, %v2352
        %v2354 = vpop.f32.mrb[0].mxu0
        %2355 = vmatprep.mubr.f32.mxu0 0.0
        %2356 = vmatmul.mubr.f32.gmra.mrb[0].mxu0 %v1870
        %v2357 = vpop.f32.mrb[0].mxu0
        %v2358 = vadd.f32 %v1809, %v2357
        %v2359 = vpop.f32.mrb[0].mxu0
        %2360 = vmatprep.mubr.f32.mxu0 0.0
        %2361 = vmatmul.mubr.f32.gmra.mrb[0].mxu0 %v1873
        %v2362 = vpop.f32.mrb[0].mxu0
        %v2363 = vadd.f32 %v1809, %v2362
        %v2364 = vpop.f32.mrb[0].mxu0
        %2365 = vmatprep.mubr.f32.mxu0 0.0
        %2366 = vmatmul.mubr.f32.gmra.mrb[0].mxu0 %v1876
        %v2367 = vpop.f32.mrb[0].mxu0
        %v2368 = vadd.f32 %v1809, %v2367
        %v2369 = vpop.f32.mrb[0].mxu0
        %2370 = vmatprep.mubr.f32.mxu0 0.0
        %2371 = vmatmul.mubr.f32.gmra.mrb[0].mxu0 %v1879
        %v2372 = vpop.f32.mrb[0].mxu0
        %v2373 = vadd.f32 %v1809, %v2372
        %v2374 = vpop.f32.mrb[0].mxu0
        %2375 = vmatprep.mubr.f32.mxu0 0.0
        %2376 = vmatmul.mubr.f32.gmra.mrb[0].mxu0 %v1882
        %v2377 = vpop.f32.mrb[0].mxu0
        %v2378 = vadd.f32 %v1809, %v2377
        %v2379 = vpop.f32.mrb[0].mxu0
        %2380 = vmatprep.mubr.f32.mxu0 0.0
        %2381 = vmatmul.mubr.f32.gmra.mrb[0].mxu0 %v1885
        %v2382 = vpop.f32.mrb[0].mxu0
        %v2383 = vadd.f32 %v1809, %v2382
        %v2384 = vpop.f32.mrb[0].mxu0
        %2385 = vmatprep.mubr.f32.mxu0 0.0
        %2386 = vmatmul.mubr.f32.gmra.mrb[0].mxu0 %v1888
        %v2387 = vpop.f32.mrb[0].mxu0
        %v2388 = vadd.f32 %v1809, %v2387
        %v2389 = vpop.f32.mrb[0].mxu0
        %2390 = vmatprep.mubr.f32.mxu0 0.0
        %2391 = vmatmul.mubr.f32.gmra.mrb[0].mxu0 %v1891
        %v2392 = vpop.f32.mrb[0].mxu0
        %v2393 = vadd.f32 %v1809, %v2392
        %v2394 = vpop.f32.mrb[0].mxu0
        %2395 = vmatprep.mubr.f32.mxu0 0.0
        %2396 = vmatmul.mubr.f32.gmra.mrb[0].mxu0 %v1894
        %v2397 = vpop.f32.mrb[0].mxu0
        %v2398 = vadd.f32 %v1809, %v2397
        %v2399 = vpop.f32.mrb[0].mxu0
        %2400 = vmatprep.mubr.f32.mxu0 0.0
        %2401 = vmatmul.mubr.f32.gmra.mrb[0].mxu0 %v1897
        %v2402 = vpop.f32.mrb[0].mxu0
        %v2403 = vadd.f32 %v1809, %v2402
        %v2404 = vpop.f32.mrb[0].mxu0
        %2405 = vmatprep.mubr.f32.mxu0 0.0
        %2406 = vmatmul.mubr.f32.gmra.mrb[0].mxu0 %v1900
        %v2407 = vpop.f32.mrb[0].mxu0
        %v2408 = vadd.f32 %v1809, %v2407
        %v2409 = vpop.f32.mrb[0].mxu0
        %2410 = vmatprep.mubr.f32.mxu0 0.0
        %2411 = vmatmul.mubr.f32.gmra.mrb[0].mxu0 %v1903
        %v2412 = vpop.f32.mrb[0].mxu0
        %v2413 = vadd.f32 %v1809, %v2412
        %v2414 = vpop.f32.mrb[0].mxu0
        %2415 = vmatprep.mubr.f32.mxu0 0.0
        %2416 = vmatmul.mubr.f32.gmra.mrb[0].mxu0 %v1906
        %v2417 = vpop.f32.mrb[0].mxu0
        %v2418 = vadd.f32 %v1809, %v2417
        %v2419 = vpop.f32.mrb[0].mxu0
        %2420 = vmatprep.mubr.f32.mxu0 0.0
        %2421 = vmatmul.mubr.f32.gmra.mrb[0].mxu0 %v1909
        %v2422 = vpop.f32.mrb[0].mxu0
        %v2423 = vadd.f32 %v1809, %v2422
        %v2424 = vpop.f32.mrb[0].mxu0
        %2425 = vmatprep.mubr.f32.mxu0 0.0
        %2426 = vmatmul.mubr.f32.gmra.mrb[0].mxu0 %v1912
        %v2427 = vpop.f32.mrb[0].mxu0
        %v2428 = vadd.f32 %v1809, %v2427
        %v2429 = vpop.f32.mrb[0].mxu0
        %2430 = vmatprep.mubr.f32.mxu0 0.0
        %2431 = vmatmul.mubr.f32.gmra.mrb[0].mxu0 %v1915
        %v2432 = vpop.f32.mrb[0].mxu0
        %v2433 = vadd.f32 %v1809, %v2432
        %v2434 = vpop.f32.mrb[0].mxu0
        %2435 = vmatprep.mubr.f32.mxu0 0.0
        %2436 = vmatmul.mubr.f32.gmra.mrb[0].mxu0 %v1918
        %v2437 = vpop.f32.mrb[0].mxu0
        %v2438 = vadd.f32 %v1809, %v2437
        %v2439 = vpop.f32.mrb[0].mxu0
        %2440 = vmatprep.mubr.f32.mxu0 0.0
        %2441 = vmatmul.mubr.f32.gmra.mrb[0].mxu0 %v1921
        %v2442 = vpop.f32.mrb[0].mxu0
        %v2443 = vadd.f32 %v1809, %v2442
        %v2444 = vpop.f32.mrb[0].mxu0
        %2445 = vmatprep.mubr.f32.mxu0 0.0
        %2446 = vmatmul.mubr.f32.gmra.mrb[0].mxu0 %v1924
        %v2447 = vpop.f32.mrb[0].mxu0
        %v2448 = vadd.f32 %v1809, %v2447
        %v2449 = vpop.f32.mrb[0].mxu0
        %2450 = vmatprep.mubr.f32.mxu0 0.0
        %2451 = vmatmul.mubr.f32.gmra.mrb[0].mxu0 %v1927
        %v2452 = vpop.f32.mrb[0].mxu0
        %v2453 = vadd.f32 %v1809, %v2452
        %v2454 = vpop.f32.mrb[0].mxu0
        %2455 = vmatprep.mubr.f32.mxu0 0.0
        %2456 = vmatmul.mubr.f32.gmra.mrb[0].mxu0 %v1930
        %v2457 = vpop.f32.mrb[0].mxu0
        %v2458 = vadd.f32 %v1809, %v2457
        %v2459 = vpop.f32.mrb[0].mxu0
        %2460 = vmatprep.mubr.f32.mxu0 0.0
        %2461 = vmatmul.mubr.f32.gmra.mrb[0].mxu0 %v1933
        %v2462 = vpop.f32.mrb[0].mxu0
        %v2463 = vadd.f32 %v1809, %v2462
        %v2464 = vpop.f32.mrb[0].mxu0
        %2465 = vmatprep.mubr.f32.mxu0 0.0
        %2466 = vmatmul.mubr.f32.gmra.mrb[0].mxu0 %v1936
        %v2467 = vpop.f32.mrb[0].mxu0
        %v2468 = vadd.f32 %v1809, %v2467
        %v2469 = vpop.f32.mrb[0].mxu0
        %2470 = vmatprep.mubr.f32.mxu0 0.0
        %2471 = vmatmul.mubr.f32.gmra.mrb[0].mxu0 %v1939
        %v2472 = vpop.f32.mrb[0].mxu0
        %v2473 = vadd.f32 %v1809, %v2472
        %v2474 = vpop.f32.mrb[0].mxu0
        %2475 = vmatprep.mubr.f32.mxu0 0.0
        %2476 = vmatmul.mubr.f32.gmra.mrb[0].mxu0 %v1942
        %v2477 = vpop.f32.mrb[0].mxu0
        %v2478 = vadd.f32 %v1809, %v2477
        %v2479 = vpop.f32.mrb[0].mxu0
        %2480 = vmatprep.mubr.f32.mxu0 0.0
        %2481 = vmatmul.mubr.f32.gmra.mrb[0].mxu0 %v1945
        %v2482 = vpop.f32.mrb[0].mxu0
        %v2483 = vadd.f32 %v1809, %v2482
        %v2484 = vpop.f32.mrb[0].mxu0
        %2485 = vmatprep.mubr.f32.mxu0 0.0
        %2486 = vmatmul.mubr.f32.gmra.mrb[0].mxu0 %v1948
        %v2487 = vpop.f32.mrb[0].mxu0
        %v2488 = vadd.f32 %v1809, %v2487
        %v2489 = vpop.f32.mrb[0].mxu0
        %2490 = vmatprep.mubr.f32.mxu0 0.0
        %2491 = vmatmul.mubr.f32.gmra.mrb[0].mxu0 %v1951
        %v2492 = vpop.f32.mrb[0].mxu0
        %v2493 = vadd.f32 %v1809, %v2492
        %v2494 = vpop.f32.mrb[0].mxu0
        %2495 = vmatprep.mubr.f32.mxu0 0.0
        %2496 = vmatmul.mubr.f32.gmra.mrb[0].mxu0 %v1954
        %v2497 = vpop.f32.mrb[0].mxu0
        %v2498 = vadd.f32 %v1809, %v2497
        %v2499 = vpop.f32.mrb[0].mxu0
        %2500 = vmatprep.mubr.f32.mxu0 0.0
        %2501 = vmatmul.mubr.f32.gmra.mrb[0].mxu0 %v1957
        %v2502 = vpop.f32.mrb[0].mxu0
        %v2503 = vadd.f32 %v1809, %v2502
        %v2504 = vpop.f32.mrb[0].mxu0
        %2505 = vmatprep.mubr.f32.mxu0 0.0
        %2506 = vmatmul.mubr.f32.gmra.mrb[0].mxu0 %v1960
        %v2507 = vpop.f32.mrb[0].mxu0
        %v2508 = vadd.f32 %v1809, %v2507
        %v2509 = vpop.f32.mrb[0].mxu0
        %2510 = vmatprep.mubr.f32.mxu0 0.0
        %2511 = vmatmul.mubr.f32.gmra.mrb[0].mxu0 %v1963
        %v2512 = vpop.f32.mrb[0].mxu0
        %v2513 = vadd.f32 %v1809, %v2512
        %v2514 = vpop.f32.mrb[0].mxu0
        %2515 = vmatprep.mubr.f32.mxu0 0.0
        %2516 = vmatmul.mubr.f32.gmra.mrb[0].mxu0 %v1966
        %v2517 = vpop.f32.mrb[0].mxu0
        %v2518 = vadd.f32 %v1809, %v2517
        %v2519 = vpop.f32.mrb[0].mxu0
        %2520 = vmatprep.mubr.f32.mxu0 0.0
        %2521 = vmatmul.mubr.f32.gmra.mrb[0].mxu0 %v1969
        %v2522 = vpop.f32.mrb[0].mxu0
        %v2523 = vadd.f32 %v1809, %v2522
        %v2524 = vpop.f32.mrb[0].mxu0
        %2525 = vmatprep.mubr.f32.mxu0 0.0
        %2526 = vmatmul.mubr.f32.gmra.mrb[0].mxu0 %v1972
        %v2527 = vpop.f32.mrb[0].mxu0
        %v2528 = vadd.f32 %v1809, %v2527
        %v2529 = vpop.f32.mrb[0].mxu0
        %2530 = vmatprep.mubr.f32.mxu0 0.0
        %2531 = vmatmul.mubr.f32.gmra.mrb[0].mxu0 %v1975
        %v2532 = vpop.f32.mrb[0].mxu0
        %v2533 = vadd.f32 %v1809, %v2532
        %v2534 = vpop.f32.mrb[0].mxu0
        %2535 = vmatprep.mubr.f32.mxu0 0.0
        %2536 = vmatmul.mubr.f32.gmra.mrb[0].mxu0 %v1978
        %v2537 = vpop.f32.mrb[0].mxu0
        %v2538 = vadd.f32 %v1809, %v2537
        %v2539 = vpop.f32.mrb[0].mxu0
        %2540 = vmatprep.mubr.f32.mxu0 0.0
        %2541 = vmatmul.mubr.f32.gmra.mrb[0].mxu0 %v1981
        %v2542 = vpop.f32.mrb[0].mxu0
        %v2543 = vadd.f32 %v1809, %v2542
        %v2544 = vpop.f32.mrb[0].mxu0
        %2545 = vmatprep.mubr.f32.mxu0 0.0
        %2546 = vmatmul.mubr.f32.gmra.mrb[0].mxu0 %v1984
        %v2547 = vpop.f32.mrb[0].mxu0
        %v2548 = vadd.f32 %v1809, %v2547
        %v2549 = vpop.f32.mrb[0].mxu0
        %2550 = vmatprep.mubr.f32.mxu0 0.0
        %2551 = vmatmul.mubr.f32.gmra.mrb[0].mxu0 %v1987
        %v2552 = vpop.f32.mrb[0].mxu0
        %v2553 = vadd.f32 %v1809, %v2552
        %v2554 = vpop.f32.mrb[0].mxu0
        %2555 = vmatprep.mubr.f32.mxu0 0.0
        %2556 = vmatmul.mubr.f32.gmra.mrb[0].mxu0 %v1990
        %v2557 = vpop.f32.mrb[0].mxu0
        %v2558 = vadd.f32 %v1809, %v2557
        %v2559 = vpop.f32.mrb[0].mxu0
        %2560 = vmatprep.mubr.f32.mxu0 0.0
        %2561 = vmatmul.mubr.f32.gmra.mrb[0].mxu0 %v1993
        %v2562 = vpop.f32.mrb[0].mxu0
        %v2563 = vadd.f32 %v1809, %v2562
        %v2564 = vpop.f32.mrb[0].mxu0
        %2565 = vmatprep.mubr.f32.mxu0 0.0
        %2566 = vmatmul.mubr.f32.gmra.mrb[0].mxu0 %v1996
        %v2567 = vpop.f32.mrb[0].mxu0
        %v2568 = vadd.f32 %v1809, %v2567
        %v2569 = vpop.f32.mrb[0].mxu0
        %2570 = vmatprep.mubr.f32.mxu0 0.0
        %2571 = vmatmul.mubr.f32.gmra.mrb[0].mxu0 %v1999
        %v2572 = vpop.f32.mrb[0].mxu0
        %v2573 = vadd.f32 %v1809, %v2572
        %v2574 = vpop.f32.mrb[0].mxu0
        %2575 = vmatprep.mubr.f32.mxu0 0.0
        %2576 = vmatmul.mubr.f32.gmra.mrb[0].mxu0 %v2002
        %v2577 = vpop.f32.mrb[0].mxu0
        %v2578 = vadd.f32 %v1809, %v2577
        %v2579 = vpop.f32.mrb[0].mxu0
        %2580 = vmatprep.mubr.f32.mxu0 0.0
        %2581 = vmatmul.mubr.f32.gmra.mrb[0].mxu0 %v2005
        %v2582 = vpop.f32.mrb[0].mxu0
        %v2583 = vadd.f32 %v1809, %v2582
        %v2584 = vpop.f32.mrb[0].mxu0
        %2585 = vmatprep.mubr.f32.mxu0 0.0
        %2586 = vmatmul.mubr.f32.gmra.mrb[0].mxu0 %v2008
        %v2587 = vpop.f32.mrb[0].mxu0
        %v2588 = vadd.f32 %v1809, %v2587
        %v2589 = vpop.f32.mrb[0].mxu0
        %2590 = vmatprep.mubr.f32.mxu0 0.0
        %2591 = vmatmul.mubr.f32.gmra.mrb[0].mxu0 %v2011
        %v2592 = vpop.f32.mrb[0].mxu0
        %v2593 = vadd.f32 %v1809, %v2592
        %v2594 = vpop.f32.mrb[0].mxu0
        %2595 = vmatprep.mubr.f32.mxu0 0.0
        %2596 = vmatmul.mubr.f32.gmra.mrb[0].mxu0 %v2014
        %v2597 = vpop.f32.mrb[0].mxu0
        %v2598 = vadd.f32 %v1809, %v2597
        %v2599 = vpop.f32.mrb[0].mxu0
        %2600 = vmatprep.mubr.f32.mxu0 0.0
        %2601 = vmatmul.mubr.f32.gmra.mrb[0].mxu0 %v2017
        %v2602 = vpop.f32.mrb[0].mxu0
        %v2603 = vadd.f32 %v1809, %v2602
        %v2604 = vpop.f32.mrb[0].mxu0
        %2605 = vmatprep.mubr.f32.mxu0 0.0
        %2606 = vmatmul.mubr.f32.gmra.mrb[0].mxu0 %v2020
        %v2607 = vpop.f32.mrb[0].mxu0
        %v2608 = vadd.f32 %v1809, %v2607
        %v2609 = vpop.f32.mrb[0].mxu0
        %2610 = vmatprep.mubr.f32.mxu0 0.0
        %2611 = vmatmul.mubr.f32.gmra.mrb[0].mxu0 %v2023
        %v2612 = vpop.f32.mrb[0].mxu0
        %v2613 = vadd.f32 %v1809, %v2612
        %v2614 = vpop.f32.mrb[0].mxu0
        %2615 = vmatprep.mubr.f32.mxu0 0.0
        %2616 = vmatmul.mubr.f32.gmra.mrb[0].mxu0 %v2026
        %v2617 = vpop.f32.mrb[0].mxu0
        %v2618 = vadd.f32 %v1809, %v2617
        %v2619 = vpop.f32.mrb[0].mxu0
        %2620 = vmatprep.mubr.f32.mxu0 0.0
        %2621 = vmatmul.mubr.f32.gmra.mrb[0].mxu0 %v2029
        %v2622 = vpop.f32.mrb[0].mxu0
        %v2623 = vadd.f32 %v1809, %v2622
        %v2624 = vpop.f32.mrb[0].mxu0
        %2625 = vmatprep.mubr.f32.mxu0 0.0
        %2626 = vmatmul.mubr.f32.gmra.mrb[0].mxu0 %v2032
        %v2627 = vpop.f32.mrb[0].mxu0
        %v2628 = vadd.f32 %v1809, %v2627
        %v2629 = vpop.f32.mrb[0].mxu0
        %2630 = vmatprep.mubr.f32.mxu0 0.0
        %2631 = vmatmul.mubr.f32.gmra.mrb[0].mxu0 %v2035
        %v2632 = vpop.f32.mrb[0].mxu0
        %v2633 = vadd.f32 %v1809, %v2632
        %v2634 = vpop.f32.mrb[0].mxu0
        %2635 = vmatprep.mubr.f32.mxu0 0.0
        %2636 = vmatmul.mubr.f32.gmra.mrb[0].mxu0 %v2038
        %v2637 = vpop.f32.mrb[0].mxu0
        %v2638 = vadd.f32 %v1809, %v2637
        %v2639 = vpop.f32.mrb[0].mxu0
        %2640 = vmatprep.mubr.f32.mxu0 0.0
        %2641 = vmatmul.mubr.f32.gmra.mrb[0].mxu0 %v2041
        %v2642 = vpop.f32.mrb[0].mxu0
        %v2643 = vadd.f32 %v1809, %v2642
        %v2644 = vpop.f32.mrb[0].mxu0
        %2645 = vmatprep.mubr.f32.mxu0 0.0
        %2646 = vmatmul.mubr.f32.gmra.mrb[0].mxu0 %v2044
        %v2647 = vpop.f32.mrb[0].mxu0
        %v2648 = vadd.f32 %v1809, %v2647
        %v2649 = vpop.f32.mrb[0].mxu0
        %2650 = vmatprep.mubr.f32.mxu0 0.0
        %2651 = vmatmul.mubr.f32.gmra.mrb[0].mxu0 %v2047
        %v2652 = vpop.f32.mrb[0].mxu0
        %v2653 = vadd.f32 %v1809, %v2652
        %v2654 = vpop.f32.mrb[0].mxu0
        %2655 = vmatprep.mubr.f32.mxu0 0.0
        %2656 = vmatmul.mubr.f32.gmra.mrb[0].mxu0 %v2050
        %v2657 = vpop.f32.mrb[0].mxu0
        %v2658 = vadd.f32 %v1809, %v2657
        %v2659 = vpop.f32.mrb[0].mxu0
        %2660 = vmatprep.mubr.f32.mxu0 0.0
        %2661 = vmatmul.mubr.f32.gmra.mrb[0].mxu0 %v2053
        %v2662 = vpop.f32.mrb[0].mxu0
        %v2663 = vadd.f32 %v1809, %v2662
        %v2664 = vpop.f32.mrb[0].mxu0
        %2665 = vmatprep.mubr.f32.mxu0 0.0
        %2666 = vmatmul.mubr.f32.gmra.mrb[0].mxu0 %v2056
        %v2667 = vpop.f32.mrb[0].mxu0
        %v2668 = vadd.f32 %v1809, %v2667
        %v2669 = vpop.f32.mrb[0].mxu0
        %2670 = vmatprep.mubr.f32.mxu0 0.0
        %2671 = vmatmul.mubr.f32.gmra.mrb[0].mxu0 %v2059
        %v2672 = vpop.f32.mrb[0].mxu0
        %v2673 = vadd.f32 %v1809, %v2672
        %v2674 = vpop.f32.mrb[0].mxu0
        %2675 = vmatprep.mubr.f32.mxu0 0.0
        %2676 = vmatmul.mubr.f32.gmra.mrb[0].mxu0 %v2062
        %v2677 = vpop.f32.mrb[0].mxu0
        %v2678 = vadd.f32 %v1809, %v2677
        %v2679 = vpop.f32.mrb[0].mxu0
        %2680 = vmatprep.mubr.f32.mxu0 0.0
        %2681 = vmatmul.mubr.f32.gmra.mrb[0].mxu0 %v2065
        %v2682 = vpop.f32.mrb[0].mxu0
        %v2683 = vadd.f32 %v1809, %v2682
        %v2684 = vpop.f32.mrb[0].mxu0
        %2685 = vmatprep.mubr.f32.mxu0 0.0
        %2686 = vmatmul.mubr.f32.gmra.mrb[0].mxu0 %v2068
        %v2687 = vpop.f32.mrb[0].mxu0
        %v2688 = vadd.f32 %v1809, %v2687
        %v2689 = vpop.f32.mrb[0].mxu0
        %2690 = vmatprep.mubr.f32.mxu0 0.0
        %2691 = vmatmul.mubr.f32.gmra.mrb[0].mxu0 %v2071
        %v2692 = vpop.f32.mrb[0].mxu0
        %v2693 = vadd.f32 %v1809, %v2692
        %v2694 = vpop.f32.mrb[0].mxu0
        %2695 = vmatprep.mubr.f32.mxu0 0.0
        %2696 = vmatmul.mubr.f32.gmra.mrb[0].mxu0 %v2074
        %v2697 = vpop.f32.mrb[0].mxu0
        %v2698 = vadd.f32 %v1809, %v2697
        %v2699 = vpop.f32.mrb[0].mxu0
        %2700 = vmatprep.mubr.f32.mxu0 0.0
        %2701 = vmatmul.mubr.f32.gmra.mrb[0].mxu0 %v2077
        %v2702 = vpop.f32.mrb[0].mxu0
        %v2703 = vadd.f32 %v1809, %v2702
        %v2704 = vpop.f32.mrb[0].mxu0
        %2705 = vmatprep.mubr.f32.mxu0 0.0
        %2706 = vmatmul.mubr.f32.gmra.mrb[0].mxu0 %v2080
        %v2707 = vpop.f32.mrb[0].mxu0
        %v2708 = vadd.f32 %v1809, %v2707
        %v2709 = vpop.f32.mrb[0].mxu0
        %2710 = vmatprep.mubr.f32.mxu0 0.0
        %2711 = vmatmul.mubr.f32.gmra.mrb[0].mxu0 %v2083
        %v2712 = vpop.f32.mrb[0].mxu0
        %v2713 = vadd.f32 %v1809, %v2712
        %v2714 = vpop.f32.mrb[0].mxu0
        %2715 = vmatprep.mubr.f32.mxu0 0.0
        %2716 = vmatmul.mubr.f32.gmra.mrb[0].mxu0 %v2086
        %v2717 = vpop.f32.mrb[0].mxu0
        %v2718 = vadd.f32 %v1809, %v2717
        %v2719 = vpop.f32.mrb[0].mxu0
        %2720 = vmatprep.mubr.f32.mxu0 0.0
        %2721 = vmatmul.mubr.f32.gmra.mrb[0].mxu0 %v2089
        %v2722 = vpop.f32.mrb[0].mxu0
        %v2723 = vadd.f32 %v1809, %v2722
        %v2724 = vpop.f32.mrb[0].mxu0
        %2725 = vmatprep.mubr.f32.mxu0 0.0
        %2726 = vmatmul.mubr.f32.gmra.mrb[0].mxu0 %v2092
        %v2727 = vpop.f32.mrb[0].mxu0
        %v2728 = vadd.f32 %v1809, %v2727
        %v2729 = vpop.f32.mrb[0].mxu0
        %2730 = vmatprep.mubr.f32.mxu0 0.0
        %2731 = vmatmul.mubr.f32.gmra.mrb[0].mxu0 %v2095
        %v2732 = vpop.f32.mrb[0].mxu0
        %v2733 = vadd.f32 %v1809, %v2732
        %v2734 = vpop.f32.mrb[0].mxu0
        %2735 = vmatprep.mubr.f32.mxu0 0.0
        %2736 = vmatmul.mubr.f32.gmra.mrb[0].mxu0 %v2098
        %v2737 = vpop.f32.mrb[0].mxu0
        %v2738 = vadd.f32 %v1809, %v2737
        %v2739 = vpop.f32.mrb[0].mxu0
        %2740 = vmatprep.mubr.f32.mxu0 0.0
        %2741 = vmatmul.mubr.f32.gmra.mrb[0].mxu0 %v2101
        %v2742 = vpop.f32.mrb[0].mxu0
        %v2743 = vadd.f32 %v1809, %v2742
        %v2744 = vpop.f32.mrb[0].mxu0
        %2745 = vmatprep.mubr.f32.mxu0 0.0
        %2746 = vmatmul.mubr.f32.gmra.mrb[0].mxu0 %v2104
        %v2747 = vpop.f32.mrb[0].mxu0
        %v2748 = vadd.f32 %v1809, %v2747
        %v2749 = vpop.f32.mrb[0].mxu0
        %2750 = vmatprep.mubr.f32.mxu0 0.0
        %2751 = vmatmul.mubr.f32.gmra.mrb[0].mxu0 %v2107
        %v2752 = vpop.f32.mrb[0].mxu0
        %v2753 = vadd.f32 %v1809, %v2752
        %v2754 = vpop.f32.mrb[0].mxu0
        %2755 = vmatprep.mubr.f32.mxu0 0.0
        %2756 = vmatmul.mubr.f32.gmra.mrb[0].mxu0 %v2110
        %v2757 = vpop.f32.mrb[0].mxu0
        %v2758 = vadd.f32 %v1809, %v2757
        %v2759 = vpop.f32.mrb[0].mxu0
        %2760 = vmatprep.mubr.f32.mxu0 0.0
        %2761 = vmatmul.mubr.f32.gmra.mrb[0].mxu0 %v2113
        %v2762 = vpop.f32.mrb[0].mxu0
        %v2763 = vadd.f32 %v1809, %v2762
        %v2764 = vpop.f32.mrb[0].mxu0
        %2765 = vmatprep.mubr.f32.mxu0 0.0
        %2766 = vmatmul.mubr.f32.gmra.mrb[0].mxu0 %v2116
        %v2767 = vpop.f32.mrb[0].mxu0
        %v2768 = vadd.f32 %v1809, %v2767
        %v2769 = vpop.f32.mrb[0].mxu0
        %2770 = vmatprep.mubr.f32.mxu0 0.0
        %2771 = vmatmul.mubr.f32.gmra.mrb[0].mxu0 %v2119
        %v2772 = vpop.f32.mrb[0].mxu0
        %v2773 = vadd.f32 %v1809, %v2772
        %v2774 = vpop.f32.mrb[0].mxu0
        %2775 = vmatprep.mubr.f32.mxu0 0.0
        %2776 = vmatmul.mubr.f32.gmra.mrb[0].mxu0 %v2122
        %v2777 = vpop.f32.mrb[0].mxu0
        %v2778 = vadd.f32 %v1809, %v2777
        %v2779 = vpop.f32.mrb[0].mxu0
        %2780 = vmatprep.mubr.f32.mxu0 0.0
        %2781 = vmatmul.mubr.f32.gmra.mrb[0].mxu0 %v2125
        %v2782 = vpop.f32.mrb[0].mxu0
        %v2783 = vadd.f32 %v1809, %v2782
        %v2784 = vpop.f32.mrb[0].mxu0
        %2785 = vmatprep.mubr.f32.mxu0 0.0
        %2786 = vmatmul.mubr.f32.gmra.mrb[0].mxu0 %v2128
        %v2787 = vpop.f32.mrb[0].mxu0
        %v2788 = vadd.f32 %v1809, %v2787
        %v2789 = vpop.f32.mrb[0].mxu0
        %2790 = vmatprep.mubr.f32.mxu0 0.0
        %2791 = vmatmul.mubr.f32.gmra.mrb[0].mxu0 %v2131
        %v2792 = vpop.f32.mrb[0].mxu0
        %v2793 = vadd.f32 %v1809, %v2792
        %v2794 = vpop.f32.mrb[0].mxu0
        %2795 = vmatprep.mubr.f32.mxu0 0.0
        %2796 = vmatmul.mubr.f32.gmra.mrb[0].mxu0 %v2134
        %v2797 = vpop.f32.mrb[0].mxu0
        %v2798 = vadd.f32 %v1809, %v2797
        %v2799 = vpop.f32.mrb[0].mxu0
        %2800 = vmatprep.mubr.f32.mxu0 0.0
        %2801 = vmatmul.mubr.f32.gmra.mrb[0].mxu0 %v2137
        %v2802 = vpop.f32.mrb[0].mxu0
        %v2803 = vadd.f32 %v1809, %v2802
        %v2804 = vpop.f32.mrb[0].mxu0
        %2805 = vmatprep.mubr.f32.mxu0 0.0
        %2806 = vmatmul.mubr.f32.gmra.mrb[0].mxu0 %v2140
        %v2807 = vpop.f32.mrb[0].mxu0
        %v2808 = vadd.f32 %v1809, %v2807
        %v2809 = vpop.f32.mrb[0].mxu0
        %2810 = vmatprep.mubr.f32.mxu0 0.0
        %2811 = vmatmul.mubr.f32.gmra.mrb[0].mxu0 %v2143
        %v2812 = vpop.f32.mrb[0].mxu0
        %v2813 = vadd.f32 %v1809, %v2812
        %v2814 = vpop.f32.mrb[0].mxu0
        %2815 = vmatprep.mubr.f32.mxu0 0.0
        %2816 = vmatmul.mubr.f32.gmra.mrb[0].mxu0 %v2146
        %v2817 = vpop.f32.mrb[0].mxu0
        %v2818 = vadd.f32 %v1809, %v2817
        %v2819 = vpop.f32.mrb[0].mxu0
        %2820 = vmatprep.mubr.f32.mxu0 0.0
        %2821 = vmatmul.mubr.f32.gmra.mrb[0].mxu0 %v2149
        %v2822 = vpop.f32.mrb[0].mxu0
        %v2823 = vadd.f32 %v1809, %v2822
        %v2824 = vpop.f32.mrb[0].mxu0
        %2825 = vmatprep.mubr.f32.mxu0 0.0
        %2826 = vmatmul.mubr.f32.gmra.mrb[0].mxu0 %v2152
        %v2827 = vpop.f32.mrb[0].mxu0
        %v2828 = vadd.f32 %v1809, %v2827
        %v2829 = vpop.f32.mrb[0].mxu0
        %2830 = vmatprep.mubr.f32.mxu0 0.0
        %2831 = vmatmul.mubr.f32.gmra.mrb[0].mxu0 %v2155
        %v2832 = vpop.f32.mrb[0].mxu0
        %v2833 = vadd.f32 %v1809, %v2832
        %v2834 = vpop.f32.mrb[0].mxu0
        %2835 = vmatprep.mubr.f32.mxu0 0.0
        %2836 = vmatmul.mubr.f32.gmra.mrb[0].mxu0 %v2158
        %v2837 = vpop.f32.mrb[0].mxu0
        %v2838 = vadd.f32 %v1809, %v2837
        %v2839 = vpop.f32.mrb[0].mxu0
        %2840 = vmatprep.mubr.f32.mxu0 0.0
        %2841 = vmatmul.mubr.f32.gmra.mrb[0].mxu0 %v2161
        %v2842 = vpop.f32.mrb[0].mxu0
        %v2843 = vadd.f32 %v1809, %v2842
        %v2844 = vpop.f32.mrb[0].mxu0
        %2845 = vmatprep.mubr.f32.mxu0 0.0
        %2846 = vmatmul.mubr.f32.gmra.mrb[0].mxu0 %v2164
        %v2847 = vpop.f32.mrb[0].mxu0
        %v2848 = vadd.f32 %v1809, %v2847
        %v2849 = vpop.f32.mrb[0].mxu0
        %2850 = vmatprep.mubr.f32.mxu0 0.0
        %2851 = vmatmul.mubr.f32.gmra.mrb[0].mxu0 %v2167
        %v2852 = vpop.f32.mrb[0].mxu0
        %v2853 = vadd.f32 %v1809, %v2852
        %v2854 = vpop.f32.mrb[0].mxu0
        %2855 = vmatprep.mubr.f32.mxu0 0.0
        %2856 = vmatmul.mubr.f32.gmra.mrb[0].mxu0 %v2170
        %v2857 = vpop.f32.mrb[0].mxu0
        %v2858 = vadd.f32 %v1809, %v2857
        %v2859 = vpop.f32.mrb[0].mxu0
        %2860 = vmatprep.mubr.f32.mxu0 0.0
        %2861 = vmatmul.mubr.f32.gmra.mrb[0].mxu0 %v2173
        %v2862 = vpop.f32.mrb[0].mxu0
        %v2863 = vadd.f32 %v1809, %v2862
        %v2864 = vpop.f32.mrb[0].mxu0
        %2865 = vmatprep.mubr.f32.mxu0 0.0
        %2866 = vmatmul.mubr.f32.gmra.mrb[0].mxu0 %v2176
        %v2867 = vpop.f32.mrb[0].mxu0
        %v2868 = vadd.f32 %v1809, %v2867
        %v2869 = vpop.f32.mrb[0].mxu0
        %2870 = vmatprep.mubr.f32.mxu0 0.0
        %2871 = vmatmul.mubr.f32.gmra.mrb[0].mxu0 %v2179
        %v2872 = vpop.f32.mrb[0].mxu0
        %v2873 = vadd.f32 %v1809, %v2872
        %v2874 = vpop.f32.mrb[0].mxu0
        %2875 = vmatprep.mubr.f32.mxu0 0.0
        %2876 = vmatmul.mubr.f32.gmra.mrb[0].mxu0 %v2182
        %v2877 = vpop.f32.mrb[0].mxu0
        %v2878 = vadd.f32 %v1809, %v2877
        %v2879 = vpop.f32.mrb[0].mxu0
        %2880 = vmatprep.mubr.f32.mxu0 0.0
        %2881 = vmatmul.mubr.f32.gmra.mrb[0].mxu0 %v2185
        %v2882 = vpop.f32.mrb[0].mxu0
        %v2883 = vadd.f32 %v1809, %v2882
        %v2884 = vpop.f32.mrb[0].mxu0
        %2885 = vmatprep.mubr.f32.mxu0 0.0
        %2886 = vmatmul.mubr.f32.gmra.mrb[0].mxu0 %v2188
        %v2887 = vpop.f32.mrb[0].mxu0
        %v2888 = vadd.f32 %v1809, %v2887
        %v2889 = vpop.f32.mrb[0].mxu0
        %2890 = vmatprep.mubr.f32.mxu0 0.0
        %2891 = vmatmul.mubr.f32.gmra.mrb[0].mxu0 %v2191
        %v2892 = vpop.f32.mrb[0].mxu0
        %v2893 = vadd.f32 %v1809, %v2892
        %v2894 = vpop.f32.mrb[0].mxu0
        %2895 = vmatprep.mubr.f32.mxu0 0.0
        %2896 = vmatmul.mubr.f32.gmra.mrb[0].mxu0 %v2194
        %v2897 = vpop.f32.mrb[0].mxu0
        %v2898 = vadd.f32 %v1809, %v2897
        %v2899 = vpop.f32.mrb[0].mxu0
        %2900 = vdwg.mxu0
        %v2901 = vmax.f32 %v2263, 0.0
        %v2902 = vmax.f32 %v2268, 0.0
        %v2903 = vmax.f32 %v2273, 0.0
        %v2904 = vmax.f32 %v2278, 0.0
        %v2905 = vmax.f32 %v2283, 0.0
        %v2906 = vmax.f32 %v2288, 0.0
        %v2907 = vmax.f32 %v2293, 0.0
        %v2908 = vmax.f32 %v2298, 0.0
        %v2909 = vmax.f32 %v2303, 0.0
        %v2910 = vmax.f32 %v2308, 0.0
        %v2911 = vmax.f32 %v2313, 0.0
        %v2912 = vmax.f32 %v2318, 0.0
        %v2913 = vmax.f32 %v2323, 0.0
        %v2914 = vmax.f32 %v2328, 0.0
        %v2915 = vmax.f32 %v2333, 0.0
        %v2916 = vmax.f32 %v2338, 0.0
        %v2917 = vmax.f32 %v2343, 0.0
        %v2918 = vmax.f32 %v2348, 0.0
        %v2919 = vmax.f32 %v2353, 0.0
        %v2920 = vmax.f32 %v2358, 0.0
        %v2921 = vmax.f32 %v2363, 0.0
        %v2922 = vmax.f32 %v2368, 0.0
        %v2923 = vmax.f32 %v2373, 0.0
        %v2924 = vmax.f32 %v2378, 0.0
        %v2925 = vmax.f32 %v2383, 0.0
        %v2926 = vmax.f32 %v2388, 0.0
        %v2927 = vmax.f32 %v2393, 0.0
        %v2928 = vmax.f32 %v2398, 0.0
        %v2929 = vmax.f32 %v2403, 0.0
        %v2930 = vmax.f32 %v2408, 0.0
        %v2931 = vmax.f32 %v2413, 0.0
        %v2932 = vmax.f32 %v2418, 0.0
        %v2933 = vmax.f32 %v2423, 0.0
        %v2934 = vmax.f32 %v2428, 0.0
        %v2935 = vmax.f32 %v2433, 0.0
        %v2936 = vmax.f32 %v2438, 0.0
        %v2937 = vmax.f32 %v2443, 0.0
        %v2938 = vmax.f32 %v2448, 0.0
        %v2939 = vmax.f32 %v2453, 0.0
        %v2940 = vmax.f32 %v2458, 0.0
        %v2941 = vmax.f32 %v2463, 0.0
        %v2942 = vmax.f32 %v2468, 0.0
        %v2943 = vmax.f32 %v2473, 0.0
        %v2944 = vmax.f32 %v2478, 0.0
        %v2945 = vmax.f32 %v2483, 0.0
        %v2946 = vmax.f32 %v2488, 0.0
        %v2947 = vmax.f32 %v2493, 0.0
        %v2948 = vmax.f32 %v2498, 0.0
        %v2949 = vmax.f32 %v2503, 0.0
        %v2950 = vmax.f32 %v2508, 0.0
        %v2951 = vmax.f32 %v2513, 0.0
        %v2952 = vmax.f32 %v2518, 0.0
        %v2953 = vmax.f32 %v2523, 0.0
        %v2954 = vmax.f32 %v2528, 0.0
        %v2955 = vmax.f32 %v2533, 0.0
        %v2956 = vmax.f32 %v2538, 0.0
        %v2957 = vmax.f32 %v2543, 0.0
        %v2958 = vmax.f32 %v2548, 0.0
        %v2959 = vmax.f32 %v2553, 0.0
        %v2960 = vmax.f32 %v2558, 0.0
        %v2961 = vmax.f32 %v2563, 0.0
        %v2962 = vmax.f32 %v2568, 0.0
        %v2963 = vmax.f32 %v2573, 0.0
        %v2964 = vmax.f32 %v2578, 0.0
        %v2965 = vmax.f32 %v2583, 0.0
        %v2966 = vmax.f32 %v2588, 0.0
        %v2967 = vmax.f32 %v2593, 0.0
        %v2968 = vmax.f32 %v2598, 0.0
        %v2969 = vmax.f32 %v2603, 0.0
        %v2970 = vmax.f32 %v2608, 0.0
        %v2971 = vmax.f32 %v2613, 0.0
        %v2972 = vmax.f32 %v2618, 0.0
        %v2973 = vmax.f32 %v2623, 0.0
        %v2974 = vmax.f32 %v2628, 0.0
        %v2975 = vmax.f32 %v2633, 0.0
        %v2976 = vmax.f32 %v2638, 0.0
        %v2977 = vmax.f32 %v2643, 0.0
        %v2978 = vmax.f32 %v2648, 0.0
        %v2979 = vmax.f32 %v2653, 0.0
        %v2980 = vmax.f32 %v2658, 0.0
        %v2981 = vmax.f32 %v2663, 0.0
        %v2982 = vmax.f32 %v2668, 0.0
        %v2983 = vmax.f32 %v2673, 0.0
        %v2984 = vmax.f32 %v2678, 0.0
        %v2985 = vmax.f32 %v2683, 0.0
        %v2986 = vmax.f32 %v2688, 0.0
        %v2987 = vmax.f32 %v2693, 0.0
        %v2988 = vmax.f32 %v2698, 0.0
        %v2989 = vmax.f32 %v2703, 0.0
        %v2990 = vmax.f32 %v2708, 0.0
        %v2991 = vmax.f32 %v2713, 0.0
        %v2992 = vmax.f32 %v2718, 0.0
        %v2993 = vmax.f32 %v2723, 0.0
        %v2994 = vmax.f32 %v2728, 0.0
        %v2995 = vmax.f32 %v2733, 0.0
        %v2996 = vmax.f32 %v2738, 0.0
        %v2997 = vmax.f32 %v2743, 0.0
        %v2998 = vmax.f32 %v2748, 0.0
        %v2999 = vmax.f32 %v2753, 0.0
        %v3000 = vmax.f32 %v2758, 0.0
        %v3001 = vmax.f32 %v2763, 0.0
        %v3002 = vmax.f32 %v2768, 0.0
        %v3003 = vmax.f32 %v2773, 0.0
        %v3004 = vmax.f32 %v2778, 0.0
        %v3005 = vmax.f32 %v2783, 0.0
        %v3006 = vmax.f32 %v2788, 0.0
        %v3007 = vmax.f32 %v2793, 0.0
        %v3008 = vmax.f32 %v2798, 0.0
        %v3009 = vmax.f32 %v2803, 0.0
        %v3010 = vmax.f32 %v2808, 0.0
        %v3011 = vmax.f32 %v2813, 0.0
        %v3012 = vmax.f32 %v2818, 0.0
        %v3013 = vmax.f32 %v2823, 0.0
        %v3014 = vmax.f32 %v2828, 0.0
        %v3015 = vmax.f32 %v2833, 0.0
        %v3016 = vmax.f32 %v2838, 0.0
        %v3017 = vmax.f32 %v2843, 0.0
        %v3018 = vmax.f32 %v2848, 0.0
        %v3019 = vmax.f32 %v2853, 0.0
        %v3020 = vmax.f32 %v2858, 0.0
        %v3021 = vmax.f32 %v2863, 0.0
        %v3022 = vmax.f32 %v2868, 0.0
        %v3023 = vmax.f32 %v2873, 0.0
        %v3024 = vmax.f32 %v2878, 0.0
        %v3025 = vmax.f32 %v2883, 0.0
        %v3026 = vmax.f32 %v2888, 0.0
        %v3027 = vmax.f32 %v2893, 0.0
        %v3028 = vmax.f32 %v2898, 0.0
        %v3029 = vld [vmem:[%s5] sm:$0xff]
        %v3030 = vld [vmem:[%s5 + $0x8] sm:$0xff]
        %v3031 = vld [vmem:[%s5 + $0x10] sm:$0xff]
        %v3032 = vld [vmem:[%s5 + $0x18] sm:$0xff]
        %v3033 = vld [vmem:[%s5 + $0x20] sm:$0xff]
        %v3034 = vld [vmem:[%s5 + $0x28] sm:$0xff]
        %v3035 = vld [vmem:[%s5 + $0x30] sm:$0xff]
        %v3036 = vld [vmem:[%s5 + $0x38] sm:$0xff]
        %v3037 = vld [vmem:[%s5 + $0x40] sm:$0xff]
        %v3038 = vld [vmem:[%s5 + $0x48] sm:$0xff]
        %v3039 = vld [vmem:[%s5 + $0x50] sm:$0xff]
        %v3040 = vld [vmem:[%s5 + $0x58] sm:$0xff]
        %v3041 = vld [vmem:[%s5 + $0x60] sm:$0xff]
        %v3042 = vld [vmem:[%s5 + $0x68] sm:$0xff]
        %v3043 = vld [vmem:[%s5 + $0x70] sm:$0xff]
        %v3044 = vld [vmem:[%s5 + $0x78] sm:$0xff]
        %v3045 = vld [vmem:[%s5 + $0x80] sm:$0xff]
        %v3046 = vld [vmem:[%s5 + $0x88] sm:$0xff]
        %v3047 = vld [vmem:[%s5 + $0x90] sm:$0xff]
        %v3048 = vld [vmem:[%s5 + $0x98] sm:$0xff]
        %v3049 = vld [vmem:[%s5 + $0xa0] sm:$0xff]
        %v3050 = vld [vmem:[%s5 + $0xa8] sm:$0xff]
        %v3051 = vld [vmem:[%s5 + $0xb0] sm:$0xff]
        %v3052 = vld [vmem:[%s5 + $0xb8] sm:$0xff]
        %v3053 = vld [vmem:[%s5 + $0xc0] sm:$0xff]
        %v3054 = vld [vmem:[%s5 + $0xc8] sm:$0xff]
        %v3055 = vld [vmem:[%s5 + $0xd0] sm:$0xff]
        %v3056 = vld [vmem:[%s5 + $0xd8] sm:$0xff]
        %v3057 = vld [vmem:[%s5 + $0xe0] sm:$0xff]
        %v3058 = vld [vmem:[%s5 + $0xe8] sm:$0xff]
        %v3059 = vld [vmem:[%s5 + $0xf0] sm:$0xff]
        %v3060 = vld [vmem:[%s5 + $0xf8] sm:$0xff]
        %v3061 = vld [vmem:[%s6] sm:$0x3]
        %v3063 = vlaneseq
        %v3064 = vshrl.u32 %v3063, 7
        %v3065 = vsub.s32 0, %v3064
        %v3066 = vrot.slane %v3061, %v3065
        %v3067 = vlaneseq
        %v3068 = vshrl.u32 %v3067, 7
        %v3069 = vsub.s32 1, %v3068
        %v3070 = vrot.slane %v3061, %v3069
        %3073 = vmatprep.subr.mxu0 %v3030
        %3074 = vmatpush1.msra.mxu0 %v3029
        %3075 = vmatprep.subr.mxu0 %v3032
        %3076 = vmatpush1.msra.mxu0 %v3031
        %3077 = vmatprep.subr.mxu0 %v3034
        %3078 = vmatpush1.msra.mxu0 %v3033
        %3079 = vmatprep.subr.mxu0 %v3036
        %3080 = vmatpush1.msra.mxu0 %v3035
        %3081 = vmatprep.subr.mxu0 %v3038
        %3082 = vmatpush1.msra.mxu0 %v3037
        %3083 = vmatprep.subr.mxu0 %v3040
        %3084 = vmatpush1.msra.mxu0 %v3039
        %3085 = vmatprep.subr.mxu0 %v3042
        %3086 = vmatpush1.msra.mxu0 %v3041
        %3087 = vmatprep.subr.mxu0 %v3044
        %3088 = vmatpush1.msra.mxu0 %v3043
        %3089 = vmatprep.subr.mxu0 %v3046
        %3090 = vmatpush1.msra.mxu0 %v3045
        %3091 = vmatprep.subr.mxu0 %v3048
        %3092 = vmatpush1.msra.mxu0 %v3047
        %3093 = vmatprep.subr.mxu0 %v3050
        %3094 = vmatpush1.msra.mxu0 %v3049
        %3095 = vmatprep.subr.mxu0 %v3052
        %3096 = vmatpush1.msra.mxu0 %v3051
        %3097 = vmatprep.subr.mxu0 %v3054
        %3098 = vmatpush1.msra.mxu0 %v3053
        %3099 = vmatprep.subr.mxu0 %v3056
        %3100 = vmatpush1.msra.mxu0 %v3055
        %3101 = vmatprep.subr.mxu0 %v3058
        %3102 = vmatpush1.msra.mxu0 %v3057
        %3103 = vmatprep.subr.mxu0 %v3060
        %3104 = vmatpush1.msra.mxu0 %v3059
        %3105 = vmatprep.subr.mxu0 0.0
        %3106 = vmatpush1.msra.mxu0 0.0
        %3107 = vmatprep.subr.mxu0 0.0
        %3108 = vmatpush1.msra.mxu0 0.0
        %3109 = vmatprep.subr.mxu0 0.0
        %3110 = vmatpush1.msra.mxu0 0.0
        %3111 = vmatprep.subr.mxu0 0.0
        %3112 = vmatpush1.msra.mxu0 0.0
        %3113 = vmatprep.subr.mxu0 0.0
        %3114 = vmatpush1.msra.mxu0 0.0
        %3115 = vmatprep.subr.mxu0 0.0
        %3116 = vmatpush1.msra.mxu0 0.0
        %3117 = vmatprep.subr.mxu0 0.0
        %3118 = vmatpush1.msra.mxu0 0.0
        %3119 = vmatprep.subr.mxu0 0.0
        %3120 = vmatpush1.msra.mxu0 0.0
        %3121 = vmatprep.subr.mxu0 0.0
        %3122 = vmatpush1.msra.mxu0 0.0
        %3123 = vmatprep.subr.mxu0 0.0
        %3124 = vmatpush1.msra.mxu0 0.0
        %3125 = vmatprep.subr.mxu0 0.0
        %3126 = vmatpush1.msra.mxu0 0.0
        %3127 = vmatprep.subr.mxu0 0.0
        %3128 = vmatpush1.msra.mxu0 0.0
        %3129 = vmatprep.subr.mxu0 0.0
        %3130 = vmatpush1.msra.mxu0 0.0
        %3131 = vmatprep.subr.mxu0 0.0
        %3132 = vmatpush1.msra.mxu0 0.0
        %3133 = vmatprep.subr.mxu0 0.0
        %3134 = vmatpush1.msra.mxu0 0.0
        %3135 = vmatprep.subr.mxu0 0.0
        %3136 = vmatpush1.msra.mxu0 0.0
        %3137 = vmatprep.mubr.f32.mxu0 0.0
        %3138 = vmatmul.mubr.f32.gmra.mrb[0].mxu0 %v2901
        %v3139 = vpop.f32.mrb[0].mxu0
        %v3140 = vadd.f32 %v3066, %v3139
        %v3141 = vpop.f32.mrb[0].mxu0
        %v3142 = vadd.f32 %v3070, %v3141
        %3143 = vmatprep.mubr.f32.mxu0 0.0
        %3144 = vmatmul.mubr.f32.gmra.mrb[0].mxu0 %v2902
        %v3145 = vpop.f32.mrb[0].mxu0
        %v3146 = vadd.f32 %v3066, %v3145
        %v3147 = vpop.f32.mrb[0].mxu0
        %v3148 = vadd.f32 %v3070, %v3147
        %3149 = vmatprep.mubr.f32.mxu0 0.0
        %3150 = vmatmul.mubr.f32.gmra.mrb[0].mxu0 %v2903
        %v3151 = vpop.f32.mrb[0].mxu0
        %v3152 = vadd.f32 %v3066, %v3151
        %v3153 = vpop.f32.mrb[0].mxu0
        %v3154 = vadd.f32 %v3070, %v3153
        %3155 = vmatprep.mubr.f32.mxu0 0.0
        %3156 = vmatmul.mubr.f32.gmra.mrb[0].mxu0 %v2904
        %v3157 = vpop.f32.mrb[0].mxu0
        %v3158 = vadd.f32 %v3066, %v3157
        %v3159 = vpop.f32.mrb[0].mxu0
        %v3160 = vadd.f32 %v3070, %v3159
        %3161 = vmatprep.mubr.f32.mxu0 0.0
        %3162 = vmatmul.mubr.f32.gmra.mrb[0].mxu0 %v2905
        %v3163 = vpop.f32.mrb[0].mxu0
        %v3164 = vadd.f32 %v3066, %v3163
        %v3165 = vpop.f32.mrb[0].mxu0
        %v3166 = vadd.f32 %v3070, %v3165
        %3167 = vmatprep.mubr.f32.mxu0 0.0
        %3168 = vmatmul.mubr.f32.gmra.mrb[0].mxu0 %v2906
        %v3169 = vpop.f32.mrb[0].mxu0
        %v3170 = vadd.f32 %v3066, %v3169
        %v3171 = vpop.f32.mrb[0].mxu0
        %v3172 = vadd.f32 %v3070, %v3171
        %3173 = vmatprep.mubr.f32.mxu0 0.0
        %3174 = vmatmul.mubr.f32.gmra.mrb[0].mxu0 %v2907
        %v3175 = vpop.f32.mrb[0].mxu0
        %v3176 = vadd.f32 %v3066, %v3175
        %v3177 = vpop.f32.mrb[0].mxu0
        %v3178 = vadd.f32 %v3070, %v3177
        %3179 = vmatprep.mubr.f32.mxu0 0.0
        %3180 = vmatmul.mubr.f32.gmra.mrb[0].mxu0 %v2908
        %v3181 = vpop.f32.mrb[0].mxu0
        %v3182 = vadd.f32 %v3066, %v3181
        %v3183 = vpop.f32.mrb[0].mxu0
        %v3184 = vadd.f32 %v3070, %v3183
        %3185 = vmatprep.mubr.f32.mxu0 0.0
        %3186 = vmatmul.mubr.f32.gmra.mrb[0].mxu0 %v2909
        %v3187 = vpop.f32.mrb[0].mxu0
        %v3188 = vadd.f32 %v3066, %v3187
        %v3189 = vpop.f32.mrb[0].mxu0
        %v3190 = vadd.f32 %v3070, %v3189
        %3191 = vmatprep.mubr.f32.mxu0 0.0
        %3192 = vmatmul.mubr.f32.gmra.mrb[0].mxu0 %v2910
        %v3193 = vpop.f32.mrb[0].mxu0
        %v3194 = vadd.f32 %v3066, %v3193
        %v3195 = vpop.f32.mrb[0].mxu0
        %v3196 = vadd.f32 %v3070, %v3195
        %3197 = vmatprep.mubr.f32.mxu0 0.0
        %3198 = vmatmul.mubr.f32.gmra.mrb[0].mxu0 %v2911
        %v3199 = vpop.f32.mrb[0].mxu0
        %v3200 = vadd.f32 %v3066, %v3199
        %v3201 = vpop.f32.mrb[0].mxu0
        %v3202 = vadd.f32 %v3070, %v3201
        %3203 = vmatprep.mubr.f32.mxu0 0.0
        %3204 = vmatmul.mubr.f32.gmra.mrb[0].mxu0 %v2912
        %v3205 = vpop.f32.mrb[0].mxu0
        %v3206 = vadd.f32 %v3066, %v3205
        %v3207 = vpop.f32.mrb[0].mxu0
        %v3208 = vadd.f32 %v3070, %v3207
        %3209 = vmatprep.mubr.f32.mxu0 0.0
        %3210 = vmatmul.mubr.f32.gmra.mrb[0].mxu0 %v2913
        %v3211 = vpop.f32.mrb[0].mxu0
        %v3212 = vadd.f32 %v3066, %v3211
        %v3213 = vpop.f32.mrb[0].mxu0
        %v3214 = vadd.f32 %v3070, %v3213
        %3215 = vmatprep.mubr.f32.mxu0 0.0
        %3216 = vmatmul.mubr.f32.gmra.mrb[0].mxu0 %v2914
        %v3217 = vpop.f32.mrb[0].mxu0
        %v3218 = vadd.f32 %v3066, %v3217
        %v3219 = vpop.f32.mrb[0].mxu0
        %v3220 = vadd.f32 %v3070, %v3219
        %3221 = vmatprep.mubr.f32.mxu0 0.0
        %3222 = vmatmul.mubr.f32.gmra.mrb[0].mxu0 %v2915
        %v3223 = vpop.f32.mrb[0].mxu0
        %v3224 = vadd.f32 %v3066, %v3223
        %v3225 = vpop.f32.mrb[0].mxu0
        %v3226 = vadd.f32 %v3070, %v3225
        %3227 = vmatprep.mubr.f32.mxu0 0.0
        %3228 = vmatmul.mubr.f32.gmra.mrb[0].mxu0 %v2916
        %v3229 = vpop.f32.mrb[0].mxu0
        %v3230 = vadd.f32 %v3066, %v3229
        %v3231 = vpop.f32.mrb[0].mxu0
        %v3232 = vadd.f32 %v3070, %v3231
        %3233 = vmatprep.mubr.f32.mxu0 0.0
        %3234 = vmatmul.mubr.f32.gmra.mrb[0].mxu0 %v2917
        %v3235 = vpop.f32.mrb[0].mxu0
        %v3236 = vadd.f32 %v3066, %v3235
        %v3237 = vpop.f32.mrb[0].mxu0
        %v3238 = vadd.f32 %v3070, %v3237
        %3239 = vmatprep.mubr.f32.mxu0 0.0
        %3240 = vmatmul.mubr.f32.gmra.mrb[0].mxu0 %v2918
        %v3241 = vpop.f32.mrb[0].mxu0
        %v3242 = vadd.f32 %v3066, %v3241
        %v3243 = vpop.f32.mrb[0].mxu0
        %v3244 = vadd.f32 %v3070, %v3243
        %3245 = vmatprep.mubr.f32.mxu0 0.0
        %3246 = vmatmul.mubr.f32.gmra.mrb[0].mxu0 %v2919
        %v3247 = vpop.f32.mrb[0].mxu0
        %v3248 = vadd.f32 %v3066, %v3247
        %v3249 = vpop.f32.mrb[0].mxu0
        %v3250 = vadd.f32 %v3070, %v3249
        %3251 = vmatprep.mubr.f32.mxu0 0.0
        %3252 = vmatmul.mubr.f32.gmra.mrb[0].mxu0 %v2920
        %v3253 = vpop.f32.mrb[0].mxu0
        %v3254 = vadd.f32 %v3066, %v3253
        %v3255 = vpop.f32.mrb[0].mxu0
        %v3256 = vadd.f32 %v3070, %v3255
        %3257 = vmatprep.mubr.f32.mxu0 0.0
        %3258 = vmatmul.mubr.f32.gmra.mrb[0].mxu0 %v2921
        %v3259 = vpop.f32.mrb[0].mxu0
        %v3260 = vadd.f32 %v3066, %v3259
        %v3261 = vpop.f32.mrb[0].mxu0
        %v3262 = vadd.f32 %v3070, %v3261
        %3263 = vmatprep.mubr.f32.mxu0 0.0
        %3264 = vmatmul.mubr.f32.gmra.mrb[0].mxu0 %v2922
        %v3265 = vpop.f32.mrb[0].mxu0
        %v3266 = vadd.f32 %v3066, %v3265
        %v3267 = vpop.f32.mrb[0].mxu0
        %v3268 = vadd.f32 %v3070, %v3267
        %3269 = vmatprep.mubr.f32.mxu0 0.0
        %3270 = vmatmul.mubr.f32.gmra.mrb[0].mxu0 %v2923
        %v3271 = vpop.f32.mrb[0].mxu0
        %v3272 = vadd.f32 %v3066, %v3271
        %v3273 = vpop.f32.mrb[0].mxu0
        %v3274 = vadd.f32 %v3070, %v3273
        %3275 = vmatprep.mubr.f32.mxu0 0.0
        %3276 = vmatmul.mubr.f32.gmra.mrb[0].mxu0 %v2924
        %v3277 = vpop.f32.mrb[0].mxu0
        %v3278 = vadd.f32 %v3066, %v3277
        %v3279 = vpop.f32.mrb[0].mxu0
        %v3280 = vadd.f32 %v3070, %v3279
        %3281 = vmatprep.mubr.f32.mxu0 0.0
        %3282 = vmatmul.mubr.f32.gmra.mrb[0].mxu0 %v2925
        %v3283 = vpop.f32.mrb[0].mxu0
        %v3284 = vadd.f32 %v3066, %v3283
        %v3285 = vpop.f32.mrb[0].mxu0
        %v3286 = vadd.f32 %v3070, %v3285
        %3287 = vmatprep.mubr.f32.mxu0 0.0
        %3288 = vmatmul.mubr.f32.gmra.mrb[0].mxu0 %v2926
        %v3289 = vpop.f32.mrb[0].mxu0
        %v3290 = vadd.f32 %v3066, %v3289
        %v3291 = vpop.f32.mrb[0].mxu0
        %v3292 = vadd.f32 %v3070, %v3291
        %3293 = vmatprep.mubr.f32.mxu0 0.0
        %3294 = vmatmul.mubr.f32.gmra.mrb[0].mxu0 %v2927
        %v3295 = vpop.f32.mrb[0].mxu0
        %v3296 = vadd.f32 %v3066, %v3295
        %v3297 = vpop.f32.mrb[0].mxu0
        %v3298 = vadd.f32 %v3070, %v3297
        %3299 = vmatprep.mubr.f32.mxu0 0.0
        %3300 = vmatmul.mubr.f32.gmra.mrb[0].mxu0 %v2928
        %v3301 = vpop.f32.mrb[0].mxu0
        %v3302 = vadd.f32 %v3066, %v3301
        %v3303 = vpop.f32.mrb[0].mxu0
        %v3304 = vadd.f32 %v3070, %v3303
        %3305 = vmatprep.mubr.f32.mxu0 0.0
        %3306 = vmatmul.mubr.f32.gmra.mrb[0].mxu0 %v2929
        %v3307 = vpop.f32.mrb[0].mxu0
        %v3308 = vadd.f32 %v3066, %v3307
        %v3309 = vpop.f32.mrb[0].mxu0
        %v3310 = vadd.f32 %v3070, %v3309
        %3311 = vmatprep.mubr.f32.mxu0 0.0
        %3312 = vmatmul.mubr.f32.gmra.mrb[0].mxu0 %v2930
        %v3313 = vpop.f32.mrb[0].mxu0
        %v3314 = vadd.f32 %v3066, %v3313
        %v3315 = vpop.f32.mrb[0].mxu0
        %v3316 = vadd.f32 %v3070, %v3315
        %3317 = vmatprep.mubr.f32.mxu0 0.0
        %3318 = vmatmul.mubr.f32.gmra.mrb[0].mxu0 %v2931
        %v3319 = vpop.f32.mrb[0].mxu0
        %v3320 = vadd.f32 %v3066, %v3319
        %v3321 = vpop.f32.mrb[0].mxu0
        %v3322 = vadd.f32 %v3070, %v3321
        %3323 = vmatprep.mubr.f32.mxu0 0.0
        %3324 = vmatmul.mubr.f32.gmra.mrb[0].mxu0 %v2932
        %v3325 = vpop.f32.mrb[0].mxu0
        %v3326 = vadd.f32 %v3066, %v3325
        %v3327 = vpop.f32.mrb[0].mxu0
        %v3328 = vadd.f32 %v3070, %v3327
        %3329 = vmatprep.mubr.f32.mxu0 0.0
        %3330 = vmatmul.mubr.f32.gmra.mrb[0].mxu0 %v2933
        %v3331 = vpop.f32.mrb[0].mxu0
        %v3332 = vadd.f32 %v3066, %v3331
        %v3333 = vpop.f32.mrb[0].mxu0
        %v3334 = vadd.f32 %v3070, %v3333
        %3335 = vmatprep.mubr.f32.mxu0 0.0
        %3336 = vmatmul.mubr.f32.gmra.mrb[0].mxu0 %v2934
        %v3337 = vpop.f32.mrb[0].mxu0
        %v3338 = vadd.f32 %v3066, %v3337
        %v3339 = vpop.f32.mrb[0].mxu0
        %v3340 = vadd.f32 %v3070, %v3339
        %3341 = vmatprep.mubr.f32.mxu0 0.0
        %3342 = vmatmul.mubr.f32.gmra.mrb[0].mxu0 %v2935
        %v3343 = vpop.f32.mrb[0].mxu0
        %v3344 = vadd.f32 %v3066, %v3343
        %v3345 = vpop.f32.mrb[0].mxu0
        %v3346 = vadd.f32 %v3070, %v3345
        %3347 = vmatprep.mubr.f32.mxu0 0.0
        %3348 = vmatmul.mubr.f32.gmra.mrb[0].mxu0 %v2936
        %v3349 = vpop.f32.mrb[0].mxu0
        %v3350 = vadd.f32 %v3066, %v3349
        %v3351 = vpop.f32.mrb[0].mxu0
        %v3352 = vadd.f32 %v3070, %v3351
        %3353 = vmatprep.mubr.f32.mxu0 0.0
        %3354 = vmatmul.mubr.f32.gmra.mrb[0].mxu0 %v2937
        %v3355 = vpop.f32.mrb[0].mxu0
        %v3356 = vadd.f32 %v3066, %v3355
        %v3357 = vpop.f32.mrb[0].mxu0
        %v3358 = vadd.f32 %v3070, %v3357
        %3359 = vmatprep.mubr.f32.mxu0 0.0
        %3360 = vmatmul.mubr.f32.gmra.mrb[0].mxu0 %v2938
        %v3361 = vpop.f32.mrb[0].mxu0
        %v3362 = vadd.f32 %v3066, %v3361
        %v3363 = vpop.f32.mrb[0].mxu0
        %v3364 = vadd.f32 %v3070, %v3363
        %3365 = vmatprep.mubr.f32.mxu0 0.0
        %3366 = vmatmul.mubr.f32.gmra.mrb[0].mxu0 %v2939
        %v3367 = vpop.f32.mrb[0].mxu0
        %v3368 = vadd.f32 %v3066, %v3367
        %v3369 = vpop.f32.mrb[0].mxu0
        %v3370 = vadd.f32 %v3070, %v3369
        %3371 = vmatprep.mubr.f32.mxu0 0.0
        %3372 = vmatmul.mubr.f32.gmra.mrb[0].mxu0 %v2940
        %v3373 = vpop.f32.mrb[0].mxu0
        %v3374 = vadd.f32 %v3066, %v3373
        %v3375 = vpop.f32.mrb[0].mxu0
        %v3376 = vadd.f32 %v3070, %v3375
        %3377 = vmatprep.mubr.f32.mxu0 0.0
        %3378 = vmatmul.mubr.f32.gmra.mrb[0].mxu0 %v2941
        %v3379 = vpop.f32.mrb[0].mxu0
        %v3380 = vadd.f32 %v3066, %v3379
        %v3381 = vpop.f32.mrb[0].mxu0
        %v3382 = vadd.f32 %v3070, %v3381
        %3383 = vmatprep.mubr.f32.mxu0 0.0
        %3384 = vmatmul.mubr.f32.gmra.mrb[0].mxu0 %v2942
        %v3385 = vpop.f32.mrb[0].mxu0
        %v3386 = vadd.f32 %v3066, %v3385
        %v3387 = vpop.f32.mrb[0].mxu0
        %v3388 = vadd.f32 %v3070, %v3387
        %3389 = vmatprep.mubr.f32.mxu0 0.0
        %3390 = vmatmul.mubr.f32.gmra.mrb[0].mxu0 %v2943
        %v3391 = vpop.f32.mrb[0].mxu0
        %v3392 = vadd.f32 %v3066, %v3391
        %v3393 = vpop.f32.mrb[0].mxu0
        %v3394 = vadd.f32 %v3070, %v3393
        %3395 = vmatprep.mubr.f32.mxu0 0.0
        %3396 = vmatmul.mubr.f32.gmra.mrb[0].mxu0 %v2944
        %v3397 = vpop.f32.mrb[0].mxu0
        %v3398 = vadd.f32 %v3066, %v3397
        %v3399 = vpop.f32.mrb[0].mxu0
        %v3400 = vadd.f32 %v3070, %v3399
        %3401 = vmatprep.mubr.f32.mxu0 0.0
        %3402 = vmatmul.mubr.f32.gmra.mrb[0].mxu0 %v2945
        %v3403 = vpop.f32.mrb[0].mxu0
        %v3404 = vadd.f32 %v3066, %v3403
        %v3405 = vpop.f32.mrb[0].mxu0
        %v3406 = vadd.f32 %v3070, %v3405
        %3407 = vmatprep.mubr.f32.mxu0 0.0
        %3408 = vmatmul.mubr.f32.gmra.mrb[0].mxu0 %v2946
        %v3409 = vpop.f32.mrb[0].mxu0
        %v3410 = vadd.f32 %v3066, %v3409
        %v3411 = vpop.f32.mrb[0].mxu0
        %v3412 = vadd.f32 %v3070, %v3411
        %3413 = vmatprep.mubr.f32.mxu0 0.0
        %3414 = vmatmul.mubr.f32.gmra.mrb[0].mxu0 %v2947
        %v3415 = vpop.f32.mrb[0].mxu0
        %v3416 = vadd.f32 %v3066, %v3415
        %v3417 = vpop.f32.mrb[0].mxu0
        %v3418 = vadd.f32 %v3070, %v3417
        %3419 = vmatprep.mubr.f32.mxu0 0.0
        %3420 = vmatmul.mubr.f32.gmra.mrb[0].mxu0 %v2948
        %v3421 = vpop.f32.mrb[0].mxu0
        %v3422 = vadd.f32 %v3066, %v3421
        %v3423 = vpop.f32.mrb[0].mxu0
        %v3424 = vadd.f32 %v3070, %v3423
        %3425 = vmatprep.mubr.f32.mxu0 0.0
        %3426 = vmatmul.mubr.f32.gmra.mrb[0].mxu0 %v2949
        %v3427 = vpop.f32.mrb[0].mxu0
        %v3428 = vadd.f32 %v3066, %v3427
        %v3429 = vpop.f32.mrb[0].mxu0
        %v3430 = vadd.f32 %v3070, %v3429
        %3431 = vmatprep.mubr.f32.mxu0 0.0
        %3432 = vmatmul.mubr.f32.gmra.mrb[0].mxu0 %v2950
        %v3433 = vpop.f32.mrb[0].mxu0
        %v3434 = vadd.f32 %v3066, %v3433
        %v3435 = vpop.f32.mrb[0].mxu0
        %v3436 = vadd.f32 %v3070, %v3435
        %3437 = vmatprep.mubr.f32.mxu0 0.0
        %3438 = vmatmul.mubr.f32.gmra.mrb[0].mxu0 %v2951
        %v3439 = vpop.f32.mrb[0].mxu0
        %v3440 = vadd.f32 %v3066, %v3439
        %v3441 = vpop.f32.mrb[0].mxu0
        %v3442 = vadd.f32 %v3070, %v3441
        %3443 = vmatprep.mubr.f32.mxu0 0.0
        %3444 = vmatmul.mubr.f32.gmra.mrb[0].mxu0 %v2952
        %v3445 = vpop.f32.mrb[0].mxu0
        %v3446 = vadd.f32 %v3066, %v3445
        %v3447 = vpop.f32.mrb[0].mxu0
        %v3448 = vadd.f32 %v3070, %v3447
        %3449 = vmatprep.mubr.f32.mxu0 0.0
        %3450 = vmatmul.mubr.f32.gmra.mrb[0].mxu0 %v2953
        %v3451 = vpop.f32.mrb[0].mxu0
        %v3452 = vadd.f32 %v3066, %v3451
        %v3453 = vpop.f32.mrb[0].mxu0
        %v3454 = vadd.f32 %v3070, %v3453
        %3455 = vmatprep.mubr.f32.mxu0 0.0
        %3456 = vmatmul.mubr.f32.gmra.mrb[0].mxu0 %v2954
        %v3457 = vpop.f32.mrb[0].mxu0
        %v3458 = vadd.f32 %v3066, %v3457
        %v3459 = vpop.f32.mrb[0].mxu0
        %v3460 = vadd.f32 %v3070, %v3459
        %3461 = vmatprep.mubr.f32.mxu0 0.0
        %3462 = vmatmul.mubr.f32.gmra.mrb[0].mxu0 %v2955
        %v3463 = vpop.f32.mrb[0].mxu0
        %v3464 = vadd.f32 %v3066, %v3463
        %v3465 = vpop.f32.mrb[0].mxu0
        %v3466 = vadd.f32 %v3070, %v3465
        %3467 = vmatprep.mubr.f32.mxu0 0.0
        %3468 = vmatmul.mubr.f32.gmra.mrb[0].mxu0 %v2956
        %v3469 = vpop.f32.mrb[0].mxu0
        %v3470 = vadd.f32 %v3066, %v3469
        %v3471 = vpop.f32.mrb[0].mxu0
        %v3472 = vadd.f32 %v3070, %v3471
        %3473 = vmatprep.mubr.f32.mxu0 0.0
        %3474 = vmatmul.mubr.f32.gmra.mrb[0].mxu0 %v2957
        %v3475 = vpop.f32.mrb[0].mxu0
        %v3476 = vadd.f32 %v3066, %v3475
        %v3477 = vpop.f32.mrb[0].mxu0
        %v3478 = vadd.f32 %v3070, %v3477
        %3479 = vmatprep.mubr.f32.mxu0 0.0
        %3480 = vmatmul.mubr.f32.gmra.mrb[0].mxu0 %v2958
        %v3481 = vpop.f32.mrb[0].mxu0
        %v3482 = vadd.f32 %v3066, %v3481
        %v3483 = vpop.f32.mrb[0].mxu0
        %v3484 = vadd.f32 %v3070, %v3483
        %3485 = vmatprep.mubr.f32.mxu0 0.0
        %3486 = vmatmul.mubr.f32.gmra.mrb[0].mxu0 %v2959
        %v3487 = vpop.f32.mrb[0].mxu0
        %v3488 = vadd.f32 %v3066, %v3487
        %v3489 = vpop.f32.mrb[0].mxu0
        %v3490 = vadd.f32 %v3070, %v3489
        %3491 = vmatprep.mubr.f32.mxu0 0.0
        %3492 = vmatmul.mubr.f32.gmra.mrb[0].mxu0 %v2960
        %v3493 = vpop.f32.mrb[0].mxu0
        %v3494 = vadd.f32 %v3066, %v3493
        %v3495 = vpop.f32.mrb[0].mxu0
        %v3496 = vadd.f32 %v3070, %v3495
        %3497 = vmatprep.mubr.f32.mxu0 0.0
        %3498 = vmatmul.mubr.f32.gmra.mrb[0].mxu0 %v2961
        %v3499 = vpop.f32.mrb[0].mxu0
        %v3500 = vadd.f32 %v3066, %v3499
        %v3501 = vpop.f32.mrb[0].mxu0
        %v3502 = vadd.f32 %v3070, %v3501
        %3503 = vmatprep.mubr.f32.mxu0 0.0
        %3504 = vmatmul.mubr.f32.gmra.mrb[0].mxu0 %v2962
        %v3505 = vpop.f32.mrb[0].mxu0
        %v3506 = vadd.f32 %v3066, %v3505
        %v3507 = vpop.f32.mrb[0].mxu0
        %v3508 = vadd.f32 %v3070, %v3507
        %3509 = vmatprep.mubr.f32.mxu0 0.0
        %3510 = vmatmul.mubr.f32.gmra.mrb[0].mxu0 %v2963
        %v3511 = vpop.f32.mrb[0].mxu0
        %v3512 = vadd.f32 %v3066, %v3511
        %v3513 = vpop.f32.mrb[0].mxu0
        %v3514 = vadd.f32 %v3070, %v3513
        %3515 = vmatprep.mubr.f32.mxu0 0.0
        %3516 = vmatmul.mubr.f32.gmra.mrb[0].mxu0 %v2964
        %v3517 = vpop.f32.mrb[0].mxu0
        %v3518 = vadd.f32 %v3066, %v3517
        %v3519 = vpop.f32.mrb[0].mxu0
        %v3520 = vadd.f32 %v3070, %v3519
        %3521 = vmatprep.mubr.f32.mxu0 0.0
        %3522 = vmatmul.mubr.f32.gmra.mrb[0].mxu0 %v2965
        %v3523 = vpop.f32.mrb[0].mxu0
        %v3524 = vadd.f32 %v3066, %v3523
        %v3525 = vpop.f32.mrb[0].mxu0
        %v3526 = vadd.f32 %v3070, %v3525
        %3527 = vmatprep.mubr.f32.mxu0 0.0
        %3528 = vmatmul.mubr.f32.gmra.mrb[0].mxu0 %v2966
        %v3529 = vpop.f32.mrb[0].mxu0
        %v3530 = vadd.f32 %v3066, %v3529
        %v3531 = vpop.f32.mrb[0].mxu0
        %v3532 = vadd.f32 %v3070, %v3531
        %3533 = vmatprep.mubr.f32.mxu0 0.0
        %3534 = vmatmul.mubr.f32.gmra.mrb[0].mxu0 %v2967
        %v3535 = vpop.f32.mrb[0].mxu0
        %v3536 = vadd.f32 %v3066, %v3535
        %v3537 = vpop.f32.mrb[0].mxu0
        %v3538 = vadd.f32 %v3070, %v3537
        %3539 = vmatprep.mubr.f32.mxu0 0.0
        %3540 = vmatmul.mubr.f32.gmra.mrb[0].mxu0 %v2968
        %v3541 = vpop.f32.mrb[0].mxu0
        %v3542 = vadd.f32 %v3066, %v3541
        %v3543 = vpop.f32.mrb[0].mxu0
        %v3544 = vadd.f32 %v3070, %v3543
        %3545 = vmatprep.mubr.f32.mxu0 0.0
        %3546 = vmatmul.mubr.f32.gmra.mrb[0].mxu0 %v2969
        %v3547 = vpop.f32.mrb[0].mxu0
        %v3548 = vadd.f32 %v3066, %v3547
        %v3549 = vpop.f32.mrb[0].mxu0
        %v3550 = vadd.f32 %v3070, %v3549
        %3551 = vmatprep.mubr.f32.mxu0 0.0
        %3552 = vmatmul.mubr.f32.gmra.mrb[0].mxu0 %v2970
        %v3553 = vpop.f32.mrb[0].mxu0
        %v3554 = vadd.f32 %v3066, %v3553
        %v3555 = vpop.f32.mrb[0].mxu0
        %v3556 = vadd.f32 %v3070, %v3555
        %3557 = vmatprep.mubr.f32.mxu0 0.0
        %3558 = vmatmul.mubr.f32.gmra.mrb[0].mxu0 %v2971
        %v3559 = vpop.f32.mrb[0].mxu0
        %v3560 = vadd.f32 %v3066, %v3559
        %v3561 = vpop.f32.mrb[0].mxu0
        %v3562 = vadd.f32 %v3070, %v3561
        %3563 = vmatprep.mubr.f32.mxu0 0.0
        %3564 = vmatmul.mubr.f32.gmra.mrb[0].mxu0 %v2972
        %v3565 = vpop.f32.mrb[0].mxu0
        %v3566 = vadd.f32 %v3066, %v3565
        %v3567 = vpop.f32.mrb[0].mxu0
        %v3568 = vadd.f32 %v3070, %v3567
        %3569 = vmatprep.mubr.f32.mxu0 0.0
        %3570 = vmatmul.mubr.f32.gmra.mrb[0].mxu0 %v2973
        %v3571 = vpop.f32.mrb[0].mxu0
        %v3572 = vadd.f32 %v3066, %v3571
        %v3573 = vpop.f32.mrb[0].mxu0
        %v3574 = vadd.f32 %v3070, %v3573
        %3575 = vmatprep.mubr.f32.mxu0 0.0
        %3576 = vmatmul.mubr.f32.gmra.mrb[0].mxu0 %v2974
        %v3577 = vpop.f32.mrb[0].mxu0
        %v3578 = vadd.f32 %v3066, %v3577
        %v3579 = vpop.f32.mrb[0].mxu0
        %v3580 = vadd.f32 %v3070, %v3579
        %3581 = vmatprep.mubr.f32.mxu0 0.0
        %3582 = vmatmul.mubr.f32.gmra.mrb[0].mxu0 %v2975
        %v3583 = vpop.f32.mrb[0].mxu0
        %v3584 = vadd.f32 %v3066, %v3583
        %v3585 = vpop.f32.mrb[0].mxu0
        %v3586 = vadd.f32 %v3070, %v3585
        %3587 = vmatprep.mubr.f32.mxu0 0.0
        %3588 = vmatmul.mubr.f32.gmra.mrb[0].mxu0 %v2976
        %v3589 = vpop.f32.mrb[0].mxu0
        %v3590 = vadd.f32 %v3066, %v3589
        %v3591 = vpop.f32.mrb[0].mxu0
        %v3592 = vadd.f32 %v3070, %v3591
        %3593 = vmatprep.mubr.f32.mxu0 0.0
        %3594 = vmatmul.mubr.f32.gmra.mrb[0].mxu0 %v2977
        %v3595 = vpop.f32.mrb[0].mxu0
        %v3596 = vadd.f32 %v3066, %v3595
        %v3597 = vpop.f32.mrb[0].mxu0
        %v3598 = vadd.f32 %v3070, %v3597
        %3599 = vmatprep.mubr.f32.mxu0 0.0
        %3600 = vmatmul.mubr.f32.gmra.mrb[0].mxu0 %v2978
        %v3601 = vpop.f32.mrb[0].mxu0
        %v3602 = vadd.f32 %v3066, %v3601
        %v3603 = vpop.f32.mrb[0].mxu0
        %v3604 = vadd.f32 %v3070, %v3603
        %3605 = vmatprep.mubr.f32.mxu0 0.0
        %3606 = vmatmul.mubr.f32.gmra.mrb[0].mxu0 %v2979
        %v3607 = vpop.f32.mrb[0].mxu0
        %v3608 = vadd.f32 %v3066, %v3607
        %v3609 = vpop.f32.mrb[0].mxu0
        %v3610 = vadd.f32 %v3070, %v3609
        %3611 = vmatprep.mubr.f32.mxu0 0.0
        %3612 = vmatmul.mubr.f32.gmra.mrb[0].mxu0 %v2980
        %v3613 = vpop.f32.mrb[0].mxu0
        %v3614 = vadd.f32 %v3066, %v3613
        %v3615 = vpop.f32.mrb[0].mxu0
        %v3616 = vadd.f32 %v3070, %v3615
        %3617 = vmatprep.mubr.f32.mxu0 0.0
        %3618 = vmatmul.mubr.f32.gmra.mrb[0].mxu0 %v2981
        %v3619 = vpop.f32.mrb[0].mxu0
        %v3620 = vadd.f32 %v3066, %v3619
        %v3621 = vpop.f32.mrb[0].mxu0
        %v3622 = vadd.f32 %v3070, %v3621
        %3623 = vmatprep.mubr.f32.mxu0 0.0
        %3624 = vmatmul.mubr.f32.gmra.mrb[0].mxu0 %v2982
        %v3625 = vpop.f32.mrb[0].mxu0
        %v3626 = vadd.f32 %v3066, %v3625
        %v3627 = vpop.f32.mrb[0].mxu0
        %v3628 = vadd.f32 %v3070, %v3627
        %3629 = vmatprep.mubr.f32.mxu0 0.0
        %3630 = vmatmul.mubr.f32.gmra.mrb[0].mxu0 %v2983
        %v3631 = vpop.f32.mrb[0].mxu0
        %v3632 = vadd.f32 %v3066, %v3631
        %v3633 = vpop.f32.mrb[0].mxu0
        %v3634 = vadd.f32 %v3070, %v3633
        %3635 = vmatprep.mubr.f32.mxu0 0.0
        %3636 = vmatmul.mubr.f32.gmra.mrb[0].mxu0 %v2984
        %v3637 = vpop.f32.mrb[0].mxu0
        %v3638 = vadd.f32 %v3066, %v3637
        %v3639 = vpop.f32.mrb[0].mxu0
        %v3640 = vadd.f32 %v3070, %v3639
        %3641 = vmatprep.mubr.f32.mxu0 0.0
        %3642 = vmatmul.mubr.f32.gmra.mrb[0].mxu0 %v2985
        %v3643 = vpop.f32.mrb[0].mxu0
        %v3644 = vadd.f32 %v3066, %v3643
        %v3645 = vpop.f32.mrb[0].mxu0
        %v3646 = vadd.f32 %v3070, %v3645
        %3647 = vmatprep.mubr.f32.mxu0 0.0
        %3648 = vmatmul.mubr.f32.gmra.mrb[0].mxu0 %v2986
        %v3649 = vpop.f32.mrb[0].mxu0
        %v3650 = vadd.f32 %v3066, %v3649
        %v3651 = vpop.f32.mrb[0].mxu0
        %v3652 = vadd.f32 %v3070, %v3651
        %3653 = vmatprep.mubr.f32.mxu0 0.0
        %3654 = vmatmul.mubr.f32.gmra.mrb[0].mxu0 %v2987
        %v3655 = vpop.f32.mrb[0].mxu0
        %v3656 = vadd.f32 %v3066, %v3655
        %v3657 = vpop.f32.mrb[0].mxu0
        %v3658 = vadd.f32 %v3070, %v3657
        %3659 = vmatprep.mubr.f32.mxu0 0.0
        %3660 = vmatmul.mubr.f32.gmra.mrb[0].mxu0 %v2988
        %v3661 = vpop.f32.mrb[0].mxu0
        %v3662 = vadd.f32 %v3066, %v3661
        %v3663 = vpop.f32.mrb[0].mxu0
        %v3664 = vadd.f32 %v3070, %v3663
        %3665 = vmatprep.mubr.f32.mxu0 0.0
        %3666 = vmatmul.mubr.f32.gmra.mrb[0].mxu0 %v2989
        %v3667 = vpop.f32.mrb[0].mxu0
        %v3668 = vadd.f32 %v3066, %v3667
        %v3669 = vpop.f32.mrb[0].mxu0
        %v3670 = vadd.f32 %v3070, %v3669
        %3671 = vmatprep.mubr.f32.mxu0 0.0
        %3672 = vmatmul.mubr.f32.gmra.mrb[0].mxu0 %v2990
        %v3673 = vpop.f32.mrb[0].mxu0
        %v3674 = vadd.f32 %v3066, %v3673
        %v3675 = vpop.f32.mrb[0].mxu0
        %v3676 = vadd.f32 %v3070, %v3675
        %3677 = vmatprep.mubr.f32.mxu0 0.0
        %3678 = vmatmul.mubr.f32.gmra.mrb[0].mxu0 %v2991
        %v3679 = vpop.f32.mrb[0].mxu0
        %v3680 = vadd.f32 %v3066, %v3679
        %v3681 = vpop.f32.mrb[0].mxu0
        %v3682 = vadd.f32 %v3070, %v3681
        %3683 = vmatprep.mubr.f32.mxu0 0.0
        %3684 = vmatmul.mubr.f32.gmra.mrb[0].mxu0 %v2992
        %v3685 = vpop.f32.mrb[0].mxu0
        %v3686 = vadd.f32 %v3066, %v3685
        %v3687 = vpop.f32.mrb[0].mxu0
        %v3688 = vadd.f32 %v3070, %v3687
        %3689 = vmatprep.mubr.f32.mxu0 0.0
        %3690 = vmatmul.mubr.f32.gmra.mrb[0].mxu0 %v2993
        %v3691 = vpop.f32.mrb[0].mxu0
        %v3692 = vadd.f32 %v3066, %v3691
        %v3693 = vpop.f32.mrb[0].mxu0
        %v3694 = vadd.f32 %v3070, %v3693
        %3695 = vmatprep.mubr.f32.mxu0 0.0
        %3696 = vmatmul.mubr.f32.gmra.mrb[0].mxu0 %v2994
        %v3697 = vpop.f32.mrb[0].mxu0
        %v3698 = vadd.f32 %v3066, %v3697
        %v3699 = vpop.f32.mrb[0].mxu0
        %v3700 = vadd.f32 %v3070, %v3699
        %3701 = vmatprep.mubr.f32.mxu0 0.0
        %3702 = vmatmul.mubr.f32.gmra.mrb[0].mxu0 %v2995
        %v3703 = vpop.f32.mrb[0].mxu0
        %v3704 = vadd.f32 %v3066, %v3703
        %v3705 = vpop.f32.mrb[0].mxu0
        %v3706 = vadd.f32 %v3070, %v3705
        %3707 = vmatprep.mubr.f32.mxu0 0.0
        %3708 = vmatmul.mubr.f32.gmra.mrb[0].mxu0 %v2996
        %v3709 = vpop.f32.mrb[0].mxu0
        %v3710 = vadd.f32 %v3066, %v3709
        %v3711 = vpop.f32.mrb[0].mxu0
        %v3712 = vadd.f32 %v3070, %v3711
        %3713 = vmatprep.mubr.f32.mxu0 0.0
        %3714 = vmatmul.mubr.f32.gmra.mrb[0].mxu0 %v2997
        %v3715 = vpop.f32.mrb[0].mxu0
        %v3716 = vadd.f32 %v3066, %v3715
        %v3717 = vpop.f32.mrb[0].mxu0
        %v3718 = vadd.f32 %v3070, %v3717
        %3719 = vmatprep.mubr.f32.mxu0 0.0
        %3720 = vmatmul.mubr.f32.gmra.mrb[0].mxu0 %v2998
        %v3721 = vpop.f32.mrb[0].mxu0
        %v3722 = vadd.f32 %v3066, %v3721
        %v3723 = vpop.f32.mrb[0].mxu0
        %v3724 = vadd.f32 %v3070, %v3723
        %3725 = vmatprep.mubr.f32.mxu0 0.0
        %3726 = vmatmul.mubr.f32.gmra.mrb[0].mxu0 %v2999
        %v3727 = vpop.f32.mrb[0].mxu0
        %v3728 = vadd.f32 %v3066, %v3727
        %v3729 = vpop.f32.mrb[0].mxu0
        %v3730 = vadd.f32 %v3070, %v3729
        %3731 = vmatprep.mubr.f32.mxu0 0.0
        %3732 = vmatmul.mubr.f32.gmra.mrb[0].mxu0 %v3000
        %v3733 = vpop.f32.mrb[0].mxu0
        %v3734 = vadd.f32 %v3066, %v3733
        %v3735 = vpop.f32.mrb[0].mxu0
        %v3736 = vadd.f32 %v3070, %v3735
        %3737 = vmatprep.mubr.f32.mxu0 0.0
        %3738 = vmatmul.mubr.f32.gmra.mrb[0].mxu0 %v3001
        %v3739 = vpop.f32.mrb[0].mxu0
        %v3740 = vadd.f32 %v3066, %v3739
        %v3741 = vpop.f32.mrb[0].mxu0
        %v3742 = vadd.f32 %v3070, %v3741
        %3743 = vmatprep.mubr.f32.mxu0 0.0
        %3744 = vmatmul.mubr.f32.gmra.mrb[0].mxu0 %v3002
        %v3745 = vpop.f32.mrb[0].mxu0
        %v3746 = vadd.f32 %v3066, %v3745
        %v3747 = vpop.f32.mrb[0].mxu0
        %v3748 = vadd.f32 %v3070, %v3747
        %3749 = vmatprep.mubr.f32.mxu0 0.0
        %3750 = vmatmul.mubr.f32.gmra.mrb[0].mxu0 %v3003
        %v3751 = vpop.f32.mrb[0].mxu0
        %v3752 = vadd.f32 %v3066, %v3751
        %v3753 = vpop.f32.mrb[0].mxu0
        %v3754 = vadd.f32 %v3070, %v3753
        %3755 = vmatprep.mubr.f32.mxu0 0.0
        %3756 = vmatmul.mubr.f32.gmra.mrb[0].mxu0 %v3004
        %v3757 = vpop.f32.mrb[0].mxu0
        %v3758 = vadd.f32 %v3066, %v3757
        %v3759 = vpop.f32.mrb[0].mxu0
        %v3760 = vadd.f32 %v3070, %v3759
        %3761 = vmatprep.mubr.f32.mxu0 0.0
        %3762 = vmatmul.mubr.f32.gmra.mrb[0].mxu0 %v3005
        %v3763 = vpop.f32.mrb[0].mxu0
        %v3764 = vadd.f32 %v3066, %v3763
        %v3765 = vpop.f32.mrb[0].mxu0
        %v3766 = vadd.f32 %v3070, %v3765
        %3767 = vmatprep.mubr.f32.mxu0 0.0
        %3768 = vmatmul.mubr.f32.gmra.mrb[0].mxu0 %v3006
        %v3769 = vpop.f32.mrb[0].mxu0
        %v3770 = vadd.f32 %v3066, %v3769
        %v3771 = vpop.f32.mrb[0].mxu0
        %v3772 = vadd.f32 %v3070, %v3771
        %3773 = vmatprep.mubr.f32.mxu0 0.0
        %3774 = vmatmul.mubr.f32.gmra.mrb[0].mxu0 %v3007
        %v3775 = vpop.f32.mrb[0].mxu0
        %v3776 = vadd.f32 %v3066, %v3775
        %v3777 = vpop.f32.mrb[0].mxu0
        %v3778 = vadd.f32 %v3070, %v3777
        %3779 = vmatprep.mubr.f32.mxu0 0.0
        %3780 = vmatmul.mubr.f32.gmra.mrb[0].mxu0 %v3008
        %v3781 = vpop.f32.mrb[0].mxu0
        %v3782 = vadd.f32 %v3066, %v3781
        %v3783 = vpop.f32.mrb[0].mxu0
        %v3784 = vadd.f32 %v3070, %v3783
        %3785 = vmatprep.mubr.f32.mxu0 0.0
        %3786 = vmatmul.mubr.f32.gmra.mrb[0].mxu0 %v3009
        %v3787 = vpop.f32.mrb[0].mxu0
        %v3788 = vadd.f32 %v3066, %v3787
        %v3789 = vpop.f32.mrb[0].mxu0
        %v3790 = vadd.f32 %v3070, %v3789
        %3791 = vmatprep.mubr.f32.mxu0 0.0
        %3792 = vmatmul.mubr.f32.gmra.mrb[0].mxu0 %v3010
        %v3793 = vpop.f32.mrb[0].mxu0
        %v3794 = vadd.f32 %v3066, %v3793
        %v3795 = vpop.f32.mrb[0].mxu0
        %v3796 = vadd.f32 %v3070, %v3795
        %3797 = vmatprep.mubr.f32.mxu0 0.0
        %3798 = vmatmul.mubr.f32.gmra.mrb[0].mxu0 %v3011
        %v3799 = vpop.f32.mrb[0].mxu0
        %v3800 = vadd.f32 %v3066, %v3799
        %v3801 = vpop.f32.mrb[0].mxu0
        %v3802 = vadd.f32 %v3070, %v3801
        %3803 = vmatprep.mubr.f32.mxu0 0.0
        %3804 = vmatmul.mubr.f32.gmra.mrb[0].mxu0 %v3012
        %v3805 = vpop.f32.mrb[0].mxu0
        %v3806 = vadd.f32 %v3066, %v3805
        %v3807 = vpop.f32.mrb[0].mxu0
        %v3808 = vadd.f32 %v3070, %v3807
        %3809 = vmatprep.mubr.f32.mxu0 0.0
        %3810 = vmatmul.mubr.f32.gmra.mrb[0].mxu0 %v3013
        %v3811 = vpop.f32.mrb[0].mxu0
        %v3812 = vadd.f32 %v3066, %v3811
        %v3813 = vpop.f32.mrb[0].mxu0
        %v3814 = vadd.f32 %v3070, %v3813
        %3815 = vmatprep.mubr.f32.mxu0 0.0
        %3816 = vmatmul.mubr.f32.gmra.mrb[0].mxu0 %v3014
        %v3817 = vpop.f32.mrb[0].mxu0
        %v3818 = vadd.f32 %v3066, %v3817
        %v3819 = vpop.f32.mrb[0].mxu0
        %v3820 = vadd.f32 %v3070, %v3819
        %3821 = vmatprep.mubr.f32.mxu0 0.0
        %3822 = vmatmul.mubr.f32.gmra.mrb[0].mxu0 %v3015
        %v3823 = vpop.f32.mrb[0].mxu0
        %v3824 = vadd.f32 %v3066, %v3823
        %v3825 = vpop.f32.mrb[0].mxu0
        %v3826 = vadd.f32 %v3070, %v3825
        %3827 = vmatprep.mubr.f32.mxu0 0.0
        %3828 = vmatmul.mubr.f32.gmra.mrb[0].mxu0 %v3016
        %v3829 = vpop.f32.mrb[0].mxu0
        %v3830 = vadd.f32 %v3066, %v3829
        %v3831 = vpop.f32.mrb[0].mxu0
        %v3832 = vadd.f32 %v3070, %v3831
        %3833 = vmatprep.mubr.f32.mxu0 0.0
        %3834 = vmatmul.mubr.f32.gmra.mrb[0].mxu0 %v3017
        %v3835 = vpop.f32.mrb[0].mxu0
        %v3836 = vadd.f32 %v3066, %v3835
        %v3837 = vpop.f32.mrb[0].mxu0
        %v3838 = vadd.f32 %v3070, %v3837
        %3839 = vmatprep.mubr.f32.mxu0 0.0
        %3840 = vmatmul.mubr.f32.gmra.mrb[0].mxu0 %v3018
        %v3841 = vpop.f32.mrb[0].mxu0
        %v3842 = vadd.f32 %v3066, %v3841
        %v3843 = vpop.f32.mrb[0].mxu0
        %v3844 = vadd.f32 %v3070, %v3843
        %3845 = vmatprep.mubr.f32.mxu0 0.0
        %3846 = vmatmul.mubr.f32.gmra.mrb[0].mxu0 %v3019
        %v3847 = vpop.f32.mrb[0].mxu0
        %v3848 = vadd.f32 %v3066, %v3847
        %v3849 = vpop.f32.mrb[0].mxu0
        %v3850 = vadd.f32 %v3070, %v3849
        %3851 = vmatprep.mubr.f32.mxu0 0.0
        %3852 = vmatmul.mubr.f32.gmra.mrb[0].mxu0 %v3020
        %v3853 = vpop.f32.mrb[0].mxu0
        %v3854 = vadd.f32 %v3066, %v3853
        %v3855 = vpop.f32.mrb[0].mxu0
        %v3856 = vadd.f32 %v3070, %v3855
        %3857 = vmatprep.mubr.f32.mxu0 0.0
        %3858 = vmatmul.mubr.f32.gmra.mrb[0].mxu0 %v3021
        %v3859 = vpop.f32.mrb[0].mxu0
        %v3860 = vadd.f32 %v3066, %v3859
        %v3861 = vpop.f32.mrb[0].mxu0
        %v3862 = vadd.f32 %v3070, %v3861
        %3863 = vmatprep.mubr.f32.mxu0 0.0
        %3864 = vmatmul.mubr.f32.gmra.mrb[0].mxu0 %v3022
        %v3865 = vpop.f32.mrb[0].mxu0
        %v3866 = vadd.f32 %v3066, %v3865
        %v3867 = vpop.f32.mrb[0].mxu0
        %v3868 = vadd.f32 %v3070, %v3867
        %3869 = vmatprep.mubr.f32.mxu0 0.0
        %3870 = vmatmul.mubr.f32.gmra.mrb[0].mxu0 %v3023
        %v3871 = vpop.f32.mrb[0].mxu0
        %v3872 = vadd.f32 %v3066, %v3871
        %v3873 = vpop.f32.mrb[0].mxu0
        %v3874 = vadd.f32 %v3070, %v3873
        %3875 = vmatprep.mubr.f32.mxu0 0.0
        %3876 = vmatmul.mubr.f32.gmra.mrb[0].mxu0 %v3024
        %v3877 = vpop.f32.mrb[0].mxu0
        %v3878 = vadd.f32 %v3066, %v3877
        %v3879 = vpop.f32.mrb[0].mxu0
        %v3880 = vadd.f32 %v3070, %v3879
        %3881 = vmatprep.mubr.f32.mxu0 0.0
        %3882 = vmatmul.mubr.f32.gmra.mrb[0].mxu0 %v3025
        %v3883 = vpop.f32.mrb[0].mxu0
        %v3884 = vadd.f32 %v3066, %v3883
        %v3885 = vpop.f32.mrb[0].mxu0
        %v3886 = vadd.f32 %v3070, %v3885
        %3887 = vmatprep.mubr.f32.mxu0 0.0
        %3888 = vmatmul.mubr.f32.gmra.mrb[0].mxu0 %v3026
        %v3889 = vpop.f32.mrb[0].mxu0
        %v3890 = vadd.f32 %v3066, %v3889
        %v3891 = vpop.f32.mrb[0].mxu0
        %v3892 = vadd.f32 %v3070, %v3891
        %3893 = vmatprep.mubr.f32.mxu0 0.0
        %3894 = vmatmul.mubr.f32.gmra.mrb[0].mxu0 %v3027
        %v3895 = vpop.f32.mrb[0].mxu0
        %v3896 = vadd.f32 %v3066, %v3895
        %v3897 = vpop.f32.mrb[0].mxu0
        %v3898 = vadd.f32 %v3070, %v3897
        %3899 = vmatprep.mubr.f32.mxu0 0.0
        %3900 = vmatmul.mubr.f32.gmra.mrb[0].mxu0 %v3028
        %v3901 = vpop.f32.mrb[0].mxu0
        %v3902 = vadd.f32 %v3066, %v3901
        %v3903 = vpop.f32.mrb[0].mxu0
        %v3904 = vadd.f32 %v3070, %v3903
        %3905 = vdwg.mxu0
        %v3906 = vmax.f32 %v3140, 0.0
        %v3907 = vmax.f32 %v3142, 0.0
        %v3908 = vmax.f32 %v3146, 0.0
        %v3909 = vmax.f32 %v3148, 0.0
        %v3910 = vmax.f32 %v3152, 0.0
        %v3911 = vmax.f32 %v3154, 0.0
        %v3912 = vmax.f32 %v3158, 0.0
        %v3913 = vmax.f32 %v3160, 0.0
        %v3914 = vmax.f32 %v3164, 0.0
        %v3915 = vmax.f32 %v3166, 0.0
        %v3916 = vmax.f32 %v3170, 0.0
        %v3917 = vmax.f32 %v3172, 0.0
        %v3918 = vmax.f32 %v3176, 0.0
        %v3919 = vmax.f32 %v3178, 0.0
        %v3920 = vmax.f32 %v3182, 0.0
        %v3921 = vmax.f32 %v3184, 0.0
        %v3922 = vmax.f32 %v3188, 0.0
        %v3923 = vmax.f32 %v3190, 0.0
        %v3924 = vmax.f32 %v3194, 0.0
        %v3925 = vmax.f32 %v3196, 0.0
        %v3926 = vmax.f32 %v3200, 0.0
        %v3927 = vmax.f32 %v3202, 0.0
        %v3928 = vmax.f32 %v3206, 0.0
        %v3929 = vmax.f32 %v3208, 0.0
        %v3930 = vmax.f32 %v3212, 0.0
        %v3931 = vmax.f32 %v3214, 0.0
        %v3932 = vmax.f32 %v3218, 0.0
        %v3933 = vmax.f32 %v3220, 0.0
        %v3934 = vmax.f32 %v3224, 0.0
        %v3935 = vmax.f32 %v3226, 0.0
        %v3936 = vmax.f32 %v3230, 0.0
        %v3937 = vmax.f32 %v3232, 0.0
        %v3938 = vmax.f32 %v3236, 0.0
        %v3939 = vmax.f32 %v3238, 0.0
        %v3940 = vmax.f32 %v3242, 0.0
        %v3941 = vmax.f32 %v3244, 0.0
        %v3942 = vmax.f32 %v3248, 0.0
        %v3943 = vmax.f32 %v3250, 0.0
        %v3944 = vmax.f32 %v3254, 0.0
        %v3945 = vmax.f32 %v3256, 0.0
        %v3946 = vmax.f32 %v3260, 0.0
        %v3947 = vmax.f32 %v3262, 0.0
        %v3948 = vmax.f32 %v3266, 0.0
        %v3949 = vmax.f32 %v3268, 0.0
        %v3950 = vmax.f32 %v3272, 0.0
        %v3951 = vmax.f32 %v3274, 0.0
        %v3952 = vmax.f32 %v3278, 0.0
        %v3953 = vmax.f32 %v3280, 0.0
        %v3954 = vmax.f32 %v3284, 0.0
        %v3955 = vmax.f32 %v3286, 0.0
        %v3956 = vmax.f32 %v3290, 0.0
        %v3957 = vmax.f32 %v3292, 0.0
        %v3958 = vmax.f32 %v3296, 0.0
        %v3959 = vmax.f32 %v3298, 0.0
        %v3960 = vmax.f32 %v3302, 0.0
        %v3961 = vmax.f32 %v3304, 0.0
        %v3962 = vmax.f32 %v3308, 0.0
        %v3963 = vmax.f32 %v3310, 0.0
        %v3964 = vmax.f32 %v3314, 0.0
        %v3965 = vmax.f32 %v3316, 0.0
        %v3966 = vmax.f32 %v3320, 0.0
        %v3967 = vmax.f32 %v3322, 0.0
        %v3968 = vmax.f32 %v3326, 0.0
        %v3969 = vmax.f32 %v3328, 0.0
        %v3970 = vmax.f32 %v3332, 0.0
        %v3971 = vmax.f32 %v3334, 0.0
        %v3972 = vmax.f32 %v3338, 0.0
        %v3973 = vmax.f32 %v3340, 0.0
        %v3974 = vmax.f32 %v3344, 0.0
        %v3975 = vmax.f32 %v3346, 0.0
        %v3976 = vmax.f32 %v3350, 0.0
        %v3977 = vmax.f32 %v3352, 0.0
        %v3978 = vmax.f32 %v3356, 0.0
        %v3979 = vmax.f32 %v3358, 0.0
        %v3980 = vmax.f32 %v3362, 0.0
        %v3981 = vmax.f32 %v3364, 0.0
        %v3982 = vmax.f32 %v3368, 0.0
        %v3983 = vmax.f32 %v3370, 0.0
        %v3984 = vmax.f32 %v3374, 0.0
        %v3985 = vmax.f32 %v3376, 0.0
        %v3986 = vmax.f32 %v3380, 0.0
        %v3987 = vmax.f32 %v3382, 0.0
        %v3988 = vmax.f32 %v3386, 0.0
        %v3989 = vmax.f32 %v3388, 0.0
        %v3990 = vmax.f32 %v3392, 0.0
        %v3991 = vmax.f32 %v3394, 0.0
        %v3992 = vmax.f32 %v3398, 0.0
        %v3993 = vmax.f32 %v3400, 0.0
        %v3994 = vmax.f32 %v3404, 0.0
        %v3995 = vmax.f32 %v3406, 0.0
        %v3996 = vmax.f32 %v3410, 0.0
        %v3997 = vmax.f32 %v3412, 0.0
        %v3998 = vmax.f32 %v3416, 0.0
        %v3999 = vmax.f32 %v3418, 0.0
        %v4000 = vmax.f32 %v3422, 0.0
        %v4001 = vmax.f32 %v3424, 0.0
        %v4002 = vmax.f32 %v3428, 0.0
        %v4003 = vmax.f32 %v3430, 0.0
        %v4004 = vmax.f32 %v3434, 0.0
        %v4005 = vmax.f32 %v3436, 0.0
        %v4006 = vmax.f32 %v3440, 0.0
        %v4007 = vmax.f32 %v3442, 0.0
        %v4008 = vmax.f32 %v3446, 0.0
        %v4009 = vmax.f32 %v3448, 0.0
        %v4010 = vmax.f32 %v3452, 0.0
        %v4011 = vmax.f32 %v3454, 0.0
        %v4012 = vmax.f32 %v3458, 0.0
        %v4013 = vmax.f32 %v3460, 0.0
        %v4014 = vmax.f32 %v3464, 0.0
        %v4015 = vmax.f32 %v3466, 0.0
        %v4016 = vmax.f32 %v3470, 0.0
        %v4017 = vmax.f32 %v3472, 0.0
        %v4018 = vmax.f32 %v3476, 0.0
        %v4019 = vmax.f32 %v3478, 0.0
        %v4020 = vmax.f32 %v3482, 0.0
        %v4021 = vmax.f32 %v3484, 0.0
        %v4022 = vmax.f32 %v3488, 0.0
        %v4023 = vmax.f32 %v3490, 0.0
        %v4024 = vmax.f32 %v3494, 0.0
        %v4025 = vmax.f32 %v3496, 0.0
        %v4026 = vmax.f32 %v3500, 0.0
        %v4027 = vmax.f32 %v3502, 0.0
        %v4028 = vmax.f32 %v3506, 0.0
        %v4029 = vmax.f32 %v3508, 0.0
        %v4030 = vmax.f32 %v3512, 0.0
        %v4031 = vmax.f32 %v3514, 0.0
        %v4032 = vmax.f32 %v3518, 0.0
        %v4033 = vmax.f32 %v3520, 0.0
        %v4034 = vmax.f32 %v3524, 0.0
        %v4035 = vmax.f32 %v3526, 0.0
        %v4036 = vmax.f32 %v3530, 0.0
        %v4037 = vmax.f32 %v3532, 0.0
        %v4038 = vmax.f32 %v3536, 0.0
        %v4039 = vmax.f32 %v3538, 0.0
        %v4040 = vmax.f32 %v3542, 0.0
        %v4041 = vmax.f32 %v3544, 0.0
        %v4042 = vmax.f32 %v3548, 0.0
        %v4043 = vmax.f32 %v3550, 0.0
        %v4044 = vmax.f32 %v3554, 0.0
        %v4045 = vmax.f32 %v3556, 0.0
        %v4046 = vmax.f32 %v3560, 0.0
        %v4047 = vmax.f32 %v3562, 0.0
        %v4048 = vmax.f32 %v3566, 0.0
        %v4049 = vmax.f32 %v3568, 0.0
        %v4050 = vmax.f32 %v3572, 0.0
        %v4051 = vmax.f32 %v3574, 0.0
        %v4052 = vmax.f32 %v3578, 0.0
        %v4053 = vmax.f32 %v3580, 0.0
        %v4054 = vmax.f32 %v3584, 0.0
        %v4055 = vmax.f32 %v3586, 0.0
        %v4056 = vmax.f32 %v3590, 0.0
        %v4057 = vmax.f32 %v3592, 0.0
        %v4058 = vmax.f32 %v3596, 0.0
        %v4059 = vmax.f32 %v3598, 0.0
        %v4060 = vmax.f32 %v3602, 0.0
        %v4061 = vmax.f32 %v3604, 0.0
        %v4062 = vmax.f32 %v3608, 0.0
        %v4063 = vmax.f32 %v3610, 0.0
        %v4064 = vmax.f32 %v3614, 0.0
        %v4065 = vmax.f32 %v3616, 0.0
        %v4066 = vmax.f32 %v3620, 0.0
        %v4067 = vmax.f32 %v3622, 0.0
        %v4068 = vmax.f32 %v3626, 0.0
        %v4069 = vmax.f32 %v3628, 0.0
        %v4070 = vmax.f32 %v3632, 0.0
        %v4071 = vmax.f32 %v3634, 0.0
        %v4072 = vmax.f32 %v3638, 0.0
        %v4073 = vmax.f32 %v3640, 0.0
        %v4074 = vmax.f32 %v3644, 0.0
        %v4075 = vmax.f32 %v3646, 0.0
        %v4076 = vmax.f32 %v3650, 0.0
        %v4077 = vmax.f32 %v3652, 0.0
        %v4078 = vmax.f32 %v3656, 0.0
        %v4079 = vmax.f32 %v3658, 0.0
        %v4080 = vmax.f32 %v3662, 0.0
        %v4081 = vmax.f32 %v3664, 0.0
        %v4082 = vmax.f32 %v3668, 0.0
        %v4083 = vmax.f32 %v3670, 0.0
        %v4084 = vmax.f32 %v3674, 0.0
        %v4085 = vmax.f32 %v3676, 0.0
        %v4086 = vmax.f32 %v3680, 0.0
        %v4087 = vmax.f32 %v3682, 0.0
        %v4088 = vmax.f32 %v3686, 0.0
        %v4089 = vmax.f32 %v3688, 0.0
        %v4090 = vmax.f32 %v3692, 0.0
        %v4091 = vmax.f32 %v3694, 0.0
        %v4092 = vmax.f32 %v3698, 0.0
        %v4093 = vmax.f32 %v3700, 0.0
        %v4094 = vmax.f32 %v3704, 0.0
        %v4095 = vmax.f32 %v3706, 0.0
        %v4096 = vmax.f32 %v3710, 0.0
        %v4097 = vmax.f32 %v3712, 0.0
        %v4098 = vmax.f32 %v3716, 0.0
        %v4099 = vmax.f32 %v3718, 0.0
        %v4100 = vmax.f32 %v3722, 0.0
        %v4101 = vmax.f32 %v3724, 0.0
        %v4102 = vmax.f32 %v3728, 0.0
        %v4103 = vmax.f32 %v3730, 0.0
        %v4104 = vmax.f32 %v3734, 0.0
        %v4105 = vmax.f32 %v3736, 0.0
        %v4106 = vmax.f32 %v3740, 0.0
        %v4107 = vmax.f32 %v3742, 0.0
        %v4108 = vmax.f32 %v3746, 0.0
        %v4109 = vmax.f32 %v3748, 0.0
        %v4110 = vmax.f32 %v3752, 0.0
        %v4111 = vmax.f32 %v3754, 0.0
        %v4112 = vmax.f32 %v3758, 0.0
        %v4113 = vmax.f32 %v3760, 0.0
        %v4114 = vmax.f32 %v3764, 0.0
        %v4115 = vmax.f32 %v3766, 0.0
        %v4116 = vmax.f32 %v3770, 0.0
        %v4117 = vmax.f32 %v3772, 0.0
        %v4118 = vmax.f32 %v3776, 0.0
        %v4119 = vmax.f32 %v3778, 0.0
        %v4120 = vmax.f32 %v3782, 0.0
        %v4121 = vmax.f32 %v3784, 0.0
        %v4122 = vmax.f32 %v3788, 0.0
        %v4123 = vmax.f32 %v3790, 0.0
        %v4124 = vmax.f32 %v3794, 0.0
        %v4125 = vmax.f32 %v3796, 0.0
        %v4126 = vmax.f32 %v3800, 0.0
        %v4127 = vmax.f32 %v3802, 0.0
        %v4128 = vmax.f32 %v3806, 0.0
        %v4129 = vmax.f32 %v3808, 0.0
        %v4130 = vmax.f32 %v3812, 0.0
        %v4131 = vmax.f32 %v3814, 0.0
        %v4132 = vmax.f32 %v3818, 0.0
        %v4133 = vmax.f32 %v3820, 0.0
        %v4134 = vmax.f32 %v3824, 0.0
        %v4135 = vmax.f32 %v3826, 0.0
        %v4136 = vmax.f32 %v3830, 0.0
        %v4137 = vmax.f32 %v3832, 0.0
        %v4138 = vmax.f32 %v3836, 0.0
        %v4139 = vmax.f32 %v3838, 0.0
        %v4140 = vmax.f32 %v3842, 0.0
        %v4141 = vmax.f32 %v3844, 0.0
        %v4142 = vmax.f32 %v3848, 0.0
        %v4143 = vmax.f32 %v3850, 0.0
        %v4144 = vmax.f32 %v3854, 0.0
        %v4145 = vmax.f32 %v3856, 0.0
        %v4146 = vmax.f32 %v3860, 0.0
        %v4147 = vmax.f32 %v3862, 0.0
        %v4148 = vmax.f32 %v3866, 0.0
        %v4149 = vmax.f32 %v3868, 0.0
        %v4150 = vmax.f32 %v3872, 0.0
        %v4151 = vmax.f32 %v3874, 0.0
        %v4152 = vmax.f32 %v3878, 0.0
        %v4153 = vmax.f32 %v3880, 0.0
        %v4154 = vmax.f32 %v3884, 0.0
        %v4155 = vmax.f32 %v3886, 0.0
        %v4156 = vmax.f32 %v3890, 0.0
        %v4157 = vmax.f32 %v3892, 0.0
        %v4158 = vmax.f32 %v3896, 0.0
        %v4159 = vmax.f32 %v3898, 0.0
        %v4160 = vmax.f32 %v3902, 0.0
        %v4161 = vmax.f32 %v3904, 0.0
        %v4162 = vmax.f32 %v3906, %v3910
        %v4163 = vmax.f32 %v3908, %v3912
        %v4164 = vmax.f32 %v4162, %v3914
        %v4165 = vmax.f32 %v4163, %v3916
        %v4166 = vmax.f32 %v4164, %v3918
        %v4167 = vmax.f32 %v4165, %v3920
        %v4168 = vmax.f32 %v4166, %v3922
        %v4169 = vmax.f32 %v4167, %v3924
        %v4170 = vmax.f32 %v4168, %v3926
        %v4171 = vmax.f32 %v4169, %v3928
        %v4172 = vmax.f32 %v4170, %v3930
        %v4173 = vmax.f32 %v4171, %v3932
        %v4174 = vmax.f32 %v4172, %v3934
        %v4175 = vmax.f32 %v4173, %v3936
        %v4176 = vmax.f32 %v4174, %v3938
        %v4177 = vmax.f32 %v4175, %v3940
        %v4178 = vmax.f32 %v4176, %v3942
        %v4179 = vmax.f32 %v4177, %v3944
        %v4180 = vmax.f32 %v4178, %v3946
        %v4181 = vmax.f32 %v4179, %v3948
        %v4182 = vmax.f32 %v4180, %v3950
        %v4183 = vmax.f32 %v4181, %v3952
        %v4184 = vmax.f32 %v4182, %v3954
        %v4185 = vmax.f32 %v4183, %v3956
        %v4186 = vmax.f32 %v4184, %v3958
        %v4187 = vmax.f32 %v4185, %v3960
        %v4188 = vmax.f32 %v4186, %v3962
        %v4189 = vmax.f32 %v4187, %v3964
        %v4190 = vmax.f32 %v4188, %v3966
        %v4191 = vmax.f32 %v4189, %v3968
        %v4192 = vmax.f32 %v4190, %v3970
        %v4193 = vmax.f32 %v4191, %v3972
        %v4194 = vmax.f32 %v4192, %v3974
        %v4195 = vmax.f32 %v4193, %v3976
        %v4196 = vmax.f32 %v4194, %v3978
        %v4197 = vmax.f32 %v4195, %v3980
        %v4198 = vmax.f32 %v4196, %v3982
        %v4199 = vmax.f32 %v4197, %v3984
        %v4200 = vmax.f32 %v4198, %v3986
        %v4201 = vmax.f32 %v4199, %v3988
        %v4202 = vmax.f32 %v4200, %v3990
        %v4203 = vmax.f32 %v4201, %v3992
        %v4204 = vmax.f32 %v4202, %v3994
        %v4205 = vmax.f32 %v4203, %v3996
        %v4206 = vmax.f32 %v4204, %v3998
        %v4207 = vmax.f32 %v4205, %v4000
        %v4208 = vmax.f32 %v4206, %v4002
        %v4209 = vmax.f32 %v4207, %v4004
        %v4210 = vmax.f32 %v4208, %v4006
        %v4211 = vmax.f32 %v4209, %v4008
        %v4212 = vmax.f32 %v4210, %v4010
        %v4213 = vmax.f32 %v4211, %v4012
        %v4214 = vmax.f32 %v4212, %v4014
        %v4215 = vmax.f32 %v4213, %v4016
        %v4216 = vmax.f32 %v4214, %v4018
        %v4217 = vmax.f32 %v4215, %v4020
        %v4218 = vmax.f32 %v4216, %v4022
        %v4219 = vmax.f32 %v4217, %v4024
        %v4220 = vmax.f32 %v4218, %v4026
        %v4221 = vmax.f32 %v4219, %v4028
        %v4222 = vmax.f32 %v4220, %v4030
        %v4223 = vmax.f32 %v4221, %v4032
        %v4224 = vmax.f32 %v4222, %v4034
        %v4225 = vmax.f32 %v4223, %v4036
        %v4226 = vmax.f32 %v4224, %v4038
        %v4227 = vmax.f32 %v4225, %v4040
        %v4228 = vmax.f32 %v4226, %v4042
        %v4229 = vmax.f32 %v4227, %v4044
        %v4230 = vmax.f32 %v4228, %v4046
        %v4231 = vmax.f32 %v4229, %v4048
        %v4232 = vmax.f32 %v4230, %v4050
        %v4233 = vmax.f32 %v4231, %v4052
        %v4234 = vmax.f32 %v4232, %v4054
        %v4235 = vmax.f32 %v4233, %v4056
        %v4236 = vmax.f32 %v4234, %v4058
        %v4237 = vmax.f32 %v4235, %v4060
        %v4238 = vmax.f32 %v4236, %v4062
        %v4239 = vmax.f32 %v4237, %v4064
        %v4240 = vmax.f32 %v4238, %v4066
        %v4241 = vmax.f32 %v4239, %v4068
        %v4242 = vmax.f32 %v4240, %v4070
        %v4243 = vmax.f32 %v4241, %v4072
        %v4244 = vmax.f32 %v4242, %v4074
        %v4245 = vmax.f32 %v4243, %v4076
        %v4246 = vmax.f32 %v4244, %v4078
        %v4247 = vmax.f32 %v4245, %v4080
        %v4248 = vmax.f32 %v4246, %v4082
        %v4249 = vmax.f32 %v4247, %v4084
        %v4250 = vmax.f32 %v4248, %v4086
        %v4251 = vmax.f32 %v4249, %v4088
        %v4252 = vmax.f32 %v4250, %v4090
        %v4253 = vmax.f32 %v4251, %v4092
        %v4254 = vmax.f32 %v4252, %v4094
        %v4255 = vmax.f32 %v4253, %v4096
        %v4256 = vmax.f32 %v4254, %v4098
        %v4257 = vmax.f32 %v4255, %v4100
        %v4258 = vmax.f32 %v4256, %v4102
        %v4259 = vmax.f32 %v4257, %v4104
        %v4260 = vmax.f32 %v4258, %v4106
        %v4261 = vmax.f32 %v4259, %v4108
        %v4262 = vmax.f32 %v4260, %v4110
        %v4263 = vmax.f32 %v4261, %v4112
        %v4264 = vmax.f32 %v4262, %v4114
        %v4265 = vmax.f32 %v4263, %v4116
        %v4266 = vmax.f32 %v4264, %v4118
        %v4267 = vmax.f32 %v4265, %v4120
        %v4268 = vmax.f32 %v4266, %v4122
        %v4269 = vmax.f32 %v4267, %v4124
        %v4270 = vmax.f32 %v4268, %v4126
        %v4271 = vmax.f32 %v4269, %v4128
        %v4272 = vmax.f32 %v4270, %v4130
        %v4273 = vmax.f32 %v4271, %v4132
        %v4274 = vmax.f32 %v4272, %v4134
        %v4275 = vmax.f32 %v4273, %v4136
        %v4276 = vmax.f32 %v4274, %v4138
        %v4277 = vmax.f32 %v4275, %v4140
        %v4278 = vmax.f32 %v4276, %v4142
        %v4279 = vmax.f32 %v4277, %v4144
        %v4280 = vmax.f32 %v4278, %v4146
        %v4281 = vmax.f32 %v4279, %v4148
        %v4282 = vmax.f32 %v4280, %v4150
        %v4283 = vmax.f32 %v4281, %v4152
        %v4284 = vmax.f32 %v4282, %v4154
        %v4285 = vmax.f32 %v4283, %v4156
        %v4286 = vmax.f32 %v4284, %v4158
        %v4287 = vmax.f32 %v4285, %v4160
        %v4288 = vmax.f32 %v4286, %v4287
        %v4289 = vmax.f32 %v3907, %v3911
        %v4290 = vmax.f32 %v3909, %v3913
        %v4291 = vmax.f32 %v4289, %v3915
        %v4292 = vmax.f32 %v4290, %v3917
        %v4293 = vmax.f32 %v4291, %v3919
        %v4294 = vmax.f32 %v4292, %v3921
        %v4295 = vmax.f32 %v4293, %v3923
        %v4296 = vmax.f32 %v4294, %v3925
        %v4297 = vmax.f32 %v4295, %v3927
        %v4298 = vmax.f32 %v4296, %v3929
        %v4299 = vmax.f32 %v4297, %v3931
        %v4300 = vmax.f32 %v4298, %v3933
        %v4301 = vmax.f32 %v4299, %v3935
        %v4302 = vmax.f32 %v4300, %v3937
        %v4303 = vmax.f32 %v4301, %v3939
        %v4304 = vmax.f32 %v4302, %v3941
        %v4305 = vmax.f32 %v4303, %v3943
        %v4306 = vmax.f32 %v4304, %v3945
        %v4307 = vmax.f32 %v4305, %v3947
        %v4308 = vmax.f32 %v4306, %v3949
        %v4309 = vmax.f32 %v4307, %v3951
        %v4310 = vmax.f32 %v4308, %v3953
        %v4311 = vmax.f32 %v4309, %v3955
        %v4312 = vmax.f32 %v4310, %v3957
        %v4313 = vmax.f32 %v4311, %v3959
        %v4314 = vmax.f32 %v4312, %v3961
        %v4315 = vmax.f32 %v4313, %v3963
        %v4316 = vmax.f32 %v4314, %v3965
        %v4317 = vmax.f32 %v4315, %v3967
        %v4318 = vmax.f32 %v4316, %v3969
        %v4319 = vmax.f32 %v4317, %v3971
        %v4320 = vmax.f32 %v4318, %v3973
        %v4321 = vmax.f32 %v4319, %v3975
        %v4322 = vmax.f32 %v4320, %v3977
        %v4323 = vmax.f32 %v4321, %v3979
        %v4324 = vmax.f32 %v4322, %v3981
        %v4325 = vmax.f32 %v4323, %v3983
        %v4326 = vmax.f32 %v4324, %v3985
        %v4327 = vmax.f32 %v4325, %v3987
        %v4328 = vmax.f32 %v4326, %v3989
        %v4329 = vmax.f32 %v4327, %v3991
        %v4330 = vmax.f32 %v4328, %v3993
        %v4331 = vmax.f32 %v4329, %v3995
        %v4332 = vmax.f32 %v4330, %v3997
        %v4333 = vmax.f32 %v4331, %v3999
        %v4334 = vmax.f32 %v4332, %v4001
        %v4335 = vmax.f32 %v4333, %v4003
        %v4336 = vmax.f32 %v4334, %v4005
        %v4337 = vmax.f32 %v4335, %v4007
        %v4338 = vmax.f32 %v4336, %v4009
        %v4339 = vmax.f32 %v4337, %v4011
        %v4340 = vmax.f32 %v4338, %v4013
        %v4341 = vmax.f32 %v4339, %v4015
        %v4342 = vmax.f32 %v4340, %v4017
        %v4343 = vmax.f32 %v4341, %v4019
        %v4344 = vmax.f32 %v4342, %v4021
        %v4345 = vmax.f32 %v4343, %v4023
        %v4346 = vmax.f32 %v4344, %v4025
        %v4347 = vmax.f32 %v4345, %v4027
        %v4348 = vmax.f32 %v4346, %v4029
        %v4349 = vmax.f32 %v4347, %v4031
        %v4350 = vmax.f32 %v4348, %v4033
        %v4351 = vmax.f32 %v4349, %v4035
        %v4352 = vmax.f32 %v4350, %v4037
        %v4353 = vmax.f32 %v4351, %v4039
        %v4354 = vmax.f32 %v4352, %v4041
        %v4355 = vmax.f32 %v4353, %v4043
        %v4356 = vmax.f32 %v4354, %v4045
        %v4357 = vmax.f32 %v4355, %v4047
        %v4358 = vmax.f32 %v4356, %v4049
        %v4359 = vmax.f32 %v4357, %v4051
        %v4360 = vmax.f32 %v4358, %v4053
        %v4361 = vmax.f32 %v4359, %v4055
        %v4362 = vmax.f32 %v4360, %v4057
        %v4363 = vmax.f32 %v4361, %v4059
        %v4364 = vmax.f32 %v4362, %v4061
        %v4365 = vmax.f32 %v4363, %v4063
        %v4366 = vmax.f32 %v4364, %v4065
        %v4367 = vmax.f32 %v4365, %v4067
        %v4368 = vmax.f32 %v4366, %v4069
        %v4369 = vmax.f32 %v4367, %v4071
        %v4370 = vmax.f32 %v4368, %v4073
        %v4371 = vmax.f32 %v4369, %v4075
        %v4372 = vmax.f32 %v4370, %v4077
        %v4373 = vmax.f32 %v4371, %v4079
        %v4374 = vmax.f32 %v4372, %v4081
        %v4375 = vmax.f32 %v4373, %v4083
        %v4376 = vmax.f32 %v4374, %v4085
        %v4377 = vmax.f32 %v4375, %v4087
        %v4378 = vmax.f32 %v4376, %v4089
        %v4379 = vmax.f32 %v4377, %v4091
        %v4380 = vmax.f32 %v4378, %v4093
        %v4381 = vmax.f32 %v4379, %v4095
        %v4382 = vmax.f32 %v4380, %v4097
        %v4383 = vmax.f32 %v4381, %v4099
        %v4384 = vmax.f32 %v4382, %v4101
        %v4385 = vmax.f32 %v4383, %v4103
        %v4386 = vmax.f32 %v4384, %v4105
        %v4387 = vmax.f32 %v4385, %v4107
        %v4388 = vmax.f32 %v4386, %v4109
        %v4389 = vmax.f32 %v4387, %v4111
        %v4390 = vmax.f32 %v4388, %v4113
        %v4391 = vmax.f32 %v4389, %v4115
        %v4392 = vmax.f32 %v4390, %v4117
        %v4393 = vmax.f32 %v4391, %v4119
        %v4394 = vmax.f32 %v4392, %v4121
        %v4395 = vmax.f32 %v4393, %v4123
        %v4396 = vmax.f32 %v4394, %v4125
        %v4397 = vmax.f32 %v4395, %v4127
        %v4398 = vmax.f32 %v4396, %v4129
        %v4399 = vmax.f32 %v4397, %v4131
        %v4400 = vmax.f32 %v4398, %v4133
        %v4401 = vmax.f32 %v4399, %v4135
        %v4402 = vmax.f32 %v4400, %v4137
        %v4403 = vmax.f32 %v4401, %v4139
        %v4404 = vmax.f32 %v4402, %v4141
        %v4405 = vmax.f32 %v4403, %v4143
        %v4406 = vmax.f32 %v4404, %v4145
        %v4407 = vmax.f32 %v4405, %v4147
        %v4408 = vmax.f32 %v4406, %v4149
        %v4409 = vmax.f32 %v4407, %v4151
        %v4410 = vmax.f32 %v4408, %v4153
        %v4411 = vmax.f32 %v4409, %v4155
        %v4412 = vmax.f32 %v4410, %v4157
        %v4413 = vmax.f32 %v4411, %v4159
        %v4414 = vmax.f32 %v4412, %v4161
        %v4415 = vmax.f32 %v4413, %v4414
        %v4416 = vrot.slane %v4288, 4
        %v4417 = vmax.f32 %v4288, %v4416
        %v4418 = vrot.slane %v4417, 2
        %v4419 = vmax.f32 %v4417, %v4418
        %v4420 = vrot.slane %v4419, 1
        %v4421 = vmax.f32 %v4419, %v4420
        %v4422 = vrot.slane %v4415, 4
        %v4423 = vmax.f32 %v4415, %v4422
        %v4424 = vrot.slane %v4423, 2
        %v4425 = vmax.f32 %v4423, %v4424
        %v4426 = vrot.slane %v4425, 1
        %v4427 = vmax.f32 %v4425, %v4426
        %v4428 = vld [vmem:[%s7] sm:$0xff]
        %v4429 = vld [vmem:[%s7 + $0x8] sm:$0xff]
        %v4430 = vld [vmem:[%s7 + $0x10] sm:$0xff]
        %v4431 = vld [vmem:[%s7 + $0x18] sm:$0xff]
        %v4432 = vld [vmem:[%s7 + $0x20] sm:$0xff]
        %v4433 = vld [vmem:[%s7 + $0x28] sm:$0xff]
        %v4434 = vld [vmem:[%s7 + $0x30] sm:$0xff]
        %v4435 = vld [vmem:[%s7 + $0x38] sm:$0xff]
        %v4436 = vld [vmem:[%s7 + $0x40] sm:$0xff]
        %v4437 = vld [vmem:[%s7 + $0x48] sm:$0xff]
        %v4438 = vld [vmem:[%s7 + $0x50] sm:$0xff]
        %v4439 = vld [vmem:[%s7 + $0x58] sm:$0xff]
        %v4440 = vld [vmem:[%s7 + $0x60] sm:$0xff]
        %v4441 = vld [vmem:[%s7 + $0x68] sm:$0xff]
        %v4442 = vld [vmem:[%s7 + $0x70] sm:$0xff]
        %v4443 = vld [vmem:[%s7 + $0x78] sm:$0xff]
        %v4444 = vld [vmem:[%s7 + $0x80] sm:$0xff]
        %v4445 = vld [vmem:[%s7 + $0x88] sm:$0xff]
        %v4446 = vld [vmem:[%s7 + $0x90] sm:$0xff]
        %v4447 = vld [vmem:[%s7 + $0x98] sm:$0xff]
        %v4448 = vld [vmem:[%s7 + $0xa0] sm:$0xff]
        %v4449 = vld [vmem:[%s7 + $0xa8] sm:$0xff]
        %v4450 = vld [vmem:[%s7 + $0xb0] sm:$0xff]
        %v4451 = vld [vmem:[%s7 + $0xb8] sm:$0xff]
        %v4452 = vld [vmem:[%s7 + $0xc0] sm:$0xff]
        %v4453 = vld [vmem:[%s7 + $0xc8] sm:$0xff]
        %v4454 = vld [vmem:[%s7 + $0xd0] sm:$0xff]
        %v4455 = vld [vmem:[%s7 + $0xd8] sm:$0xff]
        %v4456 = vld [vmem:[%s7 + $0xe0] sm:$0xff]
        %v4457 = vld [vmem:[%s7 + $0xe8] sm:$0xff]
        %v4458 = vld [vmem:[%s7 + $0xf0] sm:$0xff]
        %v4459 = vld [vmem:[%s7 + $0xf8] sm:$0xff]
        %v4460 = vld [vmem:[%s8] sm:$0x1]
        %4461 = vmatprep.subr.mxu0 0.0
        %4462 = vmatpush1.msra.mxu0 %v4428
        %4463 = vmatprep.subr.mxu0 0.0
        %4464 = vmatpush1.msra.mxu0 %v4429
        %4465 = vmatprep.subr.mxu0 0.0
        %4466 = vmatpush1.msra.mxu0 %v4430
        %4467 = vmatprep.subr.mxu0 0.0
        %4468 = vmatpush1.msra.mxu0 %v4431
        %4469 = vmatprep.subr.mxu0 0.0
        %4470 = vmatpush1.msra.mxu0 %v4432
        %4471 = vmatprep.subr.mxu0 0.0
        %4472 = vmatpush1.msra.mxu0 %v4433
        %4473 = vmatprep.subr.mxu0 0.0
        %4474 = vmatpush1.msra.mxu0 %v4434
        %4475 = vmatprep.subr.mxu0 0.0
        %4476 = vmatpush1.msra.mxu0 %v4435
        %4477 = vmatprep.subr.mxu0 0.0
        %4478 = vmatpush1.msra.mxu0 %v4436
        %4479 = vmatprep.subr.mxu0 0.0
        %4480 = vmatpush1.msra.mxu0 %v4437
        %4481 = vmatprep.subr.mxu0 0.0
        %4482 = vmatpush1.msra.mxu0 %v4438
        %4483 = vmatprep.subr.mxu0 0.0
        %4484 = vmatpush1.msra.mxu0 %v4439
        %4485 = vmatprep.subr.mxu0 0.0
        %4486 = vmatpush1.msra.mxu0 %v4440
        %4487 = vmatprep.subr.mxu0 0.0
        %4488 = vmatpush1.msra.mxu0 %v4441
        %4489 = vmatprep.subr.mxu0 0.0
        %4490 = vmatpush1.msra.mxu0 %v4442
        %4491 = vmatprep.subr.mxu0 0.0
        %4492 = vmatpush1.msra.mxu0 %v4443
        %4493 = vmatprep.subr.mxu0 0.0
        %4494 = vmatpush1.msra.mxu0 %v4444
        %4495 = vmatprep.subr.mxu0 0.0
        %4496 = vmatpush1.msra.mxu0 %v4445
        %4497 = vmatprep.subr.mxu0 0.0
        %4498 = vmatpush1.msra.mxu0 %v4446
        %4499 = vmatprep.subr.mxu0 0.0
        %4500 = vmatpush1.msra.mxu0 %v4447
        %4501 = vmatprep.subr.mxu0 0.0
        %4502 = vmatpush1.msra.mxu0 %v4448
        %4503 = vmatprep.subr.mxu0 0.0
        %4504 = vmatpush1.msra.mxu0 %v4449
        %4505 = vmatprep.subr.mxu0 0.0
        %4506 = vmatpush1.msra.mxu0 %v4450
        %4507 = vmatprep.subr.mxu0 0.0
        %4508 = vmatpush1.msra.mxu0 %v4451
        %4509 = vmatprep.subr.mxu0 0.0
        %4510 = vmatpush1.msra.mxu0 %v4452
        %4511 = vmatprep.subr.mxu0 0.0
        %4512 = vmatpush1.msra.mxu0 %v4453
        %4513 = vmatprep.subr.mxu0 0.0
        %4514 = vmatpush1.msra.mxu0 %v4454
        %4515 = vmatprep.subr.mxu0 0.0
        %4516 = vmatpush1.msra.mxu0 %v4455
        %4517 = vmatprep.subr.mxu0 0.0
        %4518 = vmatpush1.msra.mxu0 %v4456
        %4519 = vmatprep.subr.mxu0 0.0
        %4520 = vmatpush1.msra.mxu0 %v4457
        %4521 = vmatprep.subr.mxu0 0.0
        %4522 = vmatpush1.msra.mxu0 %v4458
        %4523 = vmatprep.subr.mxu0 0.0
        %4524 = vmatpush1.msra.mxu0 %v4459
        %4525 = vmatprep.mubr.f32.mxu0 %v4427
        %4526 = vmatmul.mubr.f32.gmra.mrb[0].mxu0 %v4421
        %v4527 = vpop.f32.mrb[0].mxu0
        %v4528 = vadd.f32 %v4460, %v4527
        %v4529 = vpop.f32.mrb[0].mxu0
        %4530 = vdwg.mxu0
        %v4531 = vmax.f32 %v4528, 0.0
        %v4532 = vld [vmem:[%s9] sm:$0xff]
        %v4533 = vld [vmem:[%s9 + $0x8] sm:$0xff]
        %v4534 = vld [vmem:[%s9 + $0x10] sm:$0xff]
        %v4535 = vld [vmem:[%s9 + $0x18] sm:$0xff]
        %v4536 = vld [vmem:[%s9 + $0x20] sm:$0xff]
        %v4537 = vld [vmem:[%s9 + $0x28] sm:$0xff]
        %v4538 = vld [vmem:[%s9 + $0x30] sm:$0xff]
        %v4539 = vld [vmem:[%s9 + $0x38] sm:$0xff]
        %v4540 = vld [vmem:[%s9 + $0x40] sm:$0xff]
        %v4541 = vld [vmem:[%s9 + $0x48] sm:$0xff]
        %v4542 = vld [vmem:[%s9 + $0x50] sm:$0xff]
        %v4543 = vld [vmem:[%s9 + $0x58] sm:$0xff]
        %v4544 = vld [vmem:[%s9 + $0x60] sm:$0xff]
        %v4545 = vld [vmem:[%s9 + $0x68] sm:$0xff]
        %v4546 = vld [vmem:[%s9 + $0x70] sm:$0xff]
        %v4547 = vld [vmem:[%s9 + $0x78] sm:$0xff]
        %v4548 = vld [vmem:[%s10] sm:$0x1]
        %4549 = vmatprep.subr.mxu0 0.0
        %4550 = vmatpush1.msra.mxu0 %v4532
        %4551 = vmatprep.subr.mxu0 0.0
        %4552 = vmatpush1.msra.mxu0 %v4533
        %4553 = vmatprep.subr.mxu0 0.0
        %4554 = vmatpush1.msra.mxu0 %v4534
        %4555 = vmatprep.subr.mxu0 0.0
        %4556 = vmatpush1.msra.mxu0 %v4535
        %4557 = vmatprep.subr.mxu0 0.0
        %4558 = vmatpush1.msra.mxu0 %v4536
        %4559 = vmatprep.subr.mxu0 0.0
        %4560 = vmatpush1.msra.mxu0 %v4537
        %4561 = vmatprep.subr.mxu0 0.0
        %4562 = vmatpush1.msra.mxu0 %v4538
        %4563 = vmatprep.subr.mxu0 0.0
        %4564 = vmatpush1.msra.mxu0 %v4539
        %4565 = vmatprep.subr.mxu0 0.0
        %4566 = vmatpush1.msra.mxu0 %v4540
        %4567 = vmatprep.subr.mxu0 0.0
        %4568 = vmatpush1.msra.mxu0 %v4541
        %4569 = vmatprep.subr.mxu0 0.0
        %4570 = vmatpush1.msra.mxu0 %v4542
        %4571 = vmatprep.subr.mxu0 0.0
        %4572 = vmatpush1.msra.mxu0 %v4543
        %4573 = vmatprep.subr.mxu0 0.0
        %4574 = vmatpush1.msra.mxu0 %v4544
        %4575 = vmatprep.subr.mxu0 0.0
        %4576 = vmatpush1.msra.mxu0 %v4545
        %4577 = vmatprep.subr.mxu0 0.0
        %4578 = vmatpush1.msra.mxu0 %v4546
        %4579 = vmatprep.subr.mxu0 0.0
        %4580 = vmatpush1.msra.mxu0 %v4547
        %4581 = vmatprep.subr.mxu0 0.0
        %4582 = vmatpush1.msra.mxu0 0.0
        %4583 = vmatprep.subr.mxu0 0.0
        %4584 = vmatpush1.msra.mxu0 0.0
        %4585 = vmatprep.subr.mxu0 0.0
        %4586 = vmatpush1.msra.mxu0 0.0
        %4587 = vmatprep.subr.mxu0 0.0
        %4588 = vmatpush1.msra.mxu0 0.0
        %4589 = vmatprep.subr.mxu0 0.0
        %4590 = vmatpush1.msra.mxu0 0.0
        %4591 = vmatprep.subr.mxu0 0.0
        %4592 = vmatpush1.msra.mxu0 0.0
        %4593 = vmatprep.subr.mxu0 0.0
        %4594 = vmatpush1.msra.mxu0 0.0
        %4595 = vmatprep.subr.mxu0 0.0
        %4596 = vmatpush1.msra.mxu0 0.0
        %4597 = vmatprep.subr.mxu0 0.0
        %4598 = vmatpush1.msra.mxu0 0.0
        %4599 = vmatprep.subr.mxu0 0.0
        %4600 = vmatpush1.msra.mxu0 0.0
        %4601 = vmatprep.subr.mxu0 0.0
        %4602 = vmatpush1.msra.mxu0 0.0
        %4603 = vmatprep.subr.mxu0 0.0
        %4604 = vmatpush1.msra.mxu0 0.0
        %4605 = vmatprep.subr.mxu0 0.0
        %4606 = vmatpush1.msra.mxu0 0.0
        %4607 = vmatprep.subr.mxu0 0.0
        %4608 = vmatpush1.msra.mxu0 0.0
        %4609 = vmatprep.subr.mxu0 0.0
        %4610 = vmatpush1.msra.mxu0 0.0
        %4611 = vmatprep.subr.mxu0 0.0
        %4612 = vmatpush1.msra.mxu0 0.0
        %4613 = vmatprep.mubr.f32.mxu0 0.0
        %4614 = vmatmul.mubr.f32.gmra.mrb[0].mxu0 %v4531
        %v4615 = vpop.f32.mrb[0].mxu0
        %v4616 = vadd.f32 %v4548, %v4615
        %v4617 = vpop.f32.mrb[0].mxu0
        %4618 = vdwg.mxu0
        %v4619 = vmax.f32 %v4616, 0.0
        %v4620 = vld [vmem:[%s11] sm:$0xff]
        %v4621 = vld [vmem:[%s11 + $0x8] sm:$0xff]
        %v4622 = vld [vmem:[%s11 + $0x10] sm:$0xff]
        %v4623 = vld [vmem:[%s11 + $0x18] sm:$0xff]
        %v4624 = vld [vmem:[%s11 + $0x20] sm:$0xff]
        %v4625 = vld [vmem:[%s11 + $0x28] sm:$0xff]
        %v4626 = vld [vmem:[%s11 + $0x30] sm:$0xff]
        %v4627 = vld [vmem:[%s11 + $0x38] sm:$0xff]
        %v4628 = vld [vmem:[%s12] sm:$0x1]
        %v4630 = vsel %vm1811, %v4619, 0
        %4632 = vmatprep.subr.mxu0 0.0
        %4633 = vmatpush1.msra.mxu0 %v4620
        %4634 = vmatprep.subr.mxu0 0.0
        %4635 = vmatpush1.msra.mxu0 %v4621
        %4636 = vmatprep.subr.mxu0 0.0
        %4637 = vmatpush1.msra.mxu0 %v4622
        %4638 = vmatprep.subr.mxu0 0.0
        %4639 = vmatpush1.msra.mxu0 %v4623
        %4640 = vmatprep.subr.mxu0 0.0
        %4641 = vmatpush1.msra.mxu0 %v4624
        %4642 = vmatprep.subr.mxu0 0.0
        %4643 = vmatpush1.msra.mxu0 %v4625
        %4644 = vmatprep.subr.mxu0 0.0
        %4645 = vmatpush1.msra.mxu0 %v4626
        %4646 = vmatprep.subr.mxu0 0.0
        %4647 = vmatpush1.msra.mxu0 %v4627
        %4648 = vmatprep.subr.mxu0 0.0
        %4649 = vmatpush1.msra.mxu0 0.0
        %4650 = vmatprep.subr.mxu0 0.0
        %4651 = vmatpush1.msra.mxu0 0.0
        %4652 = vmatprep.subr.mxu0 0.0
        %4653 = vmatpush1.msra.mxu0 0.0
        %4654 = vmatprep.subr.mxu0 0.0
        %4655 = vmatpush1.msra.mxu0 0.0
        %4656 = vmatprep.subr.mxu0 0.0
        %4657 = vmatpush1.msra.mxu0 0.0
        %4658 = vmatprep.subr.mxu0 0.0
        %4659 = vmatpush1.msra.mxu0 0.0
        %4660 = vmatprep.subr.mxu0 0.0
        %4661 = vmatpush1.msra.mxu0 0.0
        %4662 = vmatprep.subr.mxu0 0.0
        %4663 = vmatpush1.msra.mxu0 0.0
        %4664 = vmatprep.subr.mxu0 0.0
        %4665 = vmatpush1.msra.mxu0 0.0
        %4666 = vmatprep.subr.mxu0 0.0
        %4667 = vmatpush1.msra.mxu0 0.0
        %4668 = vmatprep.subr.mxu0 0.0
        %4669 = vmatpush1.msra.mxu0 0.0
        %4670 = vmatprep.subr.mxu0 0.0
        %4671 = vmatpush1.msra.mxu0 0.0
        %4672 = vmatprep.subr.mxu0 0.0
        %4673 = vmatpush1.msra.mxu0 0.0
        %4674 = vmatprep.subr.mxu0 0.0
        %4675 = vmatpush1.msra.mxu0 0.0
        %4676 = vmatprep.subr.mxu0 0.0
        %4677 = vmatpush1.msra.mxu0 0.0
        %4678 = vmatprep.subr.mxu0 0.0
        %4679 = vmatpush1.msra.mxu0 0.0
        %4680 = vmatprep.subr.mxu0 0.0
        %4681 = vmatpush1.msra.mxu0 0.0
        %4682 = vmatprep.subr.mxu0 0.0
        %4683 = vmatpush1.msra.mxu0 0.0
        %4684 = vmatprep.subr.mxu0 0.0
        %4685 = vmatpush1.msra.mxu0 0.0
        %4686 = vmatprep.subr.mxu0 0.0
        %4687 = vmatpush1.msra.mxu0 0.0
        %4688 = vmatprep.subr.mxu0 0.0
        %4689 = vmatpush1.msra.mxu0 0.0
        %4690 = vmatprep.subr.mxu0 0.0
        %4691 = vmatpush1.msra.mxu0 0.0
        %4692 = vmatprep.subr.mxu0 0.0
        %4693 = vmatpush1.msra.mxu0 0.0
        %4694 = vmatprep.subr.mxu0 0.0
        %4695 = vmatpush1.msra.mxu0 0.0
        %4696 = vmatprep.mubr.f32.mxu0 0.0
        %4697 = vmatmul.mubr.f32.gmra.mrb[0].mxu0 %v4630
        %v4698 = vpop.f32.mrb[0].mxu0
        %v4699 = vadd.f32 %v4628, %v4698
        %v4700 = vpop.f32.mrb[0].mxu0
        %4701 = vdwg.mxu0
        %4702 = vst [vmem:[%s432] sm:$0x1] %v4699
        %s4703 = sand.u32 %s313, 1
        %s4704 = scalar_lea.sflag [#allocation3], %s4703
        %s4705 = sand.u32 %s313, 1
        %s4706 = scalar_lea.vmem [#allocation2], %s4705
        // Predicated region
        $region73: #{tpu_custom_call.1} parent=71 // pred_check
          %p4707 = pneg %p323
        $region74: #{tpu_custom_call.1} parent=71 // pred_check_branch
          %4709 = sbr.rel (%p4707) target = $region76
        $region75: #{tpu_custom_call.1} parent=71 // pred_region
          %s4711 = ssub.s32 16, 16
          %4712 = vsyncadd %s4704, %s4711
          %s4713 = smul.addr %s27, 16
          %s4714 = scalar_lea.hbm %s13, %s4713
          %s4716 = sshll.u32 %s4706, 4
          %s4717 = int_to_ptr.vmem [resolvable:$true] %s4716
          %4719 = dma.vmem_to_hbm [thread:$0]  %s4717, 16, %s4714, %s4704
        $region76: #{tpu_custom_call.1} parent=71 // pred_fallthru
          _
      $region72: #{tpu_custom_call.1} parent=5 // pred_fallthru
        _
      %p4720 = scmp.le.s32.totalorder 2, %s22
      // Predicated region
      $region77: #{tpu_custom_call.1} parent=5 // pred_check
        %p4721 = pneg %p4720
      $region78: #{tpu_custom_call.1} parent=5 // pred_check_branch
        %4723 = sbr.rel (%p4721) target = $region80
      $region79: #{tpu_custom_call.1} parent=5 // pred_region
        %s4724 = ssub.s32 %s22, 2
        // Predicated region
        $region81: #{tpu_custom_call.1} parent=79 // pred_check
          %p4725 = pneg %p329
        $region82: #{tpu_custom_call.1} parent=79 // pred_check_branch
          %4727 = sbr.rel (%p4725) target = $region84
        $region83: #{tpu_custom_call.1} parent=79 // pred_region
          %s4728 = sand.u32 %s314, 1
          %s4729 = scalar_lea.sflag [#allocation3], %s4728
          %s4730 = sand.u32 %s314, 1
          %s4731 = scalar_lea.vmem [#allocation2], %s4730
          %4732 = dma.done %s4729, 16
        $region84: #{tpu_custom_call.1} parent=79 // pred_fallthru
          _
      $region80: #{tpu_custom_call.1} parent=5 // pred_fallthru
        _
    $region6: #{tpu_custom_call.1} parent=1 // loop_footer
      %s26 = sadd.s32 1, %s22
    $region7: #{tpu_custom_call.1} parent=1 // loop_footer_branch
      %21 = sbr.rel target = $region3
    $region8: #{tpu_custom_call.1} parent=1 // loop_exit
      _
    %4733 = vsyncpa [#allocation3], 1
    %s4734 = scalar_lea.sflag [#allocation3], 1
    %4735 = vsyncpa %s4734, 1

</llo_original>
